<compile_context>
chip_gen: v5e
topology: v5e:2x2
jax: 0.10.0
libtpu: 0.0.40
codegen_flags: <defaults>
</compile_context>

<pallas_src>
import functools

import jax
import jax.numpy as jnp
import numpy as np
from jax.experimental import pallas as pl
from jax.experimental.pallas import tpu as pltpu

C_IN, C_OUT = 3, 16
H = W = 32
HW = H * W                  # 1024
KH = KW = 3
N_TAPS = KH * KW            # 9
N_CLS = 10


def fused_cnn_kernel(x_ref, wc_ref, bc_ref, wfc_ref, bfc_ref,
                     mask_ref, lsel_ref, rsel_ref, o_ref):
    """B images per grid step.

    x_ref   : (B, C_IN, HW)          images, NCHW flattened over (h, w)
    wc_ref  : (C_OUT, 27)            conv weight, columns ordered (ky, kx, ci)
    bc_ref  : (C_OUT, 1)             conv bias
    wfc_ref : (HW, C_OUT*N_CLS)      permuted FC weight (see prepare_params)
    bfc_ref : (1, N_CLS)             FC bias
    mask_ref: (B*C_OUT, C_OUT*N_CLS) block-diag mask  [(r%16)==(j//10)]
    lsel_ref: (B, B*C_OUT)           per-image row reducer [(r//16)==b]
    rsel_ref: (C_OUT*N_CLS, N_CLS)   class selector [(j%10)==o]
    o_ref   : (1, B, N_CLS)          logits
    """
    bn = x_ref.shape[0]
    wc = wc_ref[...]                                    # (16, 27)
    bc = bc_ref[...]                                    # (16, 1)

    # Boundary masks per tap -- built once, shared by every image in the block.
    lane = jax.lax.broadcasted_iota(jnp.int32, (C_IN, HW), 1)
    w_idx = jnp.bitwise_and(lane, W - 1)                # p % 32 (W is pow2)
    tap_shift, tap_mask = [], []
    for t in range(N_TAPS):
        ky, kx = divmod(t, KW)
        dy, dx = ky - 1, kx - 1
        tap_shift.append(dy * W + dx)
        conds = []
        if dy < 0:
            conds.append(lane >= (-dy) * W)
        if dy > 0:
            conds.append(lane < (H - dy) * W)
        if dx < 0:
            conds.append(w_idx >= -dx)
        if dx > 0:
            conds.append(w_idx < W - dx)
        m = None
        for c in conds:
            m = c if m is None else (m & c)
        tap_mask.append(m)

    # Conv + sigmoid: one K=27 MXU matmul per image over a stacked patch
    # matrix built from 9 XLU lane rotations (pltpu.roll) + boundary masks.
    # Row layout of the result is (b*16 + c_out, hw) == torch.flatten(NCHW).
    sig_rows = []
    for b in range(bn):
        xb = x_ref[b]                                   # (3, 1024)
        blocks = []
        for t in range(N_TAPS):
            s = tap_shift[t]
            if s != 0:
                # want shifted[c, p] = xb[c, p + s]  ==  jnp.roll(xb, -s)
                shifted = pltpu.roll(xb, shift=(-s) % HW, axis=1)
            else:
                shifted = xb
            if tap_mask[t] is not None:
                shifted = jnp.where(tap_mask[t], shifted, 0.0)
            blocks.append(shifted)
        patches = jnp.concatenate(blocks, axis=0)       # (27, 1024)
        z = jnp.dot(wc, patches, preferred_element_type=jnp.float32) + bc
        sig_rows.append(1.0 / (1.0 + jnp.exp(-z)))      # (16, 1024) f32
    conv_sig = jnp.concatenate(sig_rows, axis=0)        # (B*16, 1024)

    # FC: one lane-dense MXU matmul against the permuted weight, then a
    # vectorized block-diagonal reduction (mask + two tiny matmuls):
    #   logits[b, o] = sum_c p_full[b*16+c, c*10+o] + bias[o]
    p_full = jnp.dot(conv_sig, wfc_ref[...],
                     preferred_element_type=jnp.float32)        # (B*16, 160)
    p_masked = p_full * mask_ref[...]
    per_img = jnp.dot(lsel_ref[...], p_masked,
                      preferred_element_type=jnp.float32)       # (B, 160)
    logits = jnp.dot(per_img, rsel_ref[...],
                     preferred_element_type=jnp.float32)        # (B, 10)
    logits = logits + bfc_ref[...]
    o_ref[...] = logits.reshape(1, bn, N_CLS).astype(o_ref.dtype)


def prepare_params(params):
    """One-time host-side weight re-layout (kept out of the traced forward)."""
    w_conv = jnp.asarray(params["conv_w"], jnp.float32)   # (16, 3, 3, 3) OIHW
    b_conv = jnp.asarray(params["conv_b"], jnp.float32)   # (16,)
    w_fc = jnp.asarray(params["fc_w"], jnp.float32)       # (10, 16384)
    b_fc = jnp.asarray(params["fc_b"], jnp.float32)       # (10,)

    # (co, ci, ky, kx) -> (co, ky, kx, ci) -> (co, 27): column = (ky*3+kx)*3+ci
    w_taps = jnp.transpose(w_conv, (0, 2, 3, 1)).reshape(C_OUT, N_TAPS * C_IN)
    # Fold torch.flatten(NCHW) order into the FC weight:
    #   wfc_r[hw, co*10 + o] = w_fc[o, co*HW + hw]
    wfc_r = jnp.transpose(w_fc.reshape(N_CLS, C_OUT, HW),
                          (2, 1, 0)).reshape(HW, C_OUT * N_CLS)
    return {"w_taps": w_taps, "b_conv": b_conv.reshape(C_OUT, 1),
            "wfc_r": wfc_r, "b_fc": b_fc.reshape(1, N_CLS)}


@functools.partial(jax.jit, static_argnames=("block_n",))
def cnn_forward(x, prep, block_n=8):
    """x: (N, 3, 32, 32) float32 -> logits (N, 10). Matches CNN.forward.

    block_n: images per grid step.  Keep block_n <= N/2 when possible so the
    grid has >=2 parallel steps (v7x has two TensorCores); 8 fills a 128-row
    MXU tile on v5e, 16 fills 256 rows on v6e/v7x.
    """
    n = x.shape[0]
    assert x.shape[1:] == (C_IN, H, W)
    bn = min(int(block_n), n)
    n_pad = -(-n // bn) * bn

    x_flat = x.reshape(n, C_IN, HW)       # free metadata reshape, no transpose
    if n_pad != n:
        x_flat = jnp.concatenate(
            [x_flat, jnp.zeros((n_pad - n, C_IN, HW), x_flat.dtype)], axis=0)

    # Constant selection matrices (folded by XLA; tiny, fetched once).
    r = jnp.arange(bn * C_OUT)
    j = jnp.arange(C_OUT * N_CLS)
    mask = ((r[:, None] % C_OUT) == (j[None, :] // N_CLS)).astype(jnp.float32)
    lsel = (jnp.arange(bn)[:, None] == (r[None, :] // C_OUT)).astype(jnp.float32)
    rsel = ((j[:, None] % N_CLS) ==
            jnp.arange(N_CLS)[None, :]).astype(jnp.float32)

    n_steps = n_pad // bn
    out = pl.pallas_call(
        fused_cnn_kernel,
        out_shape=jax.ShapeDtypeStruct((n_steps, bn, N_CLS), jnp.float32),
        grid_spec=pltpu.PrefetchScalarGridSpec(
            num_scalar_prefetch=0,
            grid=(n_steps,),
            in_specs=[
                pl.BlockSpec((bn, C_IN, HW), lambda i: (i, 0, 0)),
                pl.BlockSpec((C_OUT, N_TAPS * C_IN), lambda i: (0, 0)),
                pl.BlockSpec((C_OUT, 1), lambda i: (0, 0)),
                pl.BlockSpec((HW, C_OUT * N_CLS), lambda i: (0, 0)),
                pl.BlockSpec((1, N_CLS), lambda i: (0, 0)),
                pl.BlockSpec((bn * C_OUT, C_OUT * N_CLS), lambda i: (0, 0)),
                pl.BlockSpec((bn, bn * C_OUT), lambda i: (0, 0)),
                pl.BlockSpec((C_OUT * N_CLS, N_CLS), lambda i: (0, 0)),
            ],
            out_specs=pl.BlockSpec((1, bn, N_CLS), lambda i: (i, 0, 0)),
        ),
        compiler_params=pltpu.CompilerParams(
            dimension_semantics=("parallel",)),
    )(x_flat, prep["w_taps"], prep["b_conv"], prep["wfc_r"], prep["b_fc"],
      mask, lsel, rsel)
    return out.reshape(n_pad, N_CLS)[:n]


# --------------------------------- main ------------------------------------

def _init_params(key):
    k1, k2, k3, k4 = jax.random.split(key, 4)
    conv_w = jax.random.normal(k1, (C_OUT, C_IN, KH, KW), jnp.float32) * 0.1
    conv_b = jax.random.normal(k2, (C_OUT,), jnp.float32) * 0.1
    fc_w = jax.random.normal(k3, (N_CLS, C_OUT * HW), jnp.float32) * 0.01
    fc_b = jax.random.normal(k4, (N_CLS,), jnp.float32) * 0.01
    return {"conv_w": conv_w, "conv_b": conv_b, "fc_w": fc_w, "fc_b": fc_b}


def _reference_forward(x, params):
    """Pure-JAX reference (XLA conv), used only as a silent correctness check."""
    y = jax.lax.conv_general_dilated(
        x, params["conv_w"], window_strides=(1, 1), padding=((1, 1), (1, 1)),
        dimension_numbers=("NCHW", "OIHW", "NCHW"))
    y = jax.nn.sigmoid(y + params["conv_b"][None, :, None, None])
    y = y.reshape(y.shape[0], -1)
    return y @ params["fc_w"].T + params["fc_b"]


if __name__ == "__main__":
    key = jax.random.PRNGKey(0)
    kx, kp = jax.random.split(key)
    # Module implies 3x32x32 inputs (fc in-features = 16*32*32). Small batch=8,
    # 4 images per grid step -> 2 parallel grid steps.
    x = jax.random.normal(kx, (8, C_IN, H, W), jnp.float32)
    params = _init_params(kp)

    # Weight re-layouts happen exactly once, outside the traced forward.
    prep = jax.block_until_ready(prepare_params(params))

    out = jax.block_until_ready(cnn_forward(x, prep, block_n=4))

    ref = jax.block_until_ready(_reference_forward(x, params))
    np.testing.assert_allclose(np.asarray(out), np.asarray(ref),
                               rtol=1e-3, atol=1e-3)
    print("KERNEL_OK")
</pallas_src>

<mosaic_0001>
module attributes {stable_mosaic.version = 11 : i64} {
  func.func @fused_cnn_kernel(%arg0: i32, %arg1: memref<4x3x1024xf32, #tpu.memory_space<vmem>>, %arg2: memref<16x27xf32, #tpu.memory_space<vmem>>, %arg3: memref<16x1xf32, #tpu.memory_space<vmem>>, %arg4: memref<1024x160xf32, #tpu.memory_space<vmem>>, %arg5: memref<1x10xf32, #tpu.memory_space<vmem>>, %arg6: memref<64x160xf32, #tpu.memory_space<vmem>>, %arg7: memref<4x64xf32, #tpu.memory_space<vmem>>, %arg8: memref<160x10xf32, #tpu.memory_space<vmem>>, %arg9: memref<1x4x10xf32, #tpu.memory_space<vmem>>) attributes {dimension_semantics = [#tpu.dimension_semantics<parallel>], iteration_bounds = array<i64: 2>, scalar_prefetch = 0 : i64, scratch_operands = 0 : i64, tpu.core_type = #tpu.core_type<tc>, window_params = [{transform_indices = @transform_0, window_bounds = array<i64: 4, 3, 1024>}, {pipeline_mode = #tpu.pipeline_mode<synchronous>, transform_indices = @transform_1, window_bounds = array<i64: 16, 27>}, {pipeline_mode = #tpu.pipeline_mode<synchronous>, transform_indices = @transform_2, window_bounds = array<i64: 16, 1>}, {pipeline_mode = #tpu.pipeline_mode<synchronous>, transform_indices = @transform_3, window_bounds = array<i64: 1024, 160>}, {pipeline_mode = #tpu.pipeline_mode<synchronous>, transform_indices = @transform_4, window_bounds = array<i64: 1, 10>}, {pipeline_mode = #tpu.pipeline_mode<synchronous>, transform_indices = @transform_5, window_bounds = array<i64: 64, 160>}, {pipeline_mode = #tpu.pipeline_mode<synchronous>, transform_indices = @transform_6, window_bounds = array<i64: 4, 64>}, {pipeline_mode = #tpu.pipeline_mode<synchronous>, transform_indices = @transform_7, window_bounds = array<i64: 160, 10>}, {transform_indices = @transform_8, window_bounds = array<i64: 1, 4, 10>}]} {
    %c0 = arith.constant 0 : index
    %c0_0 = arith.constant 0 : index
    %0 = vector.load %arg2[%c0, %c0_0] : memref<16x27xf32, #tpu.memory_space<vmem>>, vector<16x27xf32>
    %c0_1 = arith.constant 0 : index
    %c0_2 = arith.constant 0 : index
    %1 = vector.load %arg3[%c0_1, %c0_2] : memref<16x1xf32, #tpu.memory_space<vmem>>, vector<16x1xf32>
    %2 = tpu.iota {dimensions = array<i32: 1>} : vector<3x1024xi32>
    %c31_i32 = arith.constant 31 : i32
    %3 = vector.broadcast %c31_i32 : i32 to vector<3x1024xi32>
    %4 = arith.andi %2, %3 : vector<3x1024xi32>
    %c32_i32 = arith.constant 32 : i32
    %5 = vector.broadcast %c32_i32 : i32 to vector<3x1024xi32>
    %6 = arith.cmpi sge, %2, %5 : vector<3x1024xi32>
    %c1_i32 = arith.constant 1 : i32
    %7 = vector.broadcast %c1_i32 : i32 to vector<3x1024xi32>
    %8 = arith.cmpi sge, %4, %7 : vector<3x1024xi32>
    %9 = arith.andi %6, %8 : vector<3x1024xi1>
    %c32_i32_3 = arith.constant 32 : i32
    %10 = vector.broadcast %c32_i32_3 : i32 to vector<3x1024xi32>
    %11 = arith.cmpi sge, %2, %10 : vector<3x1024xi32>
    %c32_i32_4 = arith.constant 32 : i32
    %12 = vector.broadcast %c32_i32_4 : i32 to vector<3x1024xi32>
    %13 = arith.cmpi sge, %2, %12 : vector<3x1024xi32>
    %c31_i32_5 = arith.constant 31 : i32
    %14 = vector.broadcast %c31_i32_5 : i32 to vector<3x1024xi32>
    %15 = arith.cmpi slt, %4, %14 : vector<3x1024xi32>
    %16 = arith.andi %13, %15 : vector<3x1024xi1>
    %c1_i32_6 = arith.constant 1 : i32
    %17 = vector.broadcast %c1_i32_6 : i32 to vector<3x1024xi32>
    %18 = arith.cmpi sge, %4, %17 : vector<3x1024xi32>
    %c31_i32_7 = arith.constant 31 : i32
    %19 = vector.broadcast %c31_i32_7 : i32 to vector<3x1024xi32>
    %20 = arith.cmpi slt, %4, %19 : vector<3x1024xi32>
    %c992_i32 = arith.constant 992 : i32
    %21 = vector.broadcast %c992_i32 : i32 to vector<3x1024xi32>
    %22 = arith.cmpi slt, %2, %21 : vector<3x1024xi32>
    %c1_i32_8 = arith.constant 1 : i32
    %23 = vector.broadcast %c1_i32_8 : i32 to vector<3x1024xi32>
    %24 = arith.cmpi sge, %4, %23 : vector<3x1024xi32>
    %25 = arith.andi %22, %24 : vector<3x1024xi1>
    %c992_i32_9 = arith.constant 992 : i32
    %26 = vector.broadcast %c992_i32_9 : i32 to vector<3x1024xi32>
    %27 = arith.cmpi slt, %2, %26 : vector<3x1024xi32>
    %c992_i32_10 = arith.constant 992 : i32
    %28 = vector.broadcast %c992_i32_10 : i32 to vector<3x1024xi32>
    %29 = arith.cmpi slt, %2, %28 : vector<3x1024xi32>
    %c31_i32_11 = arith.constant 31 : i32
    %30 = vector.broadcast %c31_i32_11 : i32 to vector<3x1024xi32>
    %31 = arith.cmpi slt, %4, %30 : vector<3x1024xi32>
    %32 = arith.andi %29, %31 : vector<3x1024xi1>
    %c0_12 = arith.constant 0 : index
    %c0_13 = arith.constant 0 : index
    %c0_14 = arith.constant 0 : index
    %33 = vector.load %arg1[%c0_12, %c0_13, %c0_14] : memref<4x3x1024xf32, #tpu.memory_space<vmem>>, vector<1x3x1024xf32>
    %34 = vector.shape_cast %33 : vector<1x3x1024xf32> to vector<3x1024xf32>
    %c33_i32 = arith.constant 33 : i32
    %35 = tpu.dynamic_rotate %34 by %c33_i32 dim 1 : vector<3x1024xf32>, i32 -> vector<3x1024xf32>
    %cst = arith.constant 0.000000e+00 : f32
    %36 = vector.broadcast %cst : f32 to vector<3x1024xf32>
    %37 = arith.select %9, %35, %36 : vector<3x1024xi1>, vector<3x1024xf32>
    %c32_i32_15 = arith.constant 32 : i32
    %38 = tpu.dynamic_rotate %34 by %c32_i32_15 dim 1 : vector<3x1024xf32>, i32 -> vector<3x1024xf32>
    %cst_16 = arith.constant 0.000000e+00 : f32
    %39 = vector.broadcast %cst_16 : f32 to vector<3x1024xf32>
    %40 = arith.select %11, %38, %39 : vector<3x1024xi1>, vector<3x1024xf32>
    %c31_i32_17 = arith.constant 31 : i32
    %41 = tpu.dynamic_rotate %34 by %c31_i32_17 dim 1 : vector<3x1024xf32>, i32 -> vector<3x1024xf32>
    %cst_18 = arith.constant 0.000000e+00 : f32
    %42 = vector.broadcast %cst_18 : f32 to vector<3x1024xf32>
    %43 = arith.select %16, %41, %42 : vector<3x1024xi1>, vector<3x1024xf32>
    %c1_i32_19 = arith.constant 1 : i32
    %44 = tpu.dynamic_rotate %34 by %c1_i32_19 dim 1 : vector<3x1024xf32>, i32 -> vector<3x1024xf32>
    %cst_20 = arith.constant 0.000000e+00 : f32
    %45 = vector.broadcast %cst_20 : f32 to vector<3x1024xf32>
    %46 = arith.select %18, %44, %45 : vector<3x1024xi1>, vector<3x1024xf32>
    %c1023_i32 = arith.constant 1023 : i32
    %47 = tpu.dynamic_rotate %34 by %c1023_i32 dim 1 : vector<3x1024xf32>, i32 -> vector<3x1024xf32>
    %cst_21 = arith.constant 0.000000e+00 : f32
    %48 = vector.broadcast %cst_21 : f32 to vector<3x1024xf32>
    %49 = arith.select %20, %47, %48 : vector<3x1024xi1>, vector<3x1024xf32>
    %c993_i32 = arith.constant 993 : i32
    %50 = tpu.dynamic_rotate %34 by %c993_i32 dim 1 : vector<3x1024xf32>, i32 -> vector<3x1024xf32>
    %cst_22 = arith.constant 0.000000e+00 : f32
    %51 = vector.broadcast %cst_22 : f32 to vector<3x1024xf32>
    %52 = arith.select %25, %50, %51 : vector<3x1024xi1>, vector<3x1024xf32>
    %c992_i32_23 = arith.constant 992 : i32
    %53 = tpu.dynamic_rotate %34 by %c992_i32_23 dim 1 : vector<3x1024xf32>, i32 -> vector<3x1024xf32>
    %cst_24 = arith.constant 0.000000e+00 : f32
    %54 = vector.broadcast %cst_24 : f32 to vector<3x1024xf32>
    %55 = arith.select %27, %53, %54 : vector<3x1024xi1>, vector<3x1024xf32>
    %c991_i32 = arith.constant 991 : i32
    %56 = tpu.dynamic_rotate %34 by %c991_i32 dim 1 : vector<3x1024xf32>, i32 -> vector<3x1024xf32>
    %cst_25 = arith.constant 0.000000e+00 : f32
    %57 = vector.broadcast %cst_25 : f32 to vector<3x1024xf32>
    %58 = arith.select %32, %56, %57 : vector<3x1024xi1>, vector<3x1024xf32>
    %59 = tpu.concatenate %37, %40, %43, %46, %34, %49, %52, %55, %58 in 0 : vector<3x1024xf32>, vector<3x1024xf32>, vector<3x1024xf32>, vector<3x1024xf32>, vector<3x1024xf32>, vector<3x1024xf32>, vector<3x1024xf32>, vector<3x1024xf32>, vector<3x1024xf32> -> vector<27x1024xf32>
    %cst_26 = arith.constant dense<0.000000e+00> : vector<16x1024xf32>
    %60 = tpu.matmul %0, %59, %cst_26 {dimension_numbers = #tpu.dot_dimension_numbers<[1], [0], [0], [1], [0, 0, 1, 1], [], []>} : vector<16x27xf32>, vector<27x1024xf32>, vector<16x1024xf32> -> vector<16x1024xf32>
    %61 = vector.broadcast %1 : vector<16x1xf32> to vector<16x1024xf32>
    %62 = arith.addf %60, %61 : vector<16x1024xf32>
    %cst_27 = arith.constant 0.000000e+00 : f32
    %63 = vector.broadcast %cst_27 : f32 to vector<16x1024xf32>
    %64 = arith.subf %63, %62 : vector<16x1024xf32>
    %65 = math.exp %64 : vector<16x1024xf32>
    %cst_28 = arith.constant 1.000000e+00 : f32
    %66 = vector.broadcast %cst_28 : f32 to vector<16x1024xf32>
    %67 = arith.addf %66, %65 : vector<16x1024xf32>
    %cst_29 = arith.constant 1.000000e+00 : f32
    %68 = vector.broadcast %cst_29 : f32 to vector<16x1024xf32>
    %69 = arith.divf %68, %67 : vector<16x1024xf32>
    %c1 = arith.constant 1 : index
    %c0_30 = arith.constant 0 : index
    %c0_31 = arith.constant 0 : index
    %70 = vector.load %arg1[%c1, %c0_30, %c0_31] : memref<4x3x1024xf32, #tpu.memory_space<vmem>>, vector<1x3x1024xf32>
    %71 = vector.shape_cast %70 : vector<1x3x1024xf32> to vector<3x1024xf32>
    %c33_i32_32 = arith.constant 33 : i32
    %72 = tpu.dynamic_rotate %71 by %c33_i32_32 dim 1 : vector<3x1024xf32>, i32 -> vector<3x1024xf32>
    %cst_33 = arith.constant 0.000000e+00 : f32
    %73 = vector.broadcast %cst_33 : f32 to vector<3x1024xf32>
    %74 = arith.select %9, %72, %73 : vector<3x1024xi1>, vector<3x1024xf32>
    %c32_i32_34 = arith.constant 32 : i32
    %75 = tpu.dynamic_rotate %71 by %c32_i32_34 dim 1 : vector<3x1024xf32>, i32 -> vector<3x1024xf32>
    %cst_35 = arith.constant 0.000000e+00 : f32
    %76 = vector.broadcast %cst_35 : f32 to vector<3x1024xf32>
    %77 = arith.select %11, %75, %76 : vector<3x1024xi1>, vector<3x1024xf32>
    %c31_i32_36 = arith.constant 31 : i32
    %78 = tpu.dynamic_rotate %71 by %c31_i32_36 dim 1 : vector<3x1024xf32>, i32 -> vector<3x1024xf32>
    %cst_37 = arith.constant 0.000000e+00 : f32
    %79 = vector.broadcast %cst_37 : f32 to vector<3x1024xf32>
    %80 = arith.select %16, %78, %79 : vector<3x1024xi1>, vector<3x1024xf32>
    %c1_i32_38 = arith.constant 1 : i32
    %81 = tpu.dynamic_rotate %71 by %c1_i32_38 dim 1 : vector<3x1024xf32>, i32 -> vector<3x1024xf32>
    %cst_39 = arith.constant 0.000000e+00 : f32
    %82 = vector.broadcast %cst_39 : f32 to vector<3x1024xf32>
    %83 = arith.select %18, %81, %82 : vector<3x1024xi1>, vector<3x1024xf32>
    %c1023_i32_40 = arith.constant 1023 : i32
    %84 = tpu.dynamic_rotate %71 by %c1023_i32_40 dim 1 : vector<3x1024xf32>, i32 -> vector<3x1024xf32>
    %cst_41 = arith.constant 0.000000e+00 : f32
    %85 = vector.broadcast %cst_41 : f32 to vector<3x1024xf32>
    %86 = arith.select %20, %84, %85 : vector<3x1024xi1>, vector<3x1024xf32>
    %c993_i32_42 = arith.constant 993 : i32
    %87 = tpu.dynamic_rotate %71 by %c993_i32_42 dim 1 : vector<3x1024xf32>, i32 -> vector<3x1024xf32>
    %cst_43 = arith.constant 0.000000e+00 : f32
    %88 = vector.broadcast %cst_43 : f32 to vector<3x1024xf32>
    %89 = arith.select %25, %87, %88 : vector<3x1024xi1>, vector<3x1024xf32>
    %c992_i32_44 = arith.constant 992 : i32
    %90 = tpu.dynamic_rotate %71 by %c992_i32_44 dim 1 : vector<3x1024xf32>, i32 -> vector<3x1024xf32>
    %cst_45 = arith.constant 0.000000e+00 : f32
    %91 = vector.broadcast %cst_45 : f32 to vector<3x1024xf32>
    %92 = arith.select %27, %90, %91 : vector<3x1024xi1>, vector<3x1024xf32>
    %c991_i32_46 = arith.constant 991 : i32
    %93 = tpu.dynamic_rotate %71 by %c991_i32_46 dim 1 : vector<3x1024xf32>, i32 -> vector<3x1024xf32>
    %cst_47 = arith.constant 0.000000e+00 : f32
    %94 = vector.broadcast %cst_47 : f32 to vector<3x1024xf32>
    %95 = arith.select %32, %93, %94 : vector<3x1024xi1>, vector<3x1024xf32>
    %96 = tpu.concatenate %74, %77, %80, %83, %71, %86, %89, %92, %95 in 0 : vector<3x1024xf32>, vector<3x1024xf32>, vector<3x1024xf32>, vector<3x1024xf32>, vector<3x1024xf32>, vector<3x1024xf32>, vector<3x1024xf32>, vector<3x1024xf32>, vector<3x1024xf32> -> vector<27x1024xf32>
    %cst_48 = arith.constant dense<0.000000e+00> : vector<16x1024xf32>
    %97 = tpu.matmul %0, %96, %cst_48 {dimension_numbers = #tpu.dot_dimension_numbers<[1], [0], [0], [1], [0, 0, 1, 1], [], []>} : vector<16x27xf32>, vector<27x1024xf32>, vector<16x1024xf32> -> vector<16x1024xf32>
    %98 = vector.broadcast %1 : vector<16x1xf32> to vector<16x1024xf32>
    %99 = arith.addf %97, %98 : vector<16x1024xf32>
    %cst_49 = arith.constant 0.000000e+00 : f32
    %100 = vector.broadcast %cst_49 : f32 to vector<16x1024xf32>
    %101 = arith.subf %100, %99 : vector<16x1024xf32>
    %102 = math.exp %101 : vector<16x1024xf32>
    %cst_50 = arith.constant 1.000000e+00 : f32
    %103 = vector.broadcast %cst_50 : f32 to vector<16x1024xf32>
    %104 = arith.addf %103, %102 : vector<16x1024xf32>
    %cst_51 = arith.constant 1.000000e+00 : f32
    %105 = vector.broadcast %cst_51 : f32 to vector<16x1024xf32>
    %106 = arith.divf %105, %104 : vector<16x1024xf32>
    %c2 = arith.constant 2 : index
    %c0_52 = arith.constant 0 : index
    %c0_53 = arith.constant 0 : index
    %107 = vector.load %arg1[%c2, %c0_52, %c0_53] : memref<4x3x1024xf32, #tpu.memory_space<vmem>>, vector<1x3x1024xf32>
    %108 = vector.shape_cast %107 : vector<1x3x1024xf32> to vector<3x1024xf32>
    %c33_i32_54 = arith.constant 33 : i32
    %109 = tpu.dynamic_rotate %108 by %c33_i32_54 dim 1 : vector<3x1024xf32>, i32 -> vector<3x1024xf32>
    %cst_55 = arith.constant 0.000000e+00 : f32
    %110 = vector.broadcast %cst_55 : f32 to vector<3x1024xf32>
    %111 = arith.select %9, %109, %110 : vector<3x1024xi1>, vector<3x1024xf32>
    %c32_i32_56 = arith.constant 32 : i32
    %112 = tpu.dynamic_rotate %108 by %c32_i32_56 dim 1 : vector<3x1024xf32>, i32 -> vector<3x1024xf32>
    %cst_57 = arith.constant 0.000000e+00 : f32
    %113 = vector.broadcast %cst_57 : f32 to vector<3x1024xf32>
    %114 = arith.select %11, %112, %113 : vector<3x1024xi1>, vector<3x1024xf32>
    %c31_i32_58 = arith.constant 31 : i32
    %115 = tpu.dynamic_rotate %108 by %c31_i32_58 dim 1 : vector<3x1024xf32>, i32 -> vector<3x1024xf32>
    %cst_59 = arith.constant 0.000000e+00 : f32
    %116 = vector.broadcast %cst_59 : f32 to vector<3x1024xf32>
    %117 = arith.select %16, %115, %116 : vector<3x1024xi1>, vector<3x1024xf32>
    %c1_i32_60 = arith.constant 1 : i32
    %118 = tpu.dynamic_rotate %108 by %c1_i32_60 dim 1 : vector<3x1024xf32>, i32 -> vector<3x1024xf32>
    %cst_61 = arith.constant 0.000000e+00 : f32
    %119 = vector.broadcast %cst_61 : f32 to vector<3x1024xf32>
    %120 = arith.select %18, %118, %119 : vector<3x1024xi1>, vector<3x1024xf32>
    %c1023_i32_62 = arith.constant 1023 : i32
    %121 = tpu.dynamic_rotate %108 by %c1023_i32_62 dim 1 : vector<3x1024xf32>, i32 -> vector<3x1024xf32>
    %cst_63 = arith.constant 0.000000e+00 : f32
    %122 = vector.broadcast %cst_63 : f32 to vector<3x1024xf32>
    %123 = arith.select %20, %121, %122 : vector<3x1024xi1>, vector<3x1024xf32>
    %c993_i32_64 = arith.constant 993 : i32
    %124 = tpu.dynamic_rotate %108 by %c993_i32_64 dim 1 : vector<3x1024xf32>, i32 -> vector<3x1024xf32>
    %cst_65 = arith.constant 0.000000e+00 : f32
    %125 = vector.broadcast %cst_65 : f32 to vector<3x1024xf32>
    %126 = arith.select %25, %124, %125 : vector<3x1024xi1>, vector<3x1024xf32>
    %c992_i32_66 = arith.constant 992 : i32
    %127 = tpu.dynamic_rotate %108 by %c992_i32_66 dim 1 : vector<3x1024xf32>, i32 -> vector<3x1024xf32>
    %cst_67 = arith.constant 0.000000e+00 : f32
    %128 = vector.broadcast %cst_67 : f32 to vector<3x1024xf32>
    %129 = arith.select %27, %127, %128 : vector<3x1024xi1>, vector<3x1024xf32>
    %c991_i32_68 = arith.constant 991 : i32
    %130 = tpu.dynamic_rotate %108 by %c991_i32_68 dim 1 : vector<3x1024xf32>, i32 -> vector<3x1024xf32>
    %cst_69 = arith.constant 0.000000e+00 : f32
    %131 = vector.broadcast %cst_69 : f32 to vector<3x1024xf32>
    %132 = arith.select %32, %130, %131 : vector<3x1024xi1>, vector<3x1024xf32>
    %133 = tpu.concatenate %111, %114, %117, %120, %108, %123, %126, %129, %132 in 0 : vector<3x1024xf32>, vector<3x1024xf32>, vector<3x1024xf32>, vector<3x1024xf32>, vector<3x1024xf32>, vector<3x1024xf32>, vector<3x1024xf32>, vector<3x1024xf32>, vector<3x1024xf32> -> vector<27x1024xf32>
    %cst_70 = arith.constant dense<0.000000e+00> : vector<16x1024xf32>
    %134 = tpu.matmul %0, %133, %cst_70 {dimension_numbers = #tpu.dot_dimension_numbers<[1], [0], [0], [1], [0, 0, 1, 1], [], []>} : vector<16x27xf32>, vector<27x1024xf32>, vector<16x1024xf32> -> vector<16x1024xf32>
    %135 = vector.broadcast %1 : vector<16x1xf32> to vector<16x1024xf32>
    %136 = arith.addf %134, %135 : vector<16x1024xf32>
    %cst_71 = arith.constant 0.000000e+00 : f32
    %137 = vector.broadcast %cst_71 : f32 to vector<16x1024xf32>
    %138 = arith.subf %137, %136 : vector<16x1024xf32>
    %139 = math.exp %138 : vector<16x1024xf32>
    %cst_72 = arith.constant 1.000000e+00 : f32
    %140 = vector.broadcast %cst_72 : f32 to vector<16x1024xf32>
    %141 = arith.addf %140, %139 : vector<16x1024xf32>
    %cst_73 = arith.constant 1.000000e+00 : f32
    %142 = vector.broadcast %cst_73 : f32 to vector<16x1024xf32>
    %143 = arith.divf %142, %141 : vector<16x1024xf32>
    %c3 = arith.constant 3 : index
    %c0_74 = arith.constant 0 : index
    %c0_75 = arith.constant 0 : index
    %144 = vector.load %arg1[%c3, %c0_74, %c0_75] : memref<4x3x1024xf32, #tpu.memory_space<vmem>>, vector<1x3x1024xf32>
    %145 = vector.shape_cast %144 : vector<1x3x1024xf32> to vector<3x1024xf32>
    %c33_i32_76 = arith.constant 33 : i32
    %146 = tpu.dynamic_rotate %145 by %c33_i32_76 dim 1 : vector<3x1024xf32>, i32 -> vector<3x1024xf32>
    %cst_77 = arith.constant 0.000000e+00 : f32
    %147 = vector.broadcast %cst_77 : f32 to vector<3x1024xf32>
    %148 = arith.select %9, %146, %147 : vector<3x1024xi1>, vector<3x1024xf32>
    %c32_i32_78 = arith.constant 32 : i32
    %149 = tpu.dynamic_rotate %145 by %c32_i32_78 dim 1 : vector<3x1024xf32>, i32 -> vector<3x1024xf32>
    %cst_79 = arith.constant 0.000000e+00 : f32
    %150 = vector.broadcast %cst_79 : f32 to vector<3x1024xf32>
    %151 = arith.select %11, %149, %150 : vector<3x1024xi1>, vector<3x1024xf32>
    %c31_i32_80 = arith.constant 31 : i32
    %152 = tpu.dynamic_rotate %145 by %c31_i32_80 dim 1 : vector<3x1024xf32>, i32 -> vector<3x1024xf32>
    %cst_81 = arith.constant 0.000000e+00 : f32
    %153 = vector.broadcast %cst_81 : f32 to vector<3x1024xf32>
    %154 = arith.select %16, %152, %153 : vector<3x1024xi1>, vector<3x1024xf32>
    %c1_i32_82 = arith.constant 1 : i32
    %155 = tpu.dynamic_rotate %145 by %c1_i32_82 dim 1 : vector<3x1024xf32>, i32 -> vector<3x1024xf32>
    %cst_83 = arith.constant 0.000000e+00 : f32
    %156 = vector.broadcast %cst_83 : f32 to vector<3x1024xf32>
    %157 = arith.select %18, %155, %156 : vector<3x1024xi1>, vector<3x1024xf32>
    %c1023_i32_84 = arith.constant 1023 : i32
    %158 = tpu.dynamic_rotate %145 by %c1023_i32_84 dim 1 : vector<3x1024xf32>, i32 -> vector<3x1024xf32>
    %cst_85 = arith.constant 0.000000e+00 : f32
    %159 = vector.broadcast %cst_85 : f32 to vector<3x1024xf32>
    %160 = arith.select %20, %158, %159 : vector<3x1024xi1>, vector<3x1024xf32>
    %c993_i32_86 = arith.constant 993 : i32
    %161 = tpu.dynamic_rotate %145 by %c993_i32_86 dim 1 : vector<3x1024xf32>, i32 -> vector<3x1024xf32>
    %cst_87 = arith.constant 0.000000e+00 : f32
    %162 = vector.broadcast %cst_87 : f32 to vector<3x1024xf32>
    %163 = arith.select %25, %161, %162 : vector<3x1024xi1>, vector<3x1024xf32>
    %c992_i32_88 = arith.constant 992 : i32
    %164 = tpu.dynamic_rotate %145 by %c992_i32_88 dim 1 : vector<3x1024xf32>, i32 -> vector<3x1024xf32>
    %cst_89 = arith.constant 0.000000e+00 : f32
    %165 = vector.broadcast %cst_89 : f32 to vector<3x1024xf32>
    %166 = arith.select %27, %164, %165 : vector<3x1024xi1>, vector<3x1024xf32>
    %c991_i32_90 = arith.constant 991 : i32
    %167 = tpu.dynamic_rotate %145 by %c991_i32_90 dim 1 : vector<3x1024xf32>, i32 -> vector<3x1024xf32>
    %cst_91 = arith.constant 0.000000e+00 : f32
    %168 = vector.broadcast %cst_91 : f32 to vector<3x1024xf32>
    %169 = arith.select %32, %167, %168 : vector<3x1024xi1>, vector<3x1024xf32>
    %170 = tpu.concatenate %148, %151, %154, %157, %145, %160, %163, %166, %169 in 0 : vector<3x1024xf32>, vector<3x1024xf32>, vector<3x1024xf32>, vector<3x1024xf32>, vector<3x1024xf32>, vector<3x1024xf32>, vector<3x1024xf32>, vector<3x1024xf32>, vector<3x1024xf32> -> vector<27x1024xf32>
    %cst_92 = arith.constant dense<0.000000e+00> : vector<16x1024xf32>
    %171 = tpu.matmul %0, %170, %cst_92 {dimension_numbers = #tpu.dot_dimension_numbers<[1], [0], [0], [1], [0, 0, 1, 1], [], []>} : vector<16x27xf32>, vector<27x1024xf32>, vector<16x1024xf32> -> vector<16x1024xf32>
    %172 = vector.broadcast %1 : vector<16x1xf32> to vector<16x1024xf32>
    %173 = arith.addf %171, %172 : vector<16x1024xf32>
    %cst_93 = arith.constant 0.000000e+00 : f32
    %174 = vector.broadcast %cst_93 : f32 to vector<16x1024xf32>
    %175 = arith.subf %174, %173 : vector<16x1024xf32>
    %176 = math.exp %175 : vector<16x1024xf32>
    %cst_94 = arith.constant 1.000000e+00 : f32
    %177 = vector.broadcast %cst_94 : f32 to vector<16x1024xf32>
    %178 = arith.addf %177, %176 : vector<16x1024xf32>
    %cst_95 = arith.constant 1.000000e+00 : f32
    %179 = vector.broadcast %cst_95 : f32 to vector<16x1024xf32>
    %180 = arith.divf %179, %178 : vector<16x1024xf32>
    %181 = tpu.concatenate %69, %106, %143, %180 in 0 : vector<16x1024xf32>, vector<16x1024xf32>, vector<16x1024xf32>, vector<16x1024xf32> -> vector<64x1024xf32>
    %c0_96 = arith.constant 0 : index
    %c0_97 = arith.constant 0 : index
    %182 = vector.load %arg4[%c0_96, %c0_97] : memref<1024x160xf32, #tpu.memory_space<vmem>>, vector<1024x160xf32>
    %cst_98 = arith.constant dense<0.000000e+00> : vector<64x160xf32>
    %183 = tpu.matmul %181, %182, %cst_98 {dimension_numbers = #tpu.dot_dimension_numbers<[1], [0], [0], [1], [0, 0, 1, 1], [], []>} : vector<64x1024xf32>, vector<1024x160xf32>, vector<64x160xf32> -> vector<64x160xf32>
    %c0_99 = arith.constant 0 : index
    %c0_100 = arith.constant 0 : index
    %184 = vector.load %arg6[%c0_99, %c0_100] : memref<64x160xf32, #tpu.memory_space<vmem>>, vector<64x160xf32>
    %185 = arith.mulf %183, %184 : vector<64x160xf32>
    %c0_101 = arith.constant 0 : index
    %c0_102 = arith.constant 0 : index
    %186 = vector.load %arg7[%c0_101, %c0_102] : memref<4x64xf32, #tpu.memory_space<vmem>>, vector<4x64xf32>
    %cst_103 = arith.constant dense<0.000000e+00> : vector<4x160xf32>
    %187 = tpu.matmul %186, %185, %cst_103 {dimension_numbers = #tpu.dot_dimension_numbers<[1], [0], [0], [1], [0, 0, 1, 1], [], []>} : vector<4x64xf32>, vector<64x160xf32>, vector<4x160xf32> -> vector<4x160xf32>
    %c0_104 = arith.constant 0 : index
    %c0_105 = arith.constant 0 : index
    %188 = vector.load %arg8[%c0_104, %c0_105] : memref<160x10xf32, #tpu.memory_space<vmem>>, vector<160x10xf32>
    %cst_106 = arith.constant dense<0.000000e+00> : vector<4x10xf32>
    %189 = tpu.matmul %187, %188, %cst_106 {dimension_numbers = #tpu.dot_dimension_numbers<[1], [0], [0], [1], [0, 0, 1, 1], [], []>} : vector<4x160xf32>, vector<160x10xf32>, vector<4x10xf32> -> vector<4x10xf32>
    %c0_107 = arith.constant 0 : index
    %c0_108 = arith.constant 0 : index
    %190 = vector.load %arg5[%c0_107, %c0_108] : memref<1x10xf32, #tpu.memory_space<vmem>>, vector<1x10xf32>
    %191 = vector.broadcast %190 : vector<1x10xf32> to vector<4x10xf32>
    %192 = arith.addf %189, %191 : vector<4x10xf32>
    %193 = vector.shape_cast %192 : vector<4x10xf32> to vector<1x4x10xf32>
    %c0_109 = arith.constant 0 : index
    %c0_110 = arith.constant 0 : index
    %c0_111 = arith.constant 0 : index
    %194 = vector.load %arg9[%c0_109, %c0_110, %c0_111] : memref<1x4x10xf32, #tpu.memory_space<vmem>>, vector<1x4x10xf32>
    tpu.vector_store %arg9[%c0_109, %c0_110, %c0_111], %193 {strides = array<i32>} : memref<1x4x10xf32, #tpu.memory_space<vmem>>, vector<1x4x10xf32>,
    return
  }
  func.func @transform_0(%arg0: i32) -> (i32, i32, i32) {
    %c0_i32 = arith.constant 0 : i32
    %c0_i32_0 = arith.constant 0 : i32
    %c0_i32_1 = arith.constant 0 : i32
    return %arg0, %c0_i32, %c0_i32_0 : i32, i32, i32
  }
  func.func @transform_1(%arg0: i32) -> (i32, i32) {
    %c0_i32 = arith.constant 0 : i32
    %c0_i32_0 = arith.constant 0 : i32
    %c0_i32_1 = arith.constant 0 : i32
    return %c0_i32, %c0_i32_0 : i32, i32
  }
  func.func @transform_2(%arg0: i32) -> (i32, i32) {
    %c0_i32 = arith.constant 0 : i32
    %c0_i32_0 = arith.constant 0 : i32
    %c0_i32_1 = arith.constant 0 : i32
    return %c0_i32, %c0_i32_0 : i32, i32
  }
  func.func @transform_3(%arg0: i32) -> (i32, i32) {
    %c0_i32 = arith.constant 0 : i32
    %c0_i32_0 = arith.constant 0 : i32
    %c0_i32_1 = arith.constant 0 : i32
    return %c0_i32, %c0_i32_0 : i32, i32
  }
  func.func @transform_4(%arg0: i32) -> (i32, i32) {
    %c0_i32 = arith.constant 0 : i32
    %c0_i32_0 = arith.constant 0 : i32
    %c0_i32_1 = arith.constant 0 : i32
    return %c0_i32, %c0_i32_0 : i32, i32
  }
  func.func @transform_5(%arg0: i32) -> (i32, i32) {
    %c0_i32 = arith.constant 0 : i32
    %c0_i32_0 = arith.constant 0 : i32
    %c0_i32_1 = arith.constant 0 : i32
    return %c0_i32, %c0_i32_0 : i32, i32
  }
  func.func @transform_6(%arg0: i32) -> (i32, i32) {
    %c0_i32 = arith.constant 0 : i32
    %c0_i32_0 = arith.constant 0 : i32
    %c0_i32_1 = arith.constant 0 : i32
    return %c0_i32, %c0_i32_0 : i32, i32
  }
  func.func @transform_7(%arg0: i32) -> (i32, i32) {
    %c0_i32 = arith.constant 0 : i32
    %c0_i32_0 = arith.constant 0 : i32
    %c0_i32_1 = arith.constant 0 : i32
    return %c0_i32, %c0_i32_0 : i32, i32
  }
  func.func @transform_8(%arg0: i32) -> (i32, i32, i32) {
    %c0_i32 = arith.constant 0 : i32
    %c0_i32_0 = arith.constant 0 : i32
    %c0_i32_1 = arith.constant 0 : i32
    return %arg0, %c0_i32, %c0_i32_0 : i32, i32, i32
  }
}

</mosaic_0001>

<llo_original>
// kernel: cnn_forward.1
$region0: #{cnn_forward.1}
  #allocation0 [shape = 'u32[]', space=smem, size = 0x4, offset = 0x4, fixed_abs, tag = 'smem constant byte address 0x4 - core index']
  #allocation1 [shape = 'u32[72,128]{1,0:T(1,128)}', space=vmem, size = 0x9000, scoped, tag = 'internal scratch']
  %s0 = inlined_call_operand.vmem [shape: f32[8,3,1024], index: 0, kind: input, shape index: {}]
  %s1 = inlined_call_operand.vmem [shape: f32[16,27], index: 1, kind: input, shape index: {}]
  %s2 = inlined_call_operand.vmem [shape: f32[16,1], index: 2, kind: input, shape index: {}]
  %s3 = inlined_call_operand.vmem [shape: f32[1024,160], index: 3, kind: input, shape index: {}]
  %s4 = inlined_call_operand.vmem [shape: f32[1,10], index: 4, kind: input, shape index: {}]
  %s5 = inlined_call_operand.vmem [shape: f32[64,160], index: 5, kind: input, shape index: {}]
  %s6 = inlined_call_operand.vmem [shape: f32[4,64], index: 6, kind: input, shape index: {}]
  %s7 = inlined_call_operand.vmem [shape: f32[160,10], index: 7, kind: input, shape index: {}]
  %s8 = inlined_call_operand.hbm [shape: f32[2,4,10], index: 8, kind: output, shape index: {}]
  %s9 = sld [smem:[#allocation0]]
  $region65: #{cnn_forward.1} parent=0
    _
  %s11 = ssub.s32 1, %s9
  %s12 = scalar_select 0, %s11, %s9
  $region1: #{cnn_forward.1} parent=0
    #allocation2 [shape = 'u8[4096]{0}', space=vmem, size = 0x1000, scoped, tag = 'output window, operand 0']
    #allocation3 [shape = 's32[2]{0}', space=sflag, size = 0x8, scoped, tag = 'scoped memory for cnn_forward.1']
    %13 = vsyncpa [#allocation3], 0
    %s14 = scalar_lea.sflag [#allocation3], 1
    %15 = vsyncpa %s14, 0
    loop: start=0, step=1, limit=4
    $region2: #{cnn_forward.1} parent=1 // loop_pre_header
      _
    $region3: #{cnn_forward.1} parent=1 // loop_header
      %s17 = sphi 0, %s21
      %p18 = scmp.ge.s32.totalorder %s17, 4
      %s27 = sphi 0, %s29
      %s30 = sphi 0, %s27
      %s31 = sphi 0, %s30
      %s47 = sphi 0, %s31
      %s51 = sphi 0, %s51
      %s53 = sphi 0, %s51
      %s54 = sphi 0, %s53
      %s68 = sphi 0, %s54
      %s72 = sphi 0, %s72
      %s74 = sphi 0, %s72
      %s75 = sphi 0, %s74
      %s89 = sphi 0, %s75
      %s93 = sphi 0, %s93
      %s95 = sphi 0, %s93
      %s96 = sphi 0, %s95
      %s110 = sphi 0, %s96
      %s114 = sphi 0, %s114
      %s116 = sphi 0, %s114
      %s117 = sphi 0, %s116
      %s131 = sphi 0, %s117
      %s135 = sphi 0, %s135
      %s137 = sphi 0, %s135
      %s138 = sphi 0, %s137
      %s152 = sphi 0, %s138
      %s156 = sphi 0, %s156
      %s158 = sphi 0, %s156
      %s159 = sphi 0, %s158
      %s173 = sphi 0, %s159
      %s177 = sphi 0, %s177
      %s179 = sphi 0, %s177
      %s180 = sphi 0, %s179
      %s194 = sphi 0, %s180
      %s200 = sphi 0, %s202
      %s203 = sphi 0, %s200
      %s204 = sphi 0, %s203
      %s220 = sphi 0, %s204
    $region4: #{cnn_forward.1} parent=1 // loop_header_branch
      %20 = sbr.rel (%p18) target = $region8
    $region5: #{cnn_forward.1} parent=1 // loop_body
      %s22 = ssub.s32 %s17, 1
      %s23 = ssub.s32 %s17, 2
      %s24 = sadd.s32 %s17, 1
      %s25 = ssub.s32 %s17, %s24
      %p26 = scmp.eq.s32.totalorder %s25, 0
      %s28 = sadd.s32 %s27, 1
      %s29 = scalar_select %p26, %s27, %s28
      %p32 = pneg %p26
      %p33 = scmp.eq.s32.totalorder %s17, 1
      %p34 = por %p32, %p33
      %p35 = scmp.ne.s32.totalorder %s27, %s30
      %p36 = scmp.eq.s32.totalorder %s17, 0
      %p37 = por %p35, %p36
      %p38 = scmp.ne.s32.totalorder %s27, %s30
      %p39 = scmp.eq.s32.totalorder %s22, 1
      %p40 = por %p38, %p39
      %p41 = scmp.ne.s32.totalorder %s30, %s31
      %p42 = scmp.eq.s32.totalorder %s22, 0
      %p43 = por %p41, %p42
      %p44 = scmp.ne.s32.totalorder %s30, %s31
      %p45 = scmp.eq.s32.totalorder %s23, 1
      %p46 = por %p44, %p45
      %p48 = scmp.ne.s32.totalorder %s31, %s47
      %p49 = scmp.eq.s32.totalorder %s23, 0
      %p50 = por %p48, %p49
      %s52 = sadd.s32 %s51, 1
      %p55 = scmp.eq.s32.totalorder %s17, 1
      %p56 = scmp.ne.s32.totalorder %s51, %s53
      %p57 = scmp.eq.s32.totalorder %s17, 0
      %p58 = por %p56, %p57
      %p59 = scmp.ne.s32.totalorder %s51, %s53
      %p60 = scmp.eq.s32.totalorder %s22, 1
      %p61 = por %p59, %p60
      %p62 = scmp.ne.s32.totalorder %s53, %s54
      %p63 = scmp.eq.s32.totalorder %s22, 0
      %p64 = por %p62, %p63
      %p65 = scmp.ne.s32.totalorder %s53, %s54
      %p66 = scmp.eq.s32.totalorder %s23, 1
      %p67 = por %p65, %p66
      %p69 = scmp.ne.s32.totalorder %s54, %s68
      %p70 = scmp.eq.s32.totalorder %s23, 0
      %p71 = por %p69, %p70
      %s73 = sadd.s32 %s72, 1
      %p76 = scmp.eq.s32.totalorder %s17, 1
      %p77 = scmp.ne.s32.totalorder %s72, %s74
      %p78 = scmp.eq.s32.totalorder %s17, 0
      %p79 = por %p77, %p78
      %p80 = scmp.ne.s32.totalorder %s72, %s74
      %p81 = scmp.eq.s32.totalorder %s22, 1
      %p82 = por %p80, %p81
      %p83 = scmp.ne.s32.totalorder %s74, %s75
      %p84 = scmp.eq.s32.totalorder %s22, 0
      %p85 = por %p83, %p84
      %p86 = scmp.ne.s32.totalorder %s74, %s75
      %p87 = scmp.eq.s32.totalorder %s23, 1
      %p88 = por %p86, %p87
      %p90 = scmp.ne.s32.totalorder %s75, %s89
      %p91 = scmp.eq.s32.totalorder %s23, 0
      %p92 = por %p90, %p91
      %s94 = sadd.s32 %s93, 1
      %p97 = scmp.eq.s32.totalorder %s17, 1
      %p98 = scmp.ne.s32.totalorder %s93, %s95
      %p99 = scmp.eq.s32.totalorder %s17, 0
      %p100 = por %p98, %p99
      %p101 = scmp.ne.s32.totalorder %s93, %s95
      %p102 = scmp.eq.s32.totalorder %s22, 1
      %p103 = por %p101, %p102
      %p104 = scmp.ne.s32.totalorder %s95, %s96
      %p105 = scmp.eq.s32.totalorder %s22, 0
      %p106 = por %p104, %p105
      %p107 = scmp.ne.s32.totalorder %s95, %s96
      %p108 = scmp.eq.s32.totalorder %s23, 1
      %p109 = por %p107, %p108
      %p111 = scmp.ne.s32.totalorder %s96, %s110
      %p112 = scmp.eq.s32.totalorder %s23, 0
      %p113 = por %p111, %p112
      %s115 = sadd.s32 %s114, 1
      %p118 = scmp.eq.s32.totalorder %s17, 1
      %p119 = scmp.ne.s32.totalorder %s114, %s116
      %p120 = scmp.eq.s32.totalorder %s17, 0
      %p121 = por %p119, %p120
      %p122 = scmp.ne.s32.totalorder %s114, %s116
      %p123 = scmp.eq.s32.totalorder %s22, 1
      %p124 = por %p122, %p123
      %p125 = scmp.ne.s32.totalorder %s116, %s117
      %p126 = scmp.eq.s32.totalorder %s22, 0
      %p127 = por %p125, %p126
      %p128 = scmp.ne.s32.totalorder %s116, %s117
      %p129 = scmp.eq.s32.totalorder %s23, 1
      %p130 = por %p128, %p129
      %p132 = scmp.ne.s32.totalorder %s117, %s131
      %p133 = scmp.eq.s32.totalorder %s23, 0
      %p134 = por %p132, %p133
      %s136 = sadd.s32 %s135, 1
      %p139 = scmp.eq.s32.totalorder %s17, 1
      %p140 = scmp.ne.s32.totalorder %s135, %s137
      %p141 = scmp.eq.s32.totalorder %s17, 0
      %p142 = por %p140, %p141
      %p143 = scmp.ne.s32.totalorder %s135, %s137
      %p144 = scmp.eq.s32.totalorder %s22, 1
      %p145 = por %p143, %p144
      %p146 = scmp.ne.s32.totalorder %s137, %s138
      %p147 = scmp.eq.s32.totalorder %s22, 0
      %p148 = por %p146, %p147
      %p149 = scmp.ne.s32.totalorder %s137, %s138
      %p150 = scmp.eq.s32.totalorder %s23, 1
      %p151 = por %p149, %p150
      %p153 = scmp.ne.s32.totalorder %s138, %s152
      %p154 = scmp.eq.s32.totalorder %s23, 0
      %p155 = por %p153, %p154
      %s157 = sadd.s32 %s156, 1
      %p160 = scmp.eq.s32.totalorder %s17, 1
      %p161 = scmp.ne.s32.totalorder %s156, %s158
      %p162 = scmp.eq.s32.totalorder %s17, 0
      %p163 = por %p161, %p162
      %p164 = scmp.ne.s32.totalorder %s156, %s158
      %p165 = scmp.eq.s32.totalorder %s22, 1
      %p166 = por %p164, %p165
      %p167 = scmp.ne.s32.totalorder %s158, %s159
      %p168 = scmp.eq.s32.totalorder %s22, 0
      %p169 = por %p167, %p168
      %p170 = scmp.ne.s32.totalorder %s158, %s159
      %p171 = scmp.eq.s32.totalorder %s23, 1
      %p172 = por %p170, %p171
      %p174 = scmp.ne.s32.totalorder %s159, %s173
      %p175 = scmp.eq.s32.totalorder %s23, 0
      %p176 = por %p174, %p175
      %s178 = sadd.s32 %s177, 1
      %p181 = scmp.eq.s32.totalorder %s17, 1
      %p182 = scmp.ne.s32.totalorder %s177, %s179
      %p183 = scmp.eq.s32.totalorder %s17, 0
      %p184 = por %p182, %p183
      %p185 = scmp.ne.s32.totalorder %s177, %s179
      %p186 = scmp.eq.s32.totalorder %s22, 1
      %p187 = por %p185, %p186
      %p188 = scmp.ne.s32.totalorder %s179, %s180
      %p189 = scmp.eq.s32.totalorder %s22, 0
      %p190 = por %p188, %p189
      %p191 = scmp.ne.s32.totalorder %s179, %s180
      %p192 = scmp.eq.s32.totalorder %s23, 1
      %p193 = por %p191, %p192
      %p195 = scmp.ne.s32.totalorder %s180, %s194
      %p196 = scmp.eq.s32.totalorder %s23, 0
      %p197 = por %p195, %p196
      %s198 = ssub.s32 %s17, %s24
      %p199 = scmp.eq.s32.totalorder %s198, 0
      %s201 = sadd.s32 %s200, 1
      %s202 = scalar_select %p199, %s200, %s201
      %p205 = pneg %p199
      %p206 = scmp.eq.s32.totalorder %s17, 1
      %p207 = por %p205, %p206
      %p208 = scmp.ne.s32.totalorder %s200, %s203
      %p209 = scmp.eq.s32.totalorder %s17, 0
      %p210 = por %p208, %p209
      %p211 = scmp.ne.s32.totalorder %s200, %s203
      %p212 = scmp.eq.s32.totalorder %s22, 1
      %p213 = por %p211, %p212
      %p214 = scmp.ne.s32.totalorder %s203, %s204
      %p215 = scmp.eq.s32.totalorder %s22, 0
      %p216 = por %p214, %p215
      %p217 = scmp.ne.s32.totalorder %s203, %s204
      %p218 = scmp.eq.s32.totalorder %s23, 1
      %p219 = por %p217, %p218
      %p221 = scmp.ne.s32.totalorder %s204, %s220
      %p222 = scmp.eq.s32.totalorder %s23, 0
      %p223 = por %p221, %p222
      %p224 = scmp.le.s32.totalorder 1, %s17
      %p225 = scmp.lt.s32.totalorder %s17, 3
      %p226 = pnand %p224, %p225
      %p227 = pneg %p226
      // Predicated region
      $region9: #{cnn_forward.1} parent=5 // pred_check
        _
      $region10: #{cnn_forward.1} parent=5 // pred_check_branch
        %229 = sbr.rel (%p226) target = $region12
      $region11: #{cnn_forward.1} parent=5 // pred_region
        %s230 = ssub.s32 %s17, 1
        // Predicated region
        $region13: #{cnn_forward.1} parent=11 // pred_check
          %p231 = pneg %p64
        $region14: #{cnn_forward.1} parent=11 // pred_check_branch
          %233 = sbr.rel (%p231) target = $region16
        $region15: #{cnn_forward.1} parent=11 // pred_region
          _
        $region16: #{cnn_forward.1} parent=11 // pred_fallthru
          _
        // Predicated region
        $region17: #{cnn_forward.1} parent=11 // pred_check
          %p234 = pneg %p85
        $region18: #{cnn_forward.1} parent=11 // pred_check_branch
          %236 = sbr.rel (%p234) target = $region20
        $region19: #{cnn_forward.1} parent=11 // pred_region
          _
        $region20: #{cnn_forward.1} parent=11 // pred_fallthru
          _
        // Predicated region
        $region21: #{cnn_forward.1} parent=11 // pred_check
          %p237 = pneg %p106
        $region22: #{cnn_forward.1} parent=11 // pred_check_branch
          %239 = sbr.rel (%p237) target = $region24
        $region23: #{cnn_forward.1} parent=11 // pred_region
          _
        $region24: #{cnn_forward.1} parent=11 // pred_fallthru
          _
        // Predicated region
        $region25: #{cnn_forward.1} parent=11 // pred_check
          %p240 = pneg %p127
        $region26: #{cnn_forward.1} parent=11 // pred_check_branch
          %242 = sbr.rel (%p240) target = $region28
        $region27: #{cnn_forward.1} parent=11 // pred_region
          _
        $region28: #{cnn_forward.1} parent=11 // pred_fallthru
          _
        // Predicated region
        $region29: #{cnn_forward.1} parent=11 // pred_check
          %p243 = pneg %p148
        $region30: #{cnn_forward.1} parent=11 // pred_check_branch
          %245 = sbr.rel (%p243) target = $region32
        $region31: #{cnn_forward.1} parent=11 // pred_region
          _
        $region32: #{cnn_forward.1} parent=11 // pred_fallthru
          _
        // Predicated region
        $region33: #{cnn_forward.1} parent=11 // pred_check
          %p246 = pneg %p169
        $region34: #{cnn_forward.1} parent=11 // pred_check_branch
          %248 = sbr.rel (%p246) target = $region36
        $region35: #{cnn_forward.1} parent=11 // pred_region
          _
        $region36: #{cnn_forward.1} parent=11 // pred_fallthru
          _
        // Predicated region
        $region37: #{cnn_forward.1} parent=11 // pred_check
          %p249 = pneg %p190
        $region38: #{cnn_forward.1} parent=11 // pred_check_branch
          %251 = sbr.rel (%p249) target = $region40
        $region39: #{cnn_forward.1} parent=11 // pred_region
          _
        $region40: #{cnn_forward.1} parent=11 // pred_fallthru
          _
      $region12: #{cnn_forward.1} parent=5 // pred_fallthru
        _
      %p252 = scmp.lt.s32.totalorder %s17, 2
      // Predicated region
      $region41: #{cnn_forward.1} parent=5 // pred_check
        %p253 = pneg %p252
      $region42: #{cnn_forward.1} parent=5 // pred_check_branch
        %255 = sbr.rel (%p253) target = $region44
      $region43: #{cnn_forward.1} parent=5 // pred_region
        // Predicated region
        $region45: #{cnn_forward.1} parent=43 // pred_check
          %p256 = pneg %p37
        $region46: #{cnn_forward.1} parent=43 // pred_check_branch
          %258 = sbr.rel (%p256) target = $region48
        $region47: #{cnn_forward.1} parent=43 // pred_region
          %s259 = smul.u32 4, %s17
          %p260 = scmp.lt.s32.totalorder %s259, 7
          %s261 = scalar_select %p260, %s259, 7
          %s262 = smul.addr %s261, 8
          %s263 = smul.addr %s262, 4
          %s264 = scalar_lea.vmem %s0, %s263
          %s265 = smul.u32 4, %s17
        $region48: #{cnn_forward.1} parent=43 // pred_fallthru
          _
      $region44: #{cnn_forward.1} parent=5 // pred_fallthru
        _
      %p266 = scmp.le.s32.totalorder 1, %s17
      %p267 = scmp.lt.s32.totalorder %s17, 3
      %p268 = pnand %p266, %p267
      %p269 = pneg %p268
      // Predicated region
      $region49: #{cnn_forward.1} parent=5 // pred_check
        _
      $region50: #{cnn_forward.1} parent=5 // pred_check_branch
        %271 = sbr.rel (%p268) target = $region52
      $region51: #{cnn_forward.1} parent=5 // pred_region
        %s272 = ssub.s32 %s17, 1
        %s273 = smul.u32 4, %s22
        %p274 = scmp.lt.s32.totalorder %s273, 7
        %s275 = scalar_select %p274, %s273, 7
        %s276 = smul.addr %s275, 8
        %s277 = smul.addr %s276, 4
        %s278 = scalar_lea.vmem %s0, %s277
        %p279 = pneg %p43
        %p280 = pneg %p40
        %p281 = pneg %p64
        %p282 = pneg %p61
        %p283 = pneg %p85
        %p284 = pneg %p82
        %p285 = pneg %p106
        %p286 = pneg %p103
        %p287 = pneg %p127
        %p288 = pneg %p124
        %p289 = pneg %p148
        %p290 = pneg %p145
        %p291 = pneg %p169
        %p292 = pneg %p166
        %p293 = pneg %p190
        %p294 = pneg %p187
        %p295 = pneg %p216
        %p296 = pneg %p213
        %s297 = sand.u32 %s203, 1
        %s298 = scalar_lea.sflag [#allocation3], %s297
        %s299 = sand.u32 %s203, 1
        %s300 = smul.addr %s299, 4
        %s301 = scalar_lea.vmem [#allocation2], %s300
        %s302 = smul.u32 4, %s22
        %p303 = scmp.lt.s32.totalorder %s302, 7
        %s304 = scalar_select %p303, %s302, 7
        %s305 = smul.addr %s304, 8
        %s306 = smul.addr %s305, 4
        %s307 = scalar_lea.vmem %s0, %s306
        %s308 = smul.u32 4, %s22
        %v309 = vld [vmem:[%s1] sm:$0xff]
        %v310 = vld [vmem:[%s1 + $0x8] sm:$0xff]
        %v311 = vld [vmem:[%s2] sm:$0xff]
        %v312 = vld [vmem:[%s2 + $0x8] sm:$0xff]
        %v313 = vlaneseq
        %v314 = vand.u32 %v313, 127
        %v315 = vadd.s32 %v314, 128
        %v316 = vadd.s32 %v314, 256
        %v317 = vadd.s32 %v314, 384
        %v318 = vadd.s32 %v314, 512
        %v319 = vadd.s32 %v314, 640
        %v320 = vadd.s32 %v314, 768
        %v321 = vadd.s32 %v314, 896
        %v322 = vand.u32 %v314, 31
        %v323 = vand.u32 %v315, 31
        %v324 = vand.u32 %v316, 31
        %v325 = vand.u32 %v317, 31
        %v326 = vand.u32 %v318, 31
        %v327 = vand.u32 %v319, 31
        %v328 = vand.u32 %v320, 31
        %v329 = vand.u32 %v321, 31
        %vm330 = vcmp.ge.s32.totalorder %v314, 32
        %vm331 = vcmp.ge.s32.totalorder %v315, 32
        %vm332 = vcmp.ge.s32.totalorder %v316, 32
        %vm333 = vcmp.ge.s32.totalorder %v317, 32
        %vm334 = vcmp.ge.s32.totalorder %v318, 32
        %vm335 = vcmp.ge.s32.totalorder %v319, 32
        %vm336 = vcmp.ge.s32.totalorder %v320, 32
        %vm337 = vcmp.ge.s32.totalorder %v321, 32
        %vm338 = vcmp.ge.s32.totalorder %v322, 1
        %vm339 = vcmp.ge.s32.totalorder %v323, 1
        %vm340 = vcmp.ge.s32.totalorder %v324, 1
        %vm341 = vcmp.ge.s32.totalorder %v325, 1
        %vm342 = vcmp.ge.s32.totalorder %v326, 1
        %vm343 = vcmp.ge.s32.totalorder %v327, 1
        %vm344 = vcmp.ge.s32.totalorder %v328, 1
        %vm345 = vcmp.ge.s32.totalorder %v329, 1
        %vm346 = vmand %vm330, %vm338
        %vm347 = vmand %vm331, %vm339
        %vm348 = vmand %vm332, %vm340
        %vm349 = vmand %vm333, %vm341
        %vm350 = vmand %vm334, %vm342
        %vm351 = vmand %vm335, %vm343
        %vm352 = vmand %vm336, %vm344
        %vm353 = vmand %vm337, %vm345
        %vm354 = vcmp.lt.s32.totalorder %v322, 31
        %vm355 = vcmp.lt.s32.totalorder %v323, 31
        %vm356 = vcmp.lt.s32.totalorder %v324, 31
        %vm357 = vcmp.lt.s32.totalorder %v325, 31
        %vm358 = vcmp.lt.s32.totalorder %v326, 31
        %vm359 = vcmp.lt.s32.totalorder %v327, 31
        %vm360 = vcmp.lt.s32.totalorder %v328, 31
        %vm361 = vcmp.lt.s32.totalorder %v329, 31
        %vm362 = vmand %vm330, %vm354
        %vm363 = vmand %vm331, %vm355
        %vm364 = vmand %vm332, %vm356
        %vm365 = vmand %vm333, %vm357
        %vm366 = vmand %vm334, %vm358
        %vm367 = vmand %vm335, %vm359
        %vm368 = vmand %vm336, %vm360
        %vm369 = vmand %vm337, %vm361
        %vm370 = vcmp.lt.s32.totalorder %v314, 992
        %vm371 = vcmp.lt.s32.totalorder %v315, 992
        %vm372 = vcmp.lt.s32.totalorder %v316, 992
        %vm373 = vcmp.lt.s32.totalorder %v317, 992
        %vm374 = vcmp.lt.s32.totalorder %v318, 992
        %vm375 = vcmp.lt.s32.totalorder %v319, 992
        %vm376 = vcmp.lt.s32.totalorder %v320, 992
        %vm377 = vcmp.lt.s32.totalorder %v321, 992
        %vm378 = vmand %vm370, %vm338
        %vm379 = vmand %vm371, %vm339
        %vm380 = vmand %vm372, %vm340
        %vm381 = vmand %vm373, %vm341
        %vm382 = vmand %vm374, %vm342
        %vm383 = vmand %vm375, %vm343
        %vm384 = vmand %vm376, %vm344
        %vm385 = vmand %vm377, %vm345
        %vm386 = vmand %vm370, %vm354
        %vm387 = vmand %vm371, %vm355
        %vm388 = vmand %vm372, %vm356
        %vm389 = vmand %vm373, %vm357
        %vm390 = vmand %vm374, %vm358
        %vm391 = vmand %vm375, %vm359
        %vm392 = vmand %vm376, %vm360
        %vm393 = vmand %vm377, %vm361
        %v394 = vld [vmem:[%s307] sm:$0x77]
        %v395 = vld [vmem:[%s307 + $0x8] sm:$0x77]
        %v396 = vld [vmem:[%s307 + $0x10] sm:$0x77]
        %v397 = vld [vmem:[%s307 + $0x18] sm:$0x77]
        %402 = vst [vmem:[#allocation1] ss:$2 sm:$0xff] %v394
        %s403 = scalar_lea.vmem [#allocation1], 16
        %404 = vst [vmem:[%s403] ss:$2 sm:$0xff] %v395
        %s405 = scalar_lea.vmem [#allocation1], 32
        %406 = vst [vmem:[%s405] ss:$2 sm:$0xff] %v396
        %s407 = scalar_lea.vmem [#allocation1], 48
        %408 = vst [vmem:[%s407] ss:$2 sm:$0xff] %v397
        %v409 = vld.sshfl [vmem:[#allocation1] sm:$0xff pattern:$0x75316420]
        %v410 = vld.sshfl [vmem:[#allocation1 + $0x8] sm:$0xff pattern:$0x75316420]
        %v411 = vld.sshfl [vmem:[#allocation1 + $0x10] sm:$0xff pattern:$0x75316420]
        %v412 = vld.sshfl [vmem:[#allocation1 + $0x18] sm:$0xff pattern:$0x75316420]
        %v413 = vld.sshfl [vmem:[#allocation1 + $0x20] sm:$0xff pattern:$0x75316420]
        %v414 = vld.sshfl [vmem:[#allocation1 + $0x28] sm:$0xff pattern:$0x75316420]
        %v415 = vld.sshfl [vmem:[#allocation1 + $0x30] sm:$0xff pattern:$0x75316420]
        %v416 = vld.sshfl [vmem:[#allocation1 + $0x38] sm:$0xff pattern:$0x75316420]
        %425 = vrot.lane.b32.xlu0 %v409, 33
        %v426 = vpop.permute.xlu0 %425
        %427 = vrot.lane.b32.xlu0 %v410, 33
        %v428 = vpop.permute.xlu0 %427
        %429 = vrot.lane.b32.xlu0 %v411, 33
        %v430 = vpop.permute.xlu0 %429
        %431 = vrot.lane.b32.xlu0 %v412, 33
        %v432 = vpop.permute.xlu0 %431
        %433 = vrot.lane.b32.xlu0 %v413, 33
        %v434 = vpop.permute.xlu0 %433
        %435 = vrot.lane.b32.xlu0 %v414, 33
        %v436 = vpop.permute.xlu0 %435
        %437 = vrot.lane.b32.xlu0 %v415, 33
        %v438 = vpop.permute.xlu0 %437
        %439 = vrot.lane.b32.xlu0 %v416, 33
        %v440 = vpop.permute.xlu0 %439
        %vm441 = vcmp.lt.s32.totalorder %v314, 33
        %v442 = vsel %vm441, %v438, %v440
        %v443 = vsel %vm441, %v436, %v438
        %v444 = vsel %vm441, %v434, %v436
        %v445 = vsel %vm441, %v432, %v434
        %v446 = vsel %vm441, %v430, %v432
        %v447 = vsel %vm441, %v428, %v430
        %v448 = vsel %vm441, %v426, %v428
        %v449 = vsel %vm441, %v440, %v426
        %v450 = vsel %vm346, %v449, 0.0
        %v451 = vsel %vm347, %v448, 0.0
        %v452 = vsel %vm348, %v447, 0.0
        %v453 = vsel %vm349, %v446, 0.0
        %v454 = vsel %vm350, %v445, 0.0
        %v455 = vsel %vm351, %v444, 0.0
        %v456 = vsel %vm352, %v443, 0.0
        %v457 = vsel %vm353, %v442, 0.0
        %458 = vst [vmem:[#allocation1] ss:$2 sm:$0xff] %v394
        %s459 = scalar_lea.vmem [#allocation1], 16
        %460 = vst [vmem:[%s459] ss:$2 sm:$0xff] %v395
        %s461 = scalar_lea.vmem [#allocation1], 32
        %462 = vst [vmem:[%s461] ss:$2 sm:$0xff] %v396
        %s463 = scalar_lea.vmem [#allocation1], 48
        %464 = vst [vmem:[%s463] ss:$2 sm:$0xff] %v397
        %v465 = vld.sshfl [vmem:[#allocation1] sm:$0xff pattern:$0x75316420]
        %v466 = vld.sshfl [vmem:[#allocation1 + $0x8] sm:$0xff pattern:$0x75316420]
        %v467 = vld.sshfl [vmem:[#allocation1 + $0x10] sm:$0xff pattern:$0x75316420]
        %v468 = vld.sshfl [vmem:[#allocation1 + $0x18] sm:$0xff pattern:$0x75316420]
        %v469 = vld.sshfl [vmem:[#allocation1 + $0x20] sm:$0xff pattern:$0x75316420]
        %v470 = vld.sshfl [vmem:[#allocation1 + $0x28] sm:$0xff pattern:$0x75316420]
        %v471 = vld.sshfl [vmem:[#allocation1 + $0x30] sm:$0xff pattern:$0x75316420]
        %v472 = vld.sshfl [vmem:[#allocation1 + $0x38] sm:$0xff pattern:$0x75316420]
        %481 = vrot.lane.b32.xlu0 %v465, 32
        %v482 = vpop.permute.xlu0 %481
        %483 = vrot.lane.b32.xlu0 %v466, 32
        %v484 = vpop.permute.xlu0 %483
        %485 = vrot.lane.b32.xlu0 %v467, 32
        %v486 = vpop.permute.xlu0 %485
        %487 = vrot.lane.b32.xlu0 %v468, 32
        %v488 = vpop.permute.xlu0 %487
        %489 = vrot.lane.b32.xlu0 %v469, 32
        %v490 = vpop.permute.xlu0 %489
        %491 = vrot.lane.b32.xlu0 %v470, 32
        %v492 = vpop.permute.xlu0 %491
        %493 = vrot.lane.b32.xlu0 %v471, 32
        %v494 = vpop.permute.xlu0 %493
        %495 = vrot.lane.b32.xlu0 %v472, 32
        %v496 = vpop.permute.xlu0 %495
        %vm497 = vcmp.lt.s32.totalorder %v314, 32
        %v498 = vsel %vm497, %v494, %v496
        %v499 = vsel %vm497, %v492, %v494
        %v500 = vsel %vm497, %v490, %v492
        %v501 = vsel %vm497, %v488, %v490
        %v502 = vsel %vm497, %v486, %v488
        %v503 = vsel %vm497, %v484, %v486
        %v504 = vsel %vm497, %v482, %v484
        %v505 = vsel %vm497, %v496, %v482
        %v506 = vsel %vm330, %v505, 0.0
        %v507 = vsel %vm331, %v504, 0.0
        %v508 = vsel %vm332, %v503, 0.0
        %v509 = vsel %vm333, %v502, 0.0
        %v510 = vsel %vm334, %v501, 0.0
        %v511 = vsel %vm335, %v500, 0.0
        %v512 = vsel %vm336, %v499, 0.0
        %v513 = vsel %vm337, %v498, 0.0
        %514 = vst [vmem:[#allocation1] ss:$2 sm:$0xff] %v394
        %s515 = scalar_lea.vmem [#allocation1], 16
        %516 = vst [vmem:[%s515] ss:$2 sm:$0xff] %v395
        %s517 = scalar_lea.vmem [#allocation1], 32
        %518 = vst [vmem:[%s517] ss:$2 sm:$0xff] %v396
        %s519 = scalar_lea.vmem [#allocation1], 48
        %520 = vst [vmem:[%s519] ss:$2 sm:$0xff] %v397
        %v521 = vld.sshfl [vmem:[#allocation1] sm:$0xff pattern:$0x75316420]
        %v522 = vld.sshfl [vmem:[#allocation1 + $0x8] sm:$0xff pattern:$0x75316420]
        %v523 = vld.sshfl [vmem:[#allocation1 + $0x10] sm:$0xff pattern:$0x75316420]
        %v524 = vld.sshfl [vmem:[#allocation1 + $0x18] sm:$0xff pattern:$0x75316420]
        %v525 = vld.sshfl [vmem:[#allocation1 + $0x20] sm:$0xff pattern:$0x75316420]
        %v526 = vld.sshfl [vmem:[#allocation1 + $0x28] sm:$0xff pattern:$0x75316420]
        %v527 = vld.sshfl [vmem:[#allocation1 + $0x30] sm:$0xff pattern:$0x75316420]
        %v528 = vld.sshfl [vmem:[#allocation1 + $0x38] sm:$0xff pattern:$0x75316420]
        %537 = vrot.lane.b32.xlu0 %v521, 31
        %v538 = vpop.permute.xlu0 %537
        %539 = vrot.lane.b32.xlu0 %v522, 31
        %v540 = vpop.permute.xlu0 %539
        %541 = vrot.lane.b32.xlu0 %v523, 31
        %v542 = vpop.permute.xlu0 %541
        %543 = vrot.lane.b32.xlu0 %v524, 31
        %v544 = vpop.permute.xlu0 %543
        %545 = vrot.lane.b32.xlu0 %v525, 31
        %v546 = vpop.permute.xlu0 %545
        %547 = vrot.lane.b32.xlu0 %v526, 31
        %v548 = vpop.permute.xlu0 %547
        %549 = vrot.lane.b32.xlu0 %v527, 31
        %v550 = vpop.permute.xlu0 %549
        %551 = vrot.lane.b32.xlu0 %v528, 31
        %v552 = vpop.permute.xlu0 %551
        %vm553 = vcmp.lt.s32.totalorder %v314, 31
        %v554 = vsel %vm553, %v550, %v552
        %v555 = vsel %vm553, %v548, %v550
        %v556 = vsel %vm553, %v546, %v548
        %v557 = vsel %vm553, %v544, %v546
        %v558 = vsel %vm553, %v542, %v544
        %v559 = vsel %vm553, %v540, %v542
        %v560 = vsel %vm553, %v538, %v540
        %v561 = vsel %vm553, %v552, %v538
        %v562 = vsel %vm362, %v561, 0.0
        %v563 = vsel %vm363, %v560, 0.0
        %v564 = vsel %vm364, %v559, 0.0
        %v565 = vsel %vm365, %v558, 0.0
        %v566 = vsel %vm366, %v557, 0.0
        %v567 = vsel %vm367, %v556, 0.0
        %v568 = vsel %vm368, %v555, 0.0
        %v569 = vsel %vm369, %v554, 0.0
        %570 = vst [vmem:[#allocation1] ss:$2 sm:$0xff] %v394
        %s571 = scalar_lea.vmem [#allocation1], 16
        %572 = vst [vmem:[%s571] ss:$2 sm:$0xff] %v395
        %s573 = scalar_lea.vmem [#allocation1], 32
        %574 = vst [vmem:[%s573] ss:$2 sm:$0xff] %v396
        %s575 = scalar_lea.vmem [#allocation1], 48
        %576 = vst [vmem:[%s575] ss:$2 sm:$0xff] %v397
        %v577 = vld.sshfl [vmem:[#allocation1] sm:$0xff pattern:$0x75316420]
        %v578 = vld.sshfl [vmem:[#allocation1 + $0x8] sm:$0xff pattern:$0x75316420]
        %v579 = vld.sshfl [vmem:[#allocation1 + $0x10] sm:$0xff pattern:$0x75316420]
        %v580 = vld.sshfl [vmem:[#allocation1 + $0x18] sm:$0xff pattern:$0x75316420]
        %v581 = vld.sshfl [vmem:[#allocation1 + $0x20] sm:$0xff pattern:$0x75316420]
        %v582 = vld.sshfl [vmem:[#allocation1 + $0x28] sm:$0xff pattern:$0x75316420]
        %v583 = vld.sshfl [vmem:[#allocation1 + $0x30] sm:$0xff pattern:$0x75316420]
        %v584 = vld.sshfl [vmem:[#allocation1 + $0x38] sm:$0xff pattern:$0x75316420]
        %593 = vrot.lane.b32.xlu0 %v577, 1
        %v594 = vpop.permute.xlu0 %593
        %595 = vrot.lane.b32.xlu0 %v578, 1
        %v596 = vpop.permute.xlu0 %595
        %597 = vrot.lane.b32.xlu0 %v579, 1
        %v598 = vpop.permute.xlu0 %597
        %599 = vrot.lane.b32.xlu0 %v580, 1
        %v600 = vpop.permute.xlu0 %599
        %601 = vrot.lane.b32.xlu0 %v581, 1
        %v602 = vpop.permute.xlu0 %601
        %603 = vrot.lane.b32.xlu0 %v582, 1
        %v604 = vpop.permute.xlu0 %603
        %605 = vrot.lane.b32.xlu0 %v583, 1
        %v606 = vpop.permute.xlu0 %605
        %607 = vrot.lane.b32.xlu0 %v584, 1
        %v608 = vpop.permute.xlu0 %607
        %vm609 = vcmp.lt.s32.totalorder %v314, 1
        %v610 = vsel %vm609, %v606, %v608
        %v611 = vsel %vm609, %v604, %v606
        %v612 = vsel %vm609, %v602, %v604
        %v613 = vsel %vm609, %v600, %v602
        %v614 = vsel %vm609, %v598, %v600
        %v615 = vsel %vm609, %v596, %v598
        %v616 = vsel %vm609, %v594, %v596
        %v617 = vsel %vm609, %v608, %v594
        %v618 = vsel %vm338, %v617, 0.0
        %v619 = vsel %vm339, %v616, 0.0
        %v620 = vsel %vm340, %v615, 0.0
        %v621 = vsel %vm341, %v614, 0.0
        %v622 = vsel %vm342, %v613, 0.0
        %v623 = vsel %vm343, %v612, 0.0
        %v624 = vsel %vm344, %v611, 0.0
        %v625 = vsel %vm345, %v610, 0.0
        %626 = vst [vmem:[#allocation1] ss:$2 sm:$0xff] %v394
        %s627 = scalar_lea.vmem [#allocation1], 16
        %628 = vst [vmem:[%s627] ss:$2 sm:$0xff] %v395
        %s629 = scalar_lea.vmem [#allocation1], 32
        %630 = vst [vmem:[%s629] ss:$2 sm:$0xff] %v396
        %s631 = scalar_lea.vmem [#allocation1], 48
        %632 = vst [vmem:[%s631] ss:$2 sm:$0xff] %v397
        %v633 = vld.sshfl [vmem:[#allocation1] sm:$0xff pattern:$0x75316420]
        %v634 = vld.sshfl [vmem:[#allocation1 + $0x8] sm:$0xff pattern:$0x75316420]
        %v635 = vld.sshfl [vmem:[#allocation1 + $0x10] sm:$0xff pattern:$0x75316420]
        %v636 = vld.sshfl [vmem:[#allocation1 + $0x18] sm:$0xff pattern:$0x75316420]
        %v637 = vld.sshfl [vmem:[#allocation1 + $0x20] sm:$0xff pattern:$0x75316420]
        %v638 = vld.sshfl [vmem:[#allocation1 + $0x28] sm:$0xff pattern:$0x75316420]
        %v639 = vld.sshfl [vmem:[#allocation1 + $0x30] sm:$0xff pattern:$0x75316420]
        %v640 = vld.sshfl [vmem:[#allocation1 + $0x38] sm:$0xff pattern:$0x75316420]
        %649 = vrot.lane.b32.xlu0 %v633, 127
        %v650 = vpop.permute.xlu0 %649
        %651 = vrot.lane.b32.xlu0 %v634, 127
        %v652 = vpop.permute.xlu0 %651
        %653 = vrot.lane.b32.xlu0 %v635, 127
        %v654 = vpop.permute.xlu0 %653
        %655 = vrot.lane.b32.xlu0 %v636, 127
        %v656 = vpop.permute.xlu0 %655
        %657 = vrot.lane.b32.xlu0 %v637, 127
        %v658 = vpop.permute.xlu0 %657
        %659 = vrot.lane.b32.xlu0 %v638, 127
        %v660 = vpop.permute.xlu0 %659
        %661 = vrot.lane.b32.xlu0 %v639, 127
        %v662 = vpop.permute.xlu0 %661
        %663 = vrot.lane.b32.xlu0 %v640, 127
        %v664 = vpop.permute.xlu0 %663
        %vm665 = vcmp.lt.s32.totalorder %v314, 127
        %v666 = vsel %vm665, %v662, %v664
        %v667 = vsel %vm665, %v660, %v662
        %v668 = vsel %vm665, %v658, %v660
        %v669 = vsel %vm665, %v656, %v658
        %v670 = vsel %vm665, %v654, %v656
        %v671 = vsel %vm665, %v652, %v654
        %v672 = vsel %vm665, %v650, %v652
        %v673 = vsel %vm665, %v664, %v650
        %v674 = vsel %vm354, %v672, 0.0
        %v675 = vsel %vm355, %v671, 0.0
        %v676 = vsel %vm356, %v670, 0.0
        %v677 = vsel %vm357, %v669, 0.0
        %v678 = vsel %vm358, %v668, 0.0
        %v679 = vsel %vm359, %v667, 0.0
        %v680 = vsel %vm360, %v666, 0.0
        %v681 = vsel %vm361, %v673, 0.0
        %682 = vst [vmem:[#allocation1] ss:$2 sm:$0xff] %v394
        %s683 = scalar_lea.vmem [#allocation1], 16
        %684 = vst [vmem:[%s683] ss:$2 sm:$0xff] %v395
        %s685 = scalar_lea.vmem [#allocation1], 32
        %686 = vst [vmem:[%s685] ss:$2 sm:$0xff] %v396
        %s687 = scalar_lea.vmem [#allocation1], 48
        %688 = vst [vmem:[%s687] ss:$2 sm:$0xff] %v397
        %v689 = vld.sshfl [vmem:[#allocation1] sm:$0xff pattern:$0x75316420]
        %v690 = vld.sshfl [vmem:[#allocation1 + $0x8] sm:$0xff pattern:$0x75316420]
        %v691 = vld.sshfl [vmem:[#allocation1 + $0x10] sm:$0xff pattern:$0x75316420]
        %v692 = vld.sshfl [vmem:[#allocation1 + $0x18] sm:$0xff pattern:$0x75316420]
        %v693 = vld.sshfl [vmem:[#allocation1 + $0x20] sm:$0xff pattern:$0x75316420]
        %v694 = vld.sshfl [vmem:[#allocation1 + $0x28] sm:$0xff pattern:$0x75316420]
        %v695 = vld.sshfl [vmem:[#allocation1 + $0x30] sm:$0xff pattern:$0x75316420]
        %v696 = vld.sshfl [vmem:[#allocation1 + $0x38] sm:$0xff pattern:$0x75316420]
        %705 = vrot.lane.b32.xlu0 %v689, 97
        %v706 = vpop.permute.xlu0 %705
        %707 = vrot.lane.b32.xlu0 %v690, 97
        %v708 = vpop.permute.xlu0 %707
        %709 = vrot.lane.b32.xlu0 %v691, 97
        %v710 = vpop.permute.xlu0 %709
        %711 = vrot.lane.b32.xlu0 %v692, 97
        %v712 = vpop.permute.xlu0 %711
        %713 = vrot.lane.b32.xlu0 %v693, 97
        %v714 = vpop.permute.xlu0 %713
        %715 = vrot.lane.b32.xlu0 %v694, 97
        %v716 = vpop.permute.xlu0 %715
        %717 = vrot.lane.b32.xlu0 %v695, 97
        %v718 = vpop.permute.xlu0 %717
        %719 = vrot.lane.b32.xlu0 %v696, 97
        %v720 = vpop.permute.xlu0 %719
        %vm721 = vcmp.lt.s32.totalorder %v314, 97
        %v722 = vsel %vm721, %v718, %v720
        %v723 = vsel %vm721, %v716, %v718
        %v724 = vsel %vm721, %v714, %v716
        %v725 = vsel %vm721, %v712, %v714
        %v726 = vsel %vm721, %v710, %v712
        %v727 = vsel %vm721, %v708, %v710
        %v728 = vsel %vm721, %v706, %v708
        %v729 = vsel %vm721, %v720, %v706
        %v730 = vsel %vm378, %v728, 0.0
        %v731 = vsel %vm379, %v727, 0.0
        %v732 = vsel %vm380, %v726, 0.0
        %v733 = vsel %vm381, %v725, 0.0
        %v734 = vsel %vm382, %v724, 0.0
        %v735 = vsel %vm383, %v723, 0.0
        %v736 = vsel %vm384, %v722, 0.0
        %v737 = vsel %vm385, %v729, 0.0
        %738 = vst [vmem:[#allocation1] ss:$2 sm:$0xff] %v394
        %s739 = scalar_lea.vmem [#allocation1], 16
        %740 = vst [vmem:[%s739] ss:$2 sm:$0xff] %v395
        %s741 = scalar_lea.vmem [#allocation1], 32
        %742 = vst [vmem:[%s741] ss:$2 sm:$0xff] %v396
        %s743 = scalar_lea.vmem [#allocation1], 48
        %744 = vst [vmem:[%s743] ss:$2 sm:$0xff] %v397
        %v745 = vld.sshfl [vmem:[#allocation1] sm:$0xff pattern:$0x75316420]
        %v746 = vld.sshfl [vmem:[#allocation1 + $0x8] sm:$0xff pattern:$0x75316420]
        %v747 = vld.sshfl [vmem:[#allocation1 + $0x10] sm:$0xff pattern:$0x75316420]
        %v748 = vld.sshfl [vmem:[#allocation1 + $0x18] sm:$0xff pattern:$0x75316420]
        %v749 = vld.sshfl [vmem:[#allocation1 + $0x20] sm:$0xff pattern:$0x75316420]
        %v750 = vld.sshfl [vmem:[#allocation1 + $0x28] sm:$0xff pattern:$0x75316420]
        %v751 = vld.sshfl [vmem:[#allocation1 + $0x30] sm:$0xff pattern:$0x75316420]
        %v752 = vld.sshfl [vmem:[#allocation1 + $0x38] sm:$0xff pattern:$0x75316420]
        %761 = vrot.lane.b32.xlu0 %v745, 96
        %v762 = vpop.permute.xlu0 %761
        %763 = vrot.lane.b32.xlu0 %v746, 96
        %v764 = vpop.permute.xlu0 %763
        %765 = vrot.lane.b32.xlu0 %v747, 96
        %v766 = vpop.permute.xlu0 %765
        %767 = vrot.lane.b32.xlu0 %v748, 96
        %v768 = vpop.permute.xlu0 %767
        %769 = vrot.lane.b32.xlu0 %v749, 96
        %v770 = vpop.permute.xlu0 %769
        %771 = vrot.lane.b32.xlu0 %v750, 96
        %v772 = vpop.permute.xlu0 %771
        %773 = vrot.lane.b32.xlu0 %v751, 96
        %v774 = vpop.permute.xlu0 %773
        %775 = vrot.lane.b32.xlu0 %v752, 96
        %v776 = vpop.permute.xlu0 %775
        %vm777 = vcmp.lt.s32.totalorder %v314, 96
        %v778 = vsel %vm777, %v774, %v776
        %v779 = vsel %vm777, %v772, %v774
        %v780 = vsel %vm777, %v770, %v772
        %v781 = vsel %vm777, %v768, %v770
        %v782 = vsel %vm777, %v766, %v768
        %v783 = vsel %vm777, %v764, %v766
        %v784 = vsel %vm777, %v762, %v764
        %v785 = vsel %vm777, %v776, %v762
        %v786 = vsel %vm370, %v784, 0.0
        %v787 = vsel %vm371, %v783, 0.0
        %v788 = vsel %vm372, %v782, 0.0
        %v789 = vsel %vm373, %v781, 0.0
        %v790 = vsel %vm374, %v780, 0.0
        %v791 = vsel %vm375, %v779, 0.0
        %v792 = vsel %vm376, %v778, 0.0
        %v793 = vsel %vm377, %v785, 0.0
        %794 = vst [vmem:[#allocation1] ss:$2 sm:$0xff] %v394
        %s795 = scalar_lea.vmem [#allocation1], 16
        %796 = vst [vmem:[%s795] ss:$2 sm:$0xff] %v395
        %s797 = scalar_lea.vmem [#allocation1], 32
        %798 = vst [vmem:[%s797] ss:$2 sm:$0xff] %v396
        %s799 = scalar_lea.vmem [#allocation1], 48
        %800 = vst [vmem:[%s799] ss:$2 sm:$0xff] %v397
        %v801 = vld.sshfl [vmem:[#allocation1] sm:$0xff pattern:$0x75316420]
        %v802 = vld.sshfl [vmem:[#allocation1 + $0x8] sm:$0xff pattern:$0x75316420]
        %v803 = vld.sshfl [vmem:[#allocation1 + $0x10] sm:$0xff pattern:$0x75316420]
        %v804 = vld.sshfl [vmem:[#allocation1 + $0x18] sm:$0xff pattern:$0x75316420]
        %v805 = vld.sshfl [vmem:[#allocation1 + $0x20] sm:$0xff pattern:$0x75316420]
        %v806 = vld.sshfl [vmem:[#allocation1 + $0x28] sm:$0xff pattern:$0x75316420]
        %v807 = vld.sshfl [vmem:[#allocation1 + $0x30] sm:$0xff pattern:$0x75316420]
        %v808 = vld.sshfl [vmem:[#allocation1 + $0x38] sm:$0xff pattern:$0x75316420]
        %817 = vrot.lane.b32.xlu0 %v801, 95
        %v818 = vpop.permute.xlu0 %817
        %819 = vrot.lane.b32.xlu0 %v802, 95
        %v820 = vpop.permute.xlu0 %819
        %821 = vrot.lane.b32.xlu0 %v803, 95
        %v822 = vpop.permute.xlu0 %821
        %823 = vrot.lane.b32.xlu0 %v804, 95
        %v824 = vpop.permute.xlu0 %823
        %825 = vrot.lane.b32.xlu0 %v805, 95
        %v826 = vpop.permute.xlu0 %825
        %827 = vrot.lane.b32.xlu0 %v806, 95
        %v828 = vpop.permute.xlu0 %827
        %829 = vrot.lane.b32.xlu0 %v807, 95
        %v830 = vpop.permute.xlu0 %829
        %831 = vrot.lane.b32.xlu0 %v808, 95
        %v832 = vpop.permute.xlu0 %831
        %vm833 = vcmp.lt.s32.totalorder %v314, 95
        %v834 = vsel %vm833, %v830, %v832
        %v835 = vsel %vm833, %v828, %v830
        %v836 = vsel %vm833, %v826, %v828
        %v837 = vsel %vm833, %v824, %v826
        %v838 = vsel %vm833, %v822, %v824
        %v839 = vsel %vm833, %v820, %v822
        %v840 = vsel %vm833, %v818, %v820
        %v841 = vsel %vm833, %v832, %v818
        %v842 = vsel %vm386, %v840, 0.0
        %v843 = vsel %vm387, %v839, 0.0
        %v844 = vsel %vm388, %v838, 0.0
        %v845 = vsel %vm389, %v837, 0.0
        %v846 = vsel %vm390, %v836, 0.0
        %v847 = vsel %vm391, %v835, 0.0
        %v848 = vsel %vm392, %v834, 0.0
        %v849 = vsel %vm393, %v841, 0.0
        %v858 = vrot.slane %v506, 5
        %v859 = vrot.slane %v507, 5
        %v860 = vrot.slane %v508, 5
        %v861 = vrot.slane %v509, 5
        %v862 = vrot.slane %v510, 5
        %v863 = vrot.slane %v511, 5
        %v864 = vrot.slane %v512, 5
        %v865 = vrot.slane %v513, 5
        %v882 = vrot.slane %v562, 2
        %v883 = vrot.slane %v563, 2
        %v884 = vrot.slane %v564, 2
        %v885 = vrot.slane %v565, 2
        %v886 = vrot.slane %v566, 2
        %v887 = vrot.slane %v567, 2
        %v888 = vrot.slane %v568, 2
        %v889 = vrot.slane %v569, 2
        %v906 = vrot.slane %v618, 7
        %v907 = vrot.slane %v619, 7
        %v908 = vrot.slane %v620, 7
        %v909 = vrot.slane %v621, 7
        %v910 = vrot.slane %v622, 7
        %v911 = vrot.slane %v623, 7
        %v912 = vrot.slane %v624, 7
        %v913 = vrot.slane %v625, 7
        %s922 = scalar_lea.vmem [#allocation1], 1
        %923 = vst [vmem:[%s922] ss:$2 sm:$0xff] %v394
        %s924 = scalar_lea.vmem [#allocation1], 17
        %925 = vst [vmem:[%s924] ss:$2 sm:$0xff] %v395
        %s926 = scalar_lea.vmem [#allocation1], 33
        %927 = vst [vmem:[%s926] ss:$2 sm:$0xff] %v396
        %s928 = scalar_lea.vmem [#allocation1], 49
        %929 = vst [vmem:[%s928] ss:$2 sm:$0xff] %v397
        %v930 = vld.sshfl [vmem:[#allocation1] sm:$0xff pattern:$0x75316420]
        %v931 = vld.sshfl [vmem:[#allocation1 + $0x8] sm:$0xff pattern:$0x75316420]
        %v932 = vld.sshfl [vmem:[#allocation1 + $0x10] sm:$0xff pattern:$0x75316420]
        %v933 = vld.sshfl [vmem:[#allocation1 + $0x18] sm:$0xff pattern:$0x75316420]
        %v934 = vld.sshfl [vmem:[#allocation1 + $0x20] sm:$0xff pattern:$0x75316420]
        %v935 = vld.sshfl [vmem:[#allocation1 + $0x28] sm:$0xff pattern:$0x75316420]
        %v936 = vld.sshfl [vmem:[#allocation1 + $0x30] sm:$0xff pattern:$0x75316420]
        %v937 = vld.sshfl [vmem:[#allocation1 + $0x38] sm:$0xff pattern:$0x75316420]
        %v954 = vrot.slane %v674, 1
        %v955 = vrot.slane %v675, 1
        %v956 = vrot.slane %v676, 1
        %v957 = vrot.slane %v677, 1
        %v958 = vrot.slane %v678, 1
        %v959 = vrot.slane %v679, 1
        %v960 = vrot.slane %v680, 1
        %v961 = vrot.slane %v681, 1
        %v978 = vrot.slane %v730, 6
        %v979 = vrot.slane %v731, 6
        %v980 = vrot.slane %v732, 6
        %v981 = vrot.slane %v733, 6
        %v982 = vrot.slane %v734, 6
        %v983 = vrot.slane %v735, 6
        %v984 = vrot.slane %v736, 6
        %v985 = vrot.slane %v737, 6
        %v1002 = vrot.slane %v786, 3
        %v1003 = vrot.slane %v787, 3
        %v1004 = vrot.slane %v788, 3
        %v1005 = vrot.slane %v789, 3
        %v1006 = vrot.slane %v790, 3
        %v1007 = vrot.slane %v791, 3
        %v1008 = vrot.slane %v792, 3
        %v1009 = vrot.slane %v793, 3
        %vm1018 = vcmask 1042432
        %v1019 = vsel %vm1018, %v450, %v858
        %v1020 = vsel %vm1018, %v451, %v859
        %v1021 = vsel %vm1018, %v452, %v860
        %v1022 = vsel %vm1018, %v453, %v861
        %v1023 = vsel %vm1018, %v454, %v862
        %v1024 = vsel %vm1018, %v455, %v863
        %v1025 = vsel %vm1018, %v456, %v864
        %v1026 = vsel %vm1018, %v457, %v865
        %vm1027 = vcmask 1045504
        %v1028 = vsel %vm1027, %v1019, %v882
        %v1029 = vsel %vm1027, %v1020, %v883
        %v1030 = vsel %vm1027, %v1021, %v884
        %v1031 = vsel %vm1027, %v1022, %v885
        %v1032 = vsel %vm1027, %v1023, %v886
        %v1033 = vsel %vm1027, %v1024, %v887
        %v1034 = vsel %vm1027, %v1025, %v888
        %v1035 = vsel %vm1027, %v1026, %v889
        %vm1036 = vcmask 1040384
        %v1037 = vsel %vm1036, %v882, %v906
        %v1038 = vsel %vm1036, %v883, %v907
        %v1039 = vsel %vm1036, %v884, %v908
        %v1040 = vsel %vm1036, %v885, %v909
        %v1041 = vsel %vm1036, %v886, %v910
        %v1042 = vsel %vm1036, %v887, %v911
        %v1043 = vsel %vm1036, %v888, %v912
        %v1044 = vsel %vm1036, %v889, %v913
        %vm1045 = vcmask 1043456
        %v1046 = vsel %vm1045, %v1037, %v930
        %v1047 = vsel %vm1045, %v1038, %v931
        %v1048 = vsel %vm1045, %v1039, %v932
        %v1049 = vsel %vm1045, %v1040, %v933
        %v1050 = vsel %vm1045, %v1041, %v934
        %v1051 = vsel %vm1045, %v1042, %v935
        %v1052 = vsel %vm1045, %v1043, %v936
        %v1053 = vsel %vm1045, %v1044, %v937
        %vm1054 = vcmask 1046528
        %v1055 = vsel %vm1054, %v1046, %v954
        %v1056 = vsel %vm1054, %v1047, %v955
        %v1057 = vsel %vm1054, %v1048, %v956
        %v1058 = vsel %vm1054, %v1049, %v957
        %v1059 = vsel %vm1054, %v1050, %v958
        %v1060 = vsel %vm1054, %v1051, %v959
        %v1061 = vsel %vm1054, %v1052, %v960
        %v1062 = vsel %vm1054, %v1053, %v961
        %vm1063 = vcmask 1041408
        %v1064 = vsel %vm1063, %v954, %v978
        %v1065 = vsel %vm1063, %v955, %v979
        %v1066 = vsel %vm1063, %v956, %v980
        %v1067 = vsel %vm1063, %v957, %v981
        %v1068 = vsel %vm1063, %v958, %v982
        %v1069 = vsel %vm1063, %v959, %v983
        %v1070 = vsel %vm1063, %v960, %v984
        %v1071 = vsel %vm1063, %v961, %v985
        %vm1072 = vcmask 1044480
        %v1073 = vsel %vm1072, %v1064, %v1002
        %v1074 = vsel %vm1072, %v1065, %v1003
        %v1075 = vsel %vm1072, %v1066, %v1004
        %v1076 = vsel %vm1072, %v1067, %v1005
        %v1077 = vsel %vm1072, %v1068, %v1006
        %v1078 = vsel %vm1072, %v1069, %v1007
        %v1079 = vsel %vm1072, %v1070, %v1008
        %v1080 = vsel %vm1072, %v1071, %v1009
        %1082 = vset.pattern.permute.xlu0 0
        %1083 = vperm.xlu0 %1082, %v311
        %v1084 = vpop.permute.xlu0 %1083
        %1087 = vset.pattern.permute.xlu0 0
        %1088 = vperm.xlu0 %1087, %v312
        %v1089 = vpop.permute.xlu0 %1088
        %vm1091 = vcmask 220160
        %v1093 = vsel %vm1091, %v309, 0
        %v1096 = vsel %vm1091, %v310, 0
        %v1099 = vsel %vm1018, %v842, 0
        %v1102 = vsel %vm1018, %v843, 0
        %v1105 = vsel %vm1018, %v844, 0
        %v1108 = vsel %vm1018, %v845, 0
        %v1111 = vsel %vm1018, %v846, 0
        %v1114 = vsel %vm1018, %v847, 0
        %v1117 = vsel %vm1018, %v848, 0
        %v1120 = vsel %vm1018, %v849, 0
        %1122 = vmatpush.msra.mxu0 0.0
        %1123 = vmatpush.msra.mxu0 0.0
        %1124 = vmatpush.msra.mxu0 0.0
        %1125 = vmatpush.msra.mxu0 0.0
        %1126 = vmatpush.msra.mxu0 0.0
        %1127 = vmatpush.msra.mxu0 0.0
        %1128 = vmatpush.msra.mxu0 0.0
        %1129 = vmatpush.msra.mxu0 0.0
        %1130 = vmatpush.msra.mxu0 0.0
        %1131 = vmatpush.msra.mxu0 0.0
        %1132 = vmatpush.msra.mxu0 0.0
        %1133 = vmatpush.msra.mxu0 0.0
        %1134 = vmatpush.msra.mxu0 %v1099
        %1135 = vmatpush.msra.mxu0 %v1073
        %1136 = vmatpush.msra.mxu0 %v1055
        %1137 = vmatpush.msra.mxu0 %v1028
        %1138 = vmatmul.f32.gmra.mxu0 %v1093
        %v1139 = vpop.f32.mrf.mxu0
        %v1140 = vadd.f32 %v1084, %v1139
        %1141 = vmatmul.f32.gmra.mxu0 %v1096
        %v1142 = vpop.f32.mrf.mxu0
        %v1143 = vadd.f32 %v1089, %v1142
        %1144 = vdwg.mxu0
        %1145 = vmatpush.msra.mxu0 0.0
        %1146 = vmatpush.msra.mxu0 0.0
        %1147 = vmatpush.msra.mxu0 0.0
        %1148 = vmatpush.msra.mxu0 0.0
        %1149 = vmatpush.msra.mxu0 0.0
        %1150 = vmatpush.msra.mxu0 0.0
        %1151 = vmatpush.msra.mxu0 0.0
        %1152 = vmatpush.msra.mxu0 0.0
        %1153 = vmatpush.msra.mxu0 0.0
        %1154 = vmatpush.msra.mxu0 0.0
        %1155 = vmatpush.msra.mxu0 0.0
        %1156 = vmatpush.msra.mxu0 0.0
        %1157 = vmatpush.msra.mxu0 %v1102
        %1158 = vmatpush.msra.mxu0 %v1074
        %1159 = vmatpush.msra.mxu0 %v1056
        %1160 = vmatpush.msra.mxu0 %v1029
        %1161 = vmatmul.f32.gmra.mxu0 %v1093
        %v1162 = vpop.f32.mrf.mxu0
        %v1163 = vadd.f32 %v1084, %v1162
        %1164 = vmatmul.f32.gmra.mxu0 %v1096
        %v1165 = vpop.f32.mrf.mxu0
        %v1166 = vadd.f32 %v1089, %v1165
        %1167 = vdwg.mxu0
        %1168 = vmatpush.msra.mxu0 0.0
        %1169 = vmatpush.msra.mxu0 0.0
        %1170 = vmatpush.msra.mxu0 0.0
        %1171 = vmatpush.msra.mxu0 0.0
        %1172 = vmatpush.msra.mxu0 0.0
        %1173 = vmatpush.msra.mxu0 0.0
        %1174 = vmatpush.msra.mxu0 0.0
        %1175 = vmatpush.msra.mxu0 0.0
        %1176 = vmatpush.msra.mxu0 0.0
        %1177 = vmatpush.msra.mxu0 0.0
        %1178 = vmatpush.msra.mxu0 0.0
        %1179 = vmatpush.msra.mxu0 0.0
        %1180 = vmatpush.msra.mxu0 %v1105
        %1181 = vmatpush.msra.mxu0 %v1075
        %1182 = vmatpush.msra.mxu0 %v1057
        %1183 = vmatpush.msra.mxu0 %v1030
        %1184 = vmatmul.f32.gmra.mxu0 %v1093
        %v1185 = vpop.f32.mrf.mxu0
        %v1186 = vadd.f32 %v1084, %v1185
        %1187 = vmatmul.f32.gmra.mxu0 %v1096
        %v1188 = vpop.f32.mrf.mxu0
        %v1189 = vadd.f32 %v1089, %v1188
        %1190 = vdwg.mxu0
        %1191 = vmatpush.msra.mxu0 0.0
        %1192 = vmatpush.msra.mxu0 0.0
        %1193 = vmatpush.msra.mxu0 0.0
        %1194 = vmatpush.msra.mxu0 0.0
        %1195 = vmatpush.msra.mxu0 0.0
        %1196 = vmatpush.msra.mxu0 0.0
        %1197 = vmatpush.msra.mxu0 0.0
        %1198 = vmatpush.msra.mxu0 0.0
        %1199 = vmatpush.msra.mxu0 0.0
        %1200 = vmatpush.msra.mxu0 0.0
        %1201 = vmatpush.msra.mxu0 0.0
        %1202 = vmatpush.msra.mxu0 0.0
        %1203 = vmatpush.msra.mxu0 %v1108
        %1204 = vmatpush.msra.mxu0 %v1076
        %1205 = vmatpush.msra.mxu0 %v1058
        %1206 = vmatpush.msra.mxu0 %v1031
        %1207 = vmatmul.f32.gmra.mxu0 %v1093
        %v1208 = vpop.f32.mrf.mxu0
        %v1209 = vadd.f32 %v1084, %v1208
        %1210 = vmatmul.f32.gmra.mxu0 %v1096
        %v1211 = vpop.f32.mrf.mxu0
        %v1212 = vadd.f32 %v1089, %v1211
        %1213 = vdwg.mxu0
        %1214 = vmatpush.msra.mxu0 0.0
        %1215 = vmatpush.msra.mxu0 0.0
        %1216 = vmatpush.msra.mxu0 0.0
        %1217 = vmatpush.msra.mxu0 0.0
        %1218 = vmatpush.msra.mxu0 0.0
        %1219 = vmatpush.msra.mxu0 0.0
        %1220 = vmatpush.msra.mxu0 0.0
        %1221 = vmatpush.msra.mxu0 0.0
        %1222 = vmatpush.msra.mxu0 0.0
        %1223 = vmatpush.msra.mxu0 0.0
        %1224 = vmatpush.msra.mxu0 0.0
        %1225 = vmatpush.msra.mxu0 0.0
        %1226 = vmatpush.msra.mxu0 %v1111
        %1227 = vmatpush.msra.mxu0 %v1077
        %1228 = vmatpush.msra.mxu0 %v1059
        %1229 = vmatpush.msra.mxu0 %v1032
        %1230 = vmatmul.f32.gmra.mxu0 %v1093
        %v1231 = vpop.f32.mrf.mxu0
        %v1232 = vadd.f32 %v1084, %v1231
        %1233 = vmatmul.f32.gmra.mxu0 %v1096
        %v1234 = vpop.f32.mrf.mxu0
        %v1235 = vadd.f32 %v1089, %v1234
        %1236 = vdwg.mxu0
        %1237 = vmatpush.msra.mxu0 0.0
        %1238 = vmatpush.msra.mxu0 0.0
        %1239 = vmatpush.msra.mxu0 0.0
        %1240 = vmatpush.msra.mxu0 0.0
        %1241 = vmatpush.msra.mxu0 0.0
        %1242 = vmatpush.msra.mxu0 0.0
        %1243 = vmatpush.msra.mxu0 0.0
        %1244 = vmatpush.msra.mxu0 0.0
        %1245 = vmatpush.msra.mxu0 0.0
        %1246 = vmatpush.msra.mxu0 0.0
        %1247 = vmatpush.msra.mxu0 0.0
        %1248 = vmatpush.msra.mxu0 0.0
        %1249 = vmatpush.msra.mxu0 %v1114
        %1250 = vmatpush.msra.mxu0 %v1078
        %1251 = vmatpush.msra.mxu0 %v1060
        %1252 = vmatpush.msra.mxu0 %v1033
        %1253 = vmatmul.f32.gmra.mxu0 %v1093
        %v1254 = vpop.f32.mrf.mxu0
        %v1255 = vadd.f32 %v1084, %v1254
        %1256 = vmatmul.f32.gmra.mxu0 %v1096
        %v1257 = vpop.f32.mrf.mxu0
        %v1258 = vadd.f32 %v1089, %v1257
        %1259 = vdwg.mxu0
        %1260 = vmatpush.msra.mxu0 0.0
        %1261 = vmatpush.msra.mxu0 0.0
        %1262 = vmatpush.msra.mxu0 0.0
        %1263 = vmatpush.msra.mxu0 0.0
        %1264 = vmatpush.msra.mxu0 0.0
        %1265 = vmatpush.msra.mxu0 0.0
        %1266 = vmatpush.msra.mxu0 0.0
        %1267 = vmatpush.msra.mxu0 0.0
        %1268 = vmatpush.msra.mxu0 0.0
        %1269 = vmatpush.msra.mxu0 0.0
        %1270 = vmatpush.msra.mxu0 0.0
        %1271 = vmatpush.msra.mxu0 0.0
        %1272 = vmatpush.msra.mxu0 %v1117
        %1273 = vmatpush.msra.mxu0 %v1079
        %1274 = vmatpush.msra.mxu0 %v1061
        %1275 = vmatpush.msra.mxu0 %v1034
        %1276 = vmatmul.f32.gmra.mxu0 %v1093
        %v1277 = vpop.f32.mrf.mxu0
        %v1278 = vadd.f32 %v1084, %v1277
        %1279 = vmatmul.f32.gmra.mxu0 %v1096
        %v1280 = vpop.f32.mrf.mxu0
        %v1281 = vadd.f32 %v1089, %v1280
        %1282 = vdwg.mxu0
        %1283 = vmatpush.msra.mxu0 0.0
        %1284 = vmatpush.msra.mxu0 0.0
        %1285 = vmatpush.msra.mxu0 0.0
        %1286 = vmatpush.msra.mxu0 0.0
        %1287 = vmatpush.msra.mxu0 0.0
        %1288 = vmatpush.msra.mxu0 0.0
        %1289 = vmatpush.msra.mxu0 0.0
        %1290 = vmatpush.msra.mxu0 0.0
        %1291 = vmatpush.msra.mxu0 0.0
        %1292 = vmatpush.msra.mxu0 0.0
        %1293 = vmatpush.msra.mxu0 0.0
        %1294 = vmatpush.msra.mxu0 0.0
        %1295 = vmatpush.msra.mxu0 %v1120
        %1296 = vmatpush.msra.mxu0 %v1080
        %1297 = vmatpush.msra.mxu0 %v1062
        %1298 = vmatpush.msra.mxu0 %v1035
        %1299 = vmatmul.f32.gmra.mxu0 %v1093
        %v1300 = vpop.f32.mrf.mxu0
        %v1301 = vadd.f32 %v1084, %v1300
        %1302 = vmatmul.f32.gmra.mxu0 %v1096
        %v1303 = vpop.f32.mrf.mxu0
        %v1304 = vadd.f32 %v1089, %v1303
        %1305 = vdwg.mxu0
        %v1306 = vsub.f32 0.0, %v1140
        %v1307 = vsub.f32 0.0, %v1163
        %v1308 = vsub.f32 0.0, %v1186
        %v1309 = vsub.f32 0.0, %v1209
        %v1310 = vsub.f32 0.0, %v1232
        %v1311 = vsub.f32 0.0, %v1255
        %v1312 = vsub.f32 0.0, %v1278
        %v1313 = vsub.f32 0.0, %v1301
        %v1314 = vsub.f32 0.0, %v1143
        %v1315 = vsub.f32 0.0, %v1166
        %v1316 = vsub.f32 0.0, %v1189
        %v1317 = vsub.f32 0.0, %v1212
        %v1318 = vsub.f32 0.0, %v1235
        %v1319 = vsub.f32 0.0, %v1258
        %v1320 = vsub.f32 0.0, %v1281
        %v1321 = vsub.f32 0.0, %v1304
        %v1322 = vmul.f32 %v1306, 1.442695
        %v1323 = vpow.pop %v1322
        %v1324 = vmul.f32 %v1307, 1.442695
        %v1325 = vpow.pop %v1324
        %v1326 = vmul.f32 %v1308, 1.442695
        %v1327 = vpow.pop %v1326
        %v1328 = vmul.f32 %v1309, 1.442695
        %v1329 = vpow.pop %v1328
        %v1330 = vmul.f32 %v1310, 1.442695
        %v1331 = vpow.pop %v1330
        %v1332 = vmul.f32 %v1311, 1.442695
        %v1333 = vpow.pop %v1332
        %v1334 = vmul.f32 %v1312, 1.442695
        %v1335 = vpow.pop %v1334
        %v1336 = vmul.f32 %v1313, 1.442695
        %v1337 = vpow.pop %v1336
        %v1338 = vmul.f32 %v1314, 1.442695
        %v1339 = vpow.pop %v1338
        %v1340 = vmul.f32 %v1315, 1.442695
        %v1341 = vpow.pop %v1340
        %v1342 = vmul.f32 %v1316, 1.442695
        %v1343 = vpow.pop %v1342
        %v1344 = vmul.f32 %v1317, 1.442695
        %v1345 = vpow.pop %v1344
        %v1346 = vmul.f32 %v1318, 1.442695
        %v1347 = vpow.pop %v1346
        %v1348 = vmul.f32 %v1319, 1.442695
        %v1349 = vpow.pop %v1348
        %v1350 = vmul.f32 %v1320, 1.442695
        %v1351 = vpow.pop %v1350
        %v1352 = vmul.f32 %v1321, 1.442695
        %v1353 = vpow.pop %v1352
        %v1354 = vadd.f32 %v1323, 1.0
        %v1355 = vadd.f32 %v1325, 1.0
        %v1356 = vadd.f32 %v1327, 1.0
        %v1357 = vadd.f32 %v1329, 1.0
        %v1358 = vadd.f32 %v1331, 1.0
        %v1359 = vadd.f32 %v1333, 1.0
        %v1360 = vadd.f32 %v1335, 1.0
        %v1361 = vadd.f32 %v1337, 1.0
        %v1362 = vadd.f32 %v1339, 1.0
        %v1363 = vadd.f32 %v1341, 1.0
        %v1364 = vadd.f32 %v1343, 1.0
        %v1365 = vadd.f32 %v1345, 1.0
        %v1366 = vadd.f32 %v1347, 1.0
        %v1367 = vadd.f32 %v1349, 1.0
        %v1368 = vadd.f32 %v1351, 1.0
        %v1369 = vadd.f32 %v1353, 1.0
        %v1370 = vrcp.pop %v1354
        %v1371 = vmul.f32 %v1354, %v1370
        %v1372 = vsub.f32 1.0, %v1371
        %v1373 = vmul.f32 %v1370, %v1372
        %v1374 = vadd.f32 %v1370, %v1373
        %vm1375 = vweird.f32 %v1354
        %vm1376 = vweird.f32 %v1370
        %vm1377 = vmor %vm1375, %vm1376
        %v1378 = vsel %vm1377, %v1370, %v1374
        %v1379 = vand.u32 2147483647, %v1354
        %vm1380 = vcmp.eq.f32.partialorder %v1379, 8.507059e+37
        %v1381 = vand.u32 %v1354, 2147483648
        %v1382 = vor.u32 1.1754944e-38, %v1381
        %v1383 = vsel %vm1380, %v1382, %v1378
        %v1384 = vmul.f32 1.0, %v1383
        %v1385 = vrcp.pop %v1355
        %v1386 = vmul.f32 %v1355, %v1385
        %v1387 = vsub.f32 1.0, %v1386
        %v1388 = vmul.f32 %v1385, %v1387
        %v1389 = vadd.f32 %v1385, %v1388
        %vm1390 = vweird.f32 %v1355
        %vm1391 = vweird.f32 %v1385
        %vm1392 = vmor %vm1390, %vm1391
        %v1393 = vsel %vm1392, %v1385, %v1389
        %v1394 = vand.u32 2147483647, %v1355
        %vm1395 = vcmp.eq.f32.partialorder %v1394, 8.507059e+37
        %v1396 = vand.u32 %v1355, 2147483648
        %v1397 = vor.u32 1.1754944e-38, %v1396
        %v1398 = vsel %vm1395, %v1397, %v1393
        %v1399 = vmul.f32 1.0, %v1398
        %v1400 = vrcp.pop %v1356
        %v1401 = vmul.f32 %v1356, %v1400
        %v1402 = vsub.f32 1.0, %v1401
        %v1403 = vmul.f32 %v1400, %v1402
        %v1404 = vadd.f32 %v1400, %v1403
        %vm1405 = vweird.f32 %v1356
        %vm1406 = vweird.f32 %v1400
        %vm1407 = vmor %vm1405, %vm1406
        %v1408 = vsel %vm1407, %v1400, %v1404
        %v1409 = vand.u32 2147483647, %v1356
        %vm1410 = vcmp.eq.f32.partialorder %v1409, 8.507059e+37
        %v1411 = vand.u32 %v1356, 2147483648
        %v1412 = vor.u32 1.1754944e-38, %v1411
        %v1413 = vsel %vm1410, %v1412, %v1408
        %v1414 = vmul.f32 1.0, %v1413
        %v1415 = vrcp.pop %v1357
        %v1416 = vmul.f32 %v1357, %v1415
        %v1417 = vsub.f32 1.0, %v1416
        %v1418 = vmul.f32 %v1415, %v1417
        %v1419 = vadd.f32 %v1415, %v1418
        %vm1420 = vweird.f32 %v1357
        %vm1421 = vweird.f32 %v1415
        %vm1422 = vmor %vm1420, %vm1421
        %v1423 = vsel %vm1422, %v1415, %v1419
        %v1424 = vand.u32 2147483647, %v1357
        %vm1425 = vcmp.eq.f32.partialorder %v1424, 8.507059e+37
        %v1426 = vand.u32 %v1357, 2147483648
        %v1427 = vor.u32 1.1754944e-38, %v1426
        %v1428 = vsel %vm1425, %v1427, %v1423
        %v1429 = vmul.f32 1.0, %v1428
        %v1430 = vrcp.pop %v1358
        %v1431 = vmul.f32 %v1358, %v1430
        %v1432 = vsub.f32 1.0, %v1431
        %v1433 = vmul.f32 %v1430, %v1432
        %v1434 = vadd.f32 %v1430, %v1433
        %vm1435 = vweird.f32 %v1358
        %vm1436 = vweird.f32 %v1430
        %vm1437 = vmor %vm1435, %vm1436
        %v1438 = vsel %vm1437, %v1430, %v1434
        %v1439 = vand.u32 2147483647, %v1358
        %vm1440 = vcmp.eq.f32.partialorder %v1439, 8.507059e+37
        %v1441 = vand.u32 %v1358, 2147483648
        %v1442 = vor.u32 1.1754944e-38, %v1441
        %v1443 = vsel %vm1440, %v1442, %v1438
        %v1444 = vmul.f32 1.0, %v1443
        %v1445 = vrcp.pop %v1359
        %v1446 = vmul.f32 %v1359, %v1445
        %v1447 = vsub.f32 1.0, %v1446
        %v1448 = vmul.f32 %v1445, %v1447
        %v1449 = vadd.f32 %v1445, %v1448
        %vm1450 = vweird.f32 %v1359
        %vm1451 = vweird.f32 %v1445
        %vm1452 = vmor %vm1450, %vm1451
        %v1453 = vsel %vm1452, %v1445, %v1449
        %v1454 = vand.u32 2147483647, %v1359
        %vm1455 = vcmp.eq.f32.partialorder %v1454, 8.507059e+37
        %v1456 = vand.u32 %v1359, 2147483648
        %v1457 = vor.u32 1.1754944e-38, %v1456
        %v1458 = vsel %vm1455, %v1457, %v1453
        %v1459 = vmul.f32 1.0, %v1458
        %v1460 = vrcp.pop %v1360
        %v1461 = vmul.f32 %v1360, %v1460
        %v1462 = vsub.f32 1.0, %v1461
        %v1463 = vmul.f32 %v1460, %v1462
        %v1464 = vadd.f32 %v1460, %v1463
        %vm1465 = vweird.f32 %v1360
        %vm1466 = vweird.f32 %v1460
        %vm1467 = vmor %vm1465, %vm1466
        %v1468 = vsel %vm1467, %v1460, %v1464
        %v1469 = vand.u32 2147483647, %v1360
        %vm1470 = vcmp.eq.f32.partialorder %v1469, 8.507059e+37
        %v1471 = vand.u32 %v1360, 2147483648
        %v1472 = vor.u32 1.1754944e-38, %v1471
        %v1473 = vsel %vm1470, %v1472, %v1468
        %v1474 = vmul.f32 1.0, %v1473
        %v1475 = vrcp.pop %v1361
        %v1476 = vmul.f32 %v1361, %v1475
        %v1477 = vsub.f32 1.0, %v1476
        %v1478 = vmul.f32 %v1475, %v1477
        %v1479 = vadd.f32 %v1475, %v1478
        %vm1480 = vweird.f32 %v1361
        %vm1481 = vweird.f32 %v1475
        %vm1482 = vmor %vm1480, %vm1481
        %v1483 = vsel %vm1482, %v1475, %v1479
        %v1484 = vand.u32 2147483647, %v1361
        %vm1485 = vcmp.eq.f32.partialorder %v1484, 8.507059e+37
        %v1486 = vand.u32 %v1361, 2147483648
        %v1487 = vor.u32 1.1754944e-38, %v1486
        %v1488 = vsel %vm1485, %v1487, %v1483
        %v1489 = vmul.f32 1.0, %v1488
        %v1490 = vrcp.pop %v1362
        %v1491 = vmul.f32 %v1362, %v1490
        %v1492 = vsub.f32 1.0, %v1491
        %v1493 = vmul.f32 %v1490, %v1492
        %v1494 = vadd.f32 %v1490, %v1493
        %vm1495 = vweird.f32 %v1362
        %vm1496 = vweird.f32 %v1490
        %vm1497 = vmor %vm1495, %vm1496
        %v1498 = vsel %vm1497, %v1490, %v1494
        %v1499 = vand.u32 2147483647, %v1362
        %vm1500 = vcmp.eq.f32.partialorder %v1499, 8.507059e+37
        %v1501 = vand.u32 %v1362, 2147483648
        %v1502 = vor.u32 1.1754944e-38, %v1501
        %v1503 = vsel %vm1500, %v1502, %v1498
        %v1504 = vmul.f32 1.0, %v1503
        %v1505 = vrcp.pop %v1363
        %v1506 = vmul.f32 %v1363, %v1505
        %v1507 = vsub.f32 1.0, %v1506
        %v1508 = vmul.f32 %v1505, %v1507
        %v1509 = vadd.f32 %v1505, %v1508
        %vm1510 = vweird.f32 %v1363
        %vm1511 = vweird.f32 %v1505
        %vm1512 = vmor %vm1510, %vm1511
        %v1513 = vsel %vm1512, %v1505, %v1509
        %v1514 = vand.u32 2147483647, %v1363
        %vm1515 = vcmp.eq.f32.partialorder %v1514, 8.507059e+37
        %v1516 = vand.u32 %v1363, 2147483648
        %v1517 = vor.u32 1.1754944e-38, %v1516
        %v1518 = vsel %vm1515, %v1517, %v1513
        %v1519 = vmul.f32 1.0, %v1518
        %v1520 = vrcp.pop %v1364
        %v1521 = vmul.f32 %v1364, %v1520
        %v1522 = vsub.f32 1.0, %v1521
        %v1523 = vmul.f32 %v1520, %v1522
        %v1524 = vadd.f32 %v1520, %v1523
        %vm1525 = vweird.f32 %v1364
        %vm1526 = vweird.f32 %v1520
        %vm1527 = vmor %vm1525, %vm1526
        %v1528 = vsel %vm1527, %v1520, %v1524
        %v1529 = vand.u32 2147483647, %v1364
        %vm1530 = vcmp.eq.f32.partialorder %v1529, 8.507059e+37
        %v1531 = vand.u32 %v1364, 2147483648
        %v1532 = vor.u32 1.1754944e-38, %v1531
        %v1533 = vsel %vm1530, %v1532, %v1528
        %v1534 = vmul.f32 1.0, %v1533
        %v1535 = vrcp.pop %v1365
        %v1536 = vmul.f32 %v1365, %v1535
        %v1537 = vsub.f32 1.0, %v1536
        %v1538 = vmul.f32 %v1535, %v1537
        %v1539 = vadd.f32 %v1535, %v1538
        %vm1540 = vweird.f32 %v1365
        %vm1541 = vweird.f32 %v1535
        %vm1542 = vmor %vm1540, %vm1541
        %v1543 = vsel %vm1542, %v1535, %v1539
        %v1544 = vand.u32 2147483647, %v1365
        %vm1545 = vcmp.eq.f32.partialorder %v1544, 8.507059e+37
        %v1546 = vand.u32 %v1365, 2147483648
        %v1547 = vor.u32 1.1754944e-38, %v1546
        %v1548 = vsel %vm1545, %v1547, %v1543
        %v1549 = vmul.f32 1.0, %v1548
        %v1550 = vrcp.pop %v1366
        %v1551 = vmul.f32 %v1366, %v1550
        %v1552 = vsub.f32 1.0, %v1551
        %v1553 = vmul.f32 %v1550, %v1552
        %v1554 = vadd.f32 %v1550, %v1553
        %vm1555 = vweird.f32 %v1366
        %vm1556 = vweird.f32 %v1550
        %vm1557 = vmor %vm1555, %vm1556
        %v1558 = vsel %vm1557, %v1550, %v1554
        %v1559 = vand.u32 2147483647, %v1366
        %vm1560 = vcmp.eq.f32.partialorder %v1559, 8.507059e+37
        %v1561 = vand.u32 %v1366, 2147483648
        %v1562 = vor.u32 1.1754944e-38, %v1561
        %v1563 = vsel %vm1560, %v1562, %v1558
        %v1564 = vmul.f32 1.0, %v1563
        %v1565 = vrcp.pop %v1367
        %v1566 = vmul.f32 %v1367, %v1565
        %v1567 = vsub.f32 1.0, %v1566
        %v1568 = vmul.f32 %v1565, %v1567
        %v1569 = vadd.f32 %v1565, %v1568
        %vm1570 = vweird.f32 %v1367
        %vm1571 = vweird.f32 %v1565
        %vm1572 = vmor %vm1570, %vm1571
        %v1573 = vsel %vm1572, %v1565, %v1569
        %v1574 = vand.u32 2147483647, %v1367
        %vm1575 = vcmp.eq.f32.partialorder %v1574, 8.507059e+37
        %v1576 = vand.u32 %v1367, 2147483648
        %v1577 = vor.u32 1.1754944e-38, %v1576
        %v1578 = vsel %vm1575, %v1577, %v1573
        %v1579 = vmul.f32 1.0, %v1578
        %v1580 = vrcp.pop %v1368
        %v1581 = vmul.f32 %v1368, %v1580
        %v1582 = vsub.f32 1.0, %v1581
        %v1583 = vmul.f32 %v1580, %v1582
        %v1584 = vadd.f32 %v1580, %v1583
        %vm1585 = vweird.f32 %v1368
        %vm1586 = vweird.f32 %v1580
        %vm1587 = vmor %vm1585, %vm1586
        %v1588 = vsel %vm1587, %v1580, %v1584
        %v1589 = vand.u32 2147483647, %v1368
        %vm1590 = vcmp.eq.f32.partialorder %v1589, 8.507059e+37
        %v1591 = vand.u32 %v1368, 2147483648
        %v1592 = vor.u32 1.1754944e-38, %v1591
        %v1593 = vsel %vm1590, %v1592, %v1588
        %v1594 = vmul.f32 1.0, %v1593
        %v1595 = vrcp.pop %v1369
        %v1596 = vmul.f32 %v1369, %v1595
        %v1597 = vsub.f32 1.0, %v1596
        %v1598 = vmul.f32 %v1595, %v1597
        %v1599 = vadd.f32 %v1595, %v1598
        %vm1600 = vweird.f32 %v1369
        %vm1601 = vweird.f32 %v1595
        %vm1602 = vmor %vm1600, %vm1601
        %v1603 = vsel %vm1602, %v1595, %v1599
        %v1604 = vand.u32 2147483647, %v1369
        %vm1605 = vcmp.eq.f32.partialorder %v1604, 8.507059e+37
        %v1606 = vand.u32 %v1369, 2147483648
        %v1607 = vor.u32 1.1754944e-38, %v1606
        %v1608 = vsel %vm1605, %v1607, %v1603
        %v1609 = vmul.f32 1.0, %v1608
        %s1610 = scalar_lea.vmem %s307, 32
        %v1611 = vld [vmem:[%s1610] sm:$0x77]
        %v1612 = vld [vmem:[%s1610 + $0x8] sm:$0x77]
        %v1613 = vld [vmem:[%s1610 + $0x10] sm:$0x77]
        %v1614 = vld [vmem:[%s1610 + $0x18] sm:$0x77]
        %1619 = vst [vmem:[#allocation1] ss:$2 sm:$0xff] %v1611
        %s1620 = scalar_lea.vmem [#allocation1], 16
        %1621 = vst [vmem:[%s1620] ss:$2 sm:$0xff] %v1612
        %s1622 = scalar_lea.vmem [#allocation1], 32
        %1623 = vst [vmem:[%s1622] ss:$2 sm:$0xff] %v1613
        %s1624 = scalar_lea.vmem [#allocation1], 48
        %1625 = vst [vmem:[%s1624] ss:$2 sm:$0xff] %v1614
        %v1626 = vld.sshfl [vmem:[#allocation1] sm:$0xff pattern:$0x75316420]
        %v1627 = vld.sshfl [vmem:[#allocation1 + $0x8] sm:$0xff pattern:$0x75316420]
        %v1628 = vld.sshfl [vmem:[#allocation1 + $0x10] sm:$0xff pattern:$0x75316420]
        %v1629 = vld.sshfl [vmem:[#allocation1 + $0x18] sm:$0xff pattern:$0x75316420]
        %v1630 = vld.sshfl [vmem:[#allocation1 + $0x20] sm:$0xff pattern:$0x75316420]
        %v1631 = vld.sshfl [vmem:[#allocation1 + $0x28] sm:$0xff pattern:$0x75316420]
        %v1632 = vld.sshfl [vmem:[#allocation1 + $0x30] sm:$0xff pattern:$0x75316420]
        %v1633 = vld.sshfl [vmem:[#allocation1 + $0x38] sm:$0xff pattern:$0x75316420]
        %1642 = vrot.lane.b32.xlu0 %v1626, 33
        %v1643 = vpop.permute.xlu0 %1642
        %1644 = vrot.lane.b32.xlu0 %v1627, 33
        %v1645 = vpop.permute.xlu0 %1644
        %1646 = vrot.lane.b32.xlu0 %v1628, 33
        %v1647 = vpop.permute.xlu0 %1646
        %1648 = vrot.lane.b32.xlu0 %v1629, 33
        %v1649 = vpop.permute.xlu0 %1648
        %1650 = vrot.lane.b32.xlu0 %v1630, 33
        %v1651 = vpop.permute.xlu0 %1650
        %1652 = vrot.lane.b32.xlu0 %v1631, 33
        %v1653 = vpop.permute.xlu0 %1652
        %1654 = vrot.lane.b32.xlu0 %v1632, 33
        %v1655 = vpop.permute.xlu0 %1654
        %1656 = vrot.lane.b32.xlu0 %v1633, 33
        %v1657 = vpop.permute.xlu0 %1656
        %v1658 = vsel %vm441, %v1655, %v1657
        %v1659 = vsel %vm441, %v1653, %v1655
        %v1660 = vsel %vm441, %v1651, %v1653
        %v1661 = vsel %vm441, %v1649, %v1651
        %v1662 = vsel %vm441, %v1647, %v1649
        %v1663 = vsel %vm441, %v1645, %v1647
        %v1664 = vsel %vm441, %v1643, %v1645
        %v1665 = vsel %vm441, %v1657, %v1643
        %v1666 = vsel %vm346, %v1665, 0.0
        %v1667 = vsel %vm347, %v1664, 0.0
        %v1668 = vsel %vm348, %v1663, 0.0
        %v1669 = vsel %vm349, %v1662, 0.0
        %v1670 = vsel %vm350, %v1661, 0.0
        %v1671 = vsel %vm351, %v1660, 0.0
        %v1672 = vsel %vm352, %v1659, 0.0
        %v1673 = vsel %vm353, %v1658, 0.0
        %1674 = vst [vmem:[#allocation1] ss:$2 sm:$0xff] %v1611
        %s1675 = scalar_lea.vmem [#allocation1], 16
        %1676 = vst [vmem:[%s1675] ss:$2 sm:$0xff] %v1612
        %s1677 = scalar_lea.vmem [#allocation1], 32
        %1678 = vst [vmem:[%s1677] ss:$2 sm:$0xff] %v1613
        %s1679 = scalar_lea.vmem [#allocation1], 48
        %1680 = vst [vmem:[%s1679] ss:$2 sm:$0xff] %v1614
        %v1681 = vld.sshfl [vmem:[#allocation1] sm:$0xff pattern:$0x75316420]
        %v1682 = vld.sshfl [vmem:[#allocation1 + $0x8] sm:$0xff pattern:$0x75316420]
        %v1683 = vld.sshfl [vmem:[#allocation1 + $0x10] sm:$0xff pattern:$0x75316420]
        %v1684 = vld.sshfl [vmem:[#allocation1 + $0x18] sm:$0xff pattern:$0x75316420]
        %v1685 = vld.sshfl [vmem:[#allocation1 + $0x20] sm:$0xff pattern:$0x75316420]
        %v1686 = vld.sshfl [vmem:[#allocation1 + $0x28] sm:$0xff pattern:$0x75316420]
        %v1687 = vld.sshfl [vmem:[#allocation1 + $0x30] sm:$0xff pattern:$0x75316420]
        %v1688 = vld.sshfl [vmem:[#allocation1 + $0x38] sm:$0xff pattern:$0x75316420]
        %1697 = vrot.lane.b32.xlu0 %v1681, 32
        %v1698 = vpop.permute.xlu0 %1697
        %1699 = vrot.lane.b32.xlu0 %v1682, 32
        %v1700 = vpop.permute.xlu0 %1699
        %1701 = vrot.lane.b32.xlu0 %v1683, 32
        %v1702 = vpop.permute.xlu0 %1701
        %1703 = vrot.lane.b32.xlu0 %v1684, 32
        %v1704 = vpop.permute.xlu0 %1703
        %1705 = vrot.lane.b32.xlu0 %v1685, 32
        %v1706 = vpop.permute.xlu0 %1705
        %1707 = vrot.lane.b32.xlu0 %v1686, 32
        %v1708 = vpop.permute.xlu0 %1707
        %1709 = vrot.lane.b32.xlu0 %v1687, 32
        %v1710 = vpop.permute.xlu0 %1709
        %1711 = vrot.lane.b32.xlu0 %v1688, 32
        %v1712 = vpop.permute.xlu0 %1711
        %v1713 = vsel %vm497, %v1710, %v1712
        %v1714 = vsel %vm497, %v1708, %v1710
        %v1715 = vsel %vm497, %v1706, %v1708
        %v1716 = vsel %vm497, %v1704, %v1706
        %v1717 = vsel %vm497, %v1702, %v1704
        %v1718 = vsel %vm497, %v1700, %v1702
        %v1719 = vsel %vm497, %v1698, %v1700
        %v1720 = vsel %vm497, %v1712, %v1698
        %v1721 = vsel %vm330, %v1720, 0.0
        %v1722 = vsel %vm331, %v1719, 0.0
        %v1723 = vsel %vm332, %v1718, 0.0
        %v1724 = vsel %vm333, %v1717, 0.0
        %v1725 = vsel %vm334, %v1716, 0.0
        %v1726 = vsel %vm335, %v1715, 0.0
        %v1727 = vsel %vm336, %v1714, 0.0
        %v1728 = vsel %vm337, %v1713, 0.0
        %1729 = vst [vmem:[#allocation1] ss:$2 sm:$0xff] %v1611
        %s1730 = scalar_lea.vmem [#allocation1], 16
        %1731 = vst [vmem:[%s1730] ss:$2 sm:$0xff] %v1612
        %s1732 = scalar_lea.vmem [#allocation1], 32
        %1733 = vst [vmem:[%s1732] ss:$2 sm:$0xff] %v1613
        %s1734 = scalar_lea.vmem [#allocation1], 48
        %1735 = vst [vmem:[%s1734] ss:$2 sm:$0xff] %v1614
        %v1736 = vld.sshfl [vmem:[#allocation1] sm:$0xff pattern:$0x75316420]
        %v1737 = vld.sshfl [vmem:[#allocation1 + $0x8] sm:$0xff pattern:$0x75316420]
        %v1738 = vld.sshfl [vmem:[#allocation1 + $0x10] sm:$0xff pattern:$0x75316420]
        %v1739 = vld.sshfl [vmem:[#allocation1 + $0x18] sm:$0xff pattern:$0x75316420]
        %v1740 = vld.sshfl [vmem:[#allocation1 + $0x20] sm:$0xff pattern:$0x75316420]
        %v1741 = vld.sshfl [vmem:[#allocation1 + $0x28] sm:$0xff pattern:$0x75316420]
        %v1742 = vld.sshfl [vmem:[#allocation1 + $0x30] sm:$0xff pattern:$0x75316420]
        %v1743 = vld.sshfl [vmem:[#allocation1 + $0x38] sm:$0xff pattern:$0x75316420]
        %1752 = vrot.lane.b32.xlu0 %v1736, 31
        %v1753 = vpop.permute.xlu0 %1752
        %1754 = vrot.lane.b32.xlu0 %v1737, 31
        %v1755 = vpop.permute.xlu0 %1754
        %1756 = vrot.lane.b32.xlu0 %v1738, 31
        %v1757 = vpop.permute.xlu0 %1756
        %1758 = vrot.lane.b32.xlu0 %v1739, 31
        %v1759 = vpop.permute.xlu0 %1758
        %1760 = vrot.lane.b32.xlu0 %v1740, 31
        %v1761 = vpop.permute.xlu0 %1760
        %1762 = vrot.lane.b32.xlu0 %v1741, 31
        %v1763 = vpop.permute.xlu0 %1762
        %1764 = vrot.lane.b32.xlu0 %v1742, 31
        %v1765 = vpop.permute.xlu0 %1764
        %1766 = vrot.lane.b32.xlu0 %v1743, 31
        %v1767 = vpop.permute.xlu0 %1766
        %v1768 = vsel %vm553, %v1765, %v1767
        %v1769 = vsel %vm553, %v1763, %v1765
        %v1770 = vsel %vm553, %v1761, %v1763
        %v1771 = vsel %vm553, %v1759, %v1761
        %v1772 = vsel %vm553, %v1757, %v1759
        %v1773 = vsel %vm553, %v1755, %v1757
        %v1774 = vsel %vm553, %v1753, %v1755
        %v1775 = vsel %vm553, %v1767, %v1753
        %v1776 = vsel %vm362, %v1775, 0.0
        %v1777 = vsel %vm363, %v1774, 0.0
        %v1778 = vsel %vm364, %v1773, 0.0
        %v1779 = vsel %vm365, %v1772, 0.0
        %v1780 = vsel %vm366, %v1771, 0.0
        %v1781 = vsel %vm367, %v1770, 0.0
        %v1782 = vsel %vm368, %v1769, 0.0
        %v1783 = vsel %vm369, %v1768, 0.0
        %1784 = vst [vmem:[#allocation1] ss:$2 sm:$0xff] %v1611
        %s1785 = scalar_lea.vmem [#allocation1], 16
        %1786 = vst [vmem:[%s1785] ss:$2 sm:$0xff] %v1612
        %s1787 = scalar_lea.vmem [#allocation1], 32
        %1788 = vst [vmem:[%s1787] ss:$2 sm:$0xff] %v1613
        %s1789 = scalar_lea.vmem [#allocation1], 48
        %1790 = vst [vmem:[%s1789] ss:$2 sm:$0xff] %v1614
        %v1791 = vld.sshfl [vmem:[#allocation1] sm:$0xff pattern:$0x75316420]
        %v1792 = vld.sshfl [vmem:[#allocation1 + $0x8] sm:$0xff pattern:$0x75316420]
        %v1793 = vld.sshfl [vmem:[#allocation1 + $0x10] sm:$0xff pattern:$0x75316420]
        %v1794 = vld.sshfl [vmem:[#allocation1 + $0x18] sm:$0xff pattern:$0x75316420]
        %v1795 = vld.sshfl [vmem:[#allocation1 + $0x20] sm:$0xff pattern:$0x75316420]
        %v1796 = vld.sshfl [vmem:[#allocation1 + $0x28] sm:$0xff pattern:$0x75316420]
        %v1797 = vld.sshfl [vmem:[#allocation1 + $0x30] sm:$0xff pattern:$0x75316420]
        %v1798 = vld.sshfl [vmem:[#allocation1 + $0x38] sm:$0xff pattern:$0x75316420]
        %1807 = vrot.lane.b32.xlu0 %v1791, 1
        %v1808 = vpop.permute.xlu0 %1807
        %1809 = vrot.lane.b32.xlu0 %v1792, 1
        %v1810 = vpop.permute.xlu0 %1809
        %1811 = vrot.lane.b32.xlu0 %v1793, 1
        %v1812 = vpop.permute.xlu0 %1811
        %1813 = vrot.lane.b32.xlu0 %v1794, 1
        %v1814 = vpop.permute.xlu0 %1813
        %1815 = vrot.lane.b32.xlu0 %v1795, 1
        %v1816 = vpop.permute.xlu0 %1815
        %1817 = vrot.lane.b32.xlu0 %v1796, 1
        %v1818 = vpop.permute.xlu0 %1817
        %1819 = vrot.lane.b32.xlu0 %v1797, 1
        %v1820 = vpop.permute.xlu0 %1819
        %1821 = vrot.lane.b32.xlu0 %v1798, 1
        %v1822 = vpop.permute.xlu0 %1821
        %v1823 = vsel %vm609, %v1820, %v1822
        %v1824 = vsel %vm609, %v1818, %v1820
        %v1825 = vsel %vm609, %v1816, %v1818
        %v1826 = vsel %vm609, %v1814, %v1816
        %v1827 = vsel %vm609, %v1812, %v1814
        %v1828 = vsel %vm609, %v1810, %v1812
        %v1829 = vsel %vm609, %v1808, %v1810
        %v1830 = vsel %vm609, %v1822, %v1808
        %v1831 = vsel %vm338, %v1830, 0.0
        %v1832 = vsel %vm339, %v1829, 0.0
        %v1833 = vsel %vm340, %v1828, 0.0
        %v1834 = vsel %vm341, %v1827, 0.0
        %v1835 = vsel %vm342, %v1826, 0.0
        %v1836 = vsel %vm343, %v1825, 0.0
        %v1837 = vsel %vm344, %v1824, 0.0
        %v1838 = vsel %vm345, %v1823, 0.0
        %1839 = vst [vmem:[#allocation1] ss:$2 sm:$0xff] %v1611
        %s1840 = scalar_lea.vmem [#allocation1], 16
        %1841 = vst [vmem:[%s1840] ss:$2 sm:$0xff] %v1612
        %s1842 = scalar_lea.vmem [#allocation1], 32
        %1843 = vst [vmem:[%s1842] ss:$2 sm:$0xff] %v1613
        %s1844 = scalar_lea.vmem [#allocation1], 48
        %1845 = vst [vmem:[%s1844] ss:$2 sm:$0xff] %v1614
        %v1846 = vld.sshfl [vmem:[#allocation1] sm:$0xff pattern:$0x75316420]
        %v1847 = vld.sshfl [vmem:[#allocation1 + $0x8] sm:$0xff pattern:$0x75316420]
        %v1848 = vld.sshfl [vmem:[#allocation1 + $0x10] sm:$0xff pattern:$0x75316420]
        %v1849 = vld.sshfl [vmem:[#allocation1 + $0x18] sm:$0xff pattern:$0x75316420]
        %v1850 = vld.sshfl [vmem:[#allocation1 + $0x20] sm:$0xff pattern:$0x75316420]
        %v1851 = vld.sshfl [vmem:[#allocation1 + $0x28] sm:$0xff pattern:$0x75316420]
        %v1852 = vld.sshfl [vmem:[#allocation1 + $0x30] sm:$0xff pattern:$0x75316420]
        %v1853 = vld.sshfl [vmem:[#allocation1 + $0x38] sm:$0xff pattern:$0x75316420]
        %1862 = vrot.lane.b32.xlu0 %v1846, 127
        %v1863 = vpop.permute.xlu0 %1862
        %1864 = vrot.lane.b32.xlu0 %v1847, 127
        %v1865 = vpop.permute.xlu0 %1864
        %1866 = vrot.lane.b32.xlu0 %v1848, 127
        %v1867 = vpop.permute.xlu0 %1866
        %1868 = vrot.lane.b32.xlu0 %v1849, 127
        %v1869 = vpop.permute.xlu0 %1868
        %1870 = vrot.lane.b32.xlu0 %v1850, 127
        %v1871 = vpop.permute.xlu0 %1870
        %1872 = vrot.lane.b32.xlu0 %v1851, 127
        %v1873 = vpop.permute.xlu0 %1872
        %1874 = vrot.lane.b32.xlu0 %v1852, 127
        %v1875 = vpop.permute.xlu0 %1874
        %1876 = vrot.lane.b32.xlu0 %v1853, 127
        %v1877 = vpop.permute.xlu0 %1876
        %v1878 = vsel %vm665, %v1875, %v1877
        %v1879 = vsel %vm665, %v1873, %v1875
        %v1880 = vsel %vm665, %v1871, %v1873
        %v1881 = vsel %vm665, %v1869, %v1871
        %v1882 = vsel %vm665, %v1867, %v1869
        %v1883 = vsel %vm665, %v1865, %v1867
        %v1884 = vsel %vm665, %v1863, %v1865
        %v1885 = vsel %vm665, %v1877, %v1863
        %v1886 = vsel %vm354, %v1884, 0.0
        %v1887 = vsel %vm355, %v1883, 0.0
        %v1888 = vsel %vm356, %v1882, 0.0
        %v1889 = vsel %vm357, %v1881, 0.0
        %v1890 = vsel %vm358, %v1880, 0.0
        %v1891 = vsel %vm359, %v1879, 0.0
        %v1892 = vsel %vm360, %v1878, 0.0
        %v1893 = vsel %vm361, %v1885, 0.0
        %1894 = vst [vmem:[#allocation1] ss:$2 sm:$0xff] %v1611
        %s1895 = scalar_lea.vmem [#allocation1], 16
        %1896 = vst [vmem:[%s1895] ss:$2 sm:$0xff] %v1612
        %s1897 = scalar_lea.vmem [#allocation1], 32
        %1898 = vst [vmem:[%s1897] ss:$2 sm:$0xff] %v1613
        %s1899 = scalar_lea.vmem [#allocation1], 48
        %1900 = vst [vmem:[%s1899] ss:$2 sm:$0xff] %v1614
        %v1901 = vld.sshfl [vmem:[#allocation1] sm:$0xff pattern:$0x75316420]
        %v1902 = vld.sshfl [vmem:[#allocation1 + $0x8] sm:$0xff pattern:$0x75316420]
        %v1903 = vld.sshfl [vmem:[#allocation1 + $0x10] sm:$0xff pattern:$0x75316420]
        %v1904 = vld.sshfl [vmem:[#allocation1 + $0x18] sm:$0xff pattern:$0x75316420]
        %v1905 = vld.sshfl [vmem:[#allocation1 + $0x20] sm:$0xff pattern:$0x75316420]
        %v1906 = vld.sshfl [vmem:[#allocation1 + $0x28] sm:$0xff pattern:$0x75316420]
        %v1907 = vld.sshfl [vmem:[#allocation1 + $0x30] sm:$0xff pattern:$0x75316420]
        %v1908 = vld.sshfl [vmem:[#allocation1 + $0x38] sm:$0xff pattern:$0x75316420]
        %1917 = vrot.lane.b32.xlu0 %v1901, 97
        %v1918 = vpop.permute.xlu0 %1917
        %1919 = vrot.lane.b32.xlu0 %v1902, 97
        %v1920 = vpop.permute.xlu0 %1919
        %1921 = vrot.lane.b32.xlu0 %v1903, 97
        %v1922 = vpop.permute.xlu0 %1921
        %1923 = vrot.lane.b32.xlu0 %v1904, 97
        %v1924 = vpop.permute.xlu0 %1923
        %1925 = vrot.lane.b32.xlu0 %v1905, 97
        %v1926 = vpop.permute.xlu0 %1925
        %1927 = vrot.lane.b32.xlu0 %v1906, 97
        %v1928 = vpop.permute.xlu0 %1927
        %1929 = vrot.lane.b32.xlu0 %v1907, 97
        %v1930 = vpop.permute.xlu0 %1929
        %1931 = vrot.lane.b32.xlu0 %v1908, 97
        %v1932 = vpop.permute.xlu0 %1931
        %v1933 = vsel %vm721, %v1930, %v1932
        %v1934 = vsel %vm721, %v1928, %v1930
        %v1935 = vsel %vm721, %v1926, %v1928
        %v1936 = vsel %vm721, %v1924, %v1926
        %v1937 = vsel %vm721, %v1922, %v1924
        %v1938 = vsel %vm721, %v1920, %v1922
        %v1939 = vsel %vm721, %v1918, %v1920
        %v1940 = vsel %vm721, %v1932, %v1918
        %v1941 = vsel %vm378, %v1939, 0.0
        %v1942 = vsel %vm379, %v1938, 0.0
        %v1943 = vsel %vm380, %v1937, 0.0
        %v1944 = vsel %vm381, %v1936, 0.0
        %v1945 = vsel %vm382, %v1935, 0.0
        %v1946 = vsel %vm383, %v1934, 0.0
        %v1947 = vsel %vm384, %v1933, 0.0
        %v1948 = vsel %vm385, %v1940, 0.0
        %1949 = vst [vmem:[#allocation1] ss:$2 sm:$0xff] %v1611
        %s1950 = scalar_lea.vmem [#allocation1], 16
        %1951 = vst [vmem:[%s1950] ss:$2 sm:$0xff] %v1612
        %s1952 = scalar_lea.vmem [#allocation1], 32
        %1953 = vst [vmem:[%s1952] ss:$2 sm:$0xff] %v1613
        %s1954 = scalar_lea.vmem [#allocation1], 48
        %1955 = vst [vmem:[%s1954] ss:$2 sm:$0xff] %v1614
        %v1956 = vld.sshfl [vmem:[#allocation1] sm:$0xff pattern:$0x75316420]
        %v1957 = vld.sshfl [vmem:[#allocation1 + $0x8] sm:$0xff pattern:$0x75316420]
        %v1958 = vld.sshfl [vmem:[#allocation1 + $0x10] sm:$0xff pattern:$0x75316420]
        %v1959 = vld.sshfl [vmem:[#allocation1 + $0x18] sm:$0xff pattern:$0x75316420]
        %v1960 = vld.sshfl [vmem:[#allocation1 + $0x20] sm:$0xff pattern:$0x75316420]
        %v1961 = vld.sshfl [vmem:[#allocation1 + $0x28] sm:$0xff pattern:$0x75316420]
        %v1962 = vld.sshfl [vmem:[#allocation1 + $0x30] sm:$0xff pattern:$0x75316420]
        %v1963 = vld.sshfl [vmem:[#allocation1 + $0x38] sm:$0xff pattern:$0x75316420]
        %1972 = vrot.lane.b32.xlu0 %v1956, 96
        %v1973 = vpop.permute.xlu0 %1972
        %1974 = vrot.lane.b32.xlu0 %v1957, 96
        %v1975 = vpop.permute.xlu0 %1974
        %1976 = vrot.lane.b32.xlu0 %v1958, 96
        %v1977 = vpop.permute.xlu0 %1976
        %1978 = vrot.lane.b32.xlu0 %v1959, 96
        %v1979 = vpop.permute.xlu0 %1978
        %1980 = vrot.lane.b32.xlu0 %v1960, 96
        %v1981 = vpop.permute.xlu0 %1980
        %1982 = vrot.lane.b32.xlu0 %v1961, 96
        %v1983 = vpop.permute.xlu0 %1982
        %1984 = vrot.lane.b32.xlu0 %v1962, 96
        %v1985 = vpop.permute.xlu0 %1984
        %1986 = vrot.lane.b32.xlu0 %v1963, 96
        %v1987 = vpop.permute.xlu0 %1986
        %v1988 = vsel %vm777, %v1985, %v1987
        %v1989 = vsel %vm777, %v1983, %v1985
        %v1990 = vsel %vm777, %v1981, %v1983
        %v1991 = vsel %vm777, %v1979, %v1981
        %v1992 = vsel %vm777, %v1977, %v1979
        %v1993 = vsel %vm777, %v1975, %v1977
        %v1994 = vsel %vm777, %v1973, %v1975
        %v1995 = vsel %vm777, %v1987, %v1973
        %v1996 = vsel %vm370, %v1994, 0.0
        %v1997 = vsel %vm371, %v1993, 0.0
        %v1998 = vsel %vm372, %v1992, 0.0
        %v1999 = vsel %vm373, %v1991, 0.0
        %v2000 = vsel %vm374, %v1990, 0.0
        %v2001 = vsel %vm375, %v1989, 0.0
        %v2002 = vsel %vm376, %v1988, 0.0
        %v2003 = vsel %vm377, %v1995, 0.0
        %2004 = vst [vmem:[#allocation1] ss:$2 sm:$0xff] %v1611
        %s2005 = scalar_lea.vmem [#allocation1], 16
        %2006 = vst [vmem:[%s2005] ss:$2 sm:$0xff] %v1612
        %s2007 = scalar_lea.vmem [#allocation1], 32
        %2008 = vst [vmem:[%s2007] ss:$2 sm:$0xff] %v1613
        %s2009 = scalar_lea.vmem [#allocation1], 48
        %2010 = vst [vmem:[%s2009] ss:$2 sm:$0xff] %v1614
        %v2011 = vld.sshfl [vmem:[#allocation1] sm:$0xff pattern:$0x75316420]
        %v2012 = vld.sshfl [vmem:[#allocation1 + $0x8] sm:$0xff pattern:$0x75316420]
        %v2013 = vld.sshfl [vmem:[#allocation1 + $0x10] sm:$0xff pattern:$0x75316420]
        %v2014 = vld.sshfl [vmem:[#allocation1 + $0x18] sm:$0xff pattern:$0x75316420]
        %v2015 = vld.sshfl [vmem:[#allocation1 + $0x20] sm:$0xff pattern:$0x75316420]
        %v2016 = vld.sshfl [vmem:[#allocation1 + $0x28] sm:$0xff pattern:$0x75316420]
        %v2017 = vld.sshfl [vmem:[#allocation1 + $0x30] sm:$0xff pattern:$0x75316420]
        %v2018 = vld.sshfl [vmem:[#allocation1 + $0x38] sm:$0xff pattern:$0x75316420]
        %2027 = vrot.lane.b32.xlu0 %v2011, 95
        %v2028 = vpop.permute.xlu0 %2027
        %2029 = vrot.lane.b32.xlu0 %v2012, 95
        %v2030 = vpop.permute.xlu0 %2029
        %2031 = vrot.lane.b32.xlu0 %v2013, 95
        %v2032 = vpop.permute.xlu0 %2031
        %2033 = vrot.lane.b32.xlu0 %v2014, 95
        %v2034 = vpop.permute.xlu0 %2033
        %2035 = vrot.lane.b32.xlu0 %v2015, 95
        %v2036 = vpop.permute.xlu0 %2035
        %2037 = vrot.lane.b32.xlu0 %v2016, 95
        %v2038 = vpop.permute.xlu0 %2037
        %2039 = vrot.lane.b32.xlu0 %v2017, 95
        %v2040 = vpop.permute.xlu0 %2039
        %2041 = vrot.lane.b32.xlu0 %v2018, 95
        %v2042 = vpop.permute.xlu0 %2041
        %v2043 = vsel %vm833, %v2040, %v2042
        %v2044 = vsel %vm833, %v2038, %v2040
        %v2045 = vsel %vm833, %v2036, %v2038
        %v2046 = vsel %vm833, %v2034, %v2036
        %v2047 = vsel %vm833, %v2032, %v2034
        %v2048 = vsel %vm833, %v2030, %v2032
        %v2049 = vsel %vm833, %v2028, %v2030
        %v2050 = vsel %vm833, %v2042, %v2028
        %v2051 = vsel %vm386, %v2049, 0.0
        %v2052 = vsel %vm387, %v2048, 0.0
        %v2053 = vsel %vm388, %v2047, 0.0
        %v2054 = vsel %vm389, %v2046, 0.0
        %v2055 = vsel %vm390, %v2045, 0.0
        %v2056 = vsel %vm391, %v2044, 0.0
        %v2057 = vsel %vm392, %v2043, 0.0
        %v2058 = vsel %vm393, %v2050, 0.0
        %v2067 = vrot.slane %v1721, 5
        %v2068 = vrot.slane %v1722, 5
        %v2069 = vrot.slane %v1723, 5
        %v2070 = vrot.slane %v1724, 5
        %v2071 = vrot.slane %v1725, 5
        %v2072 = vrot.slane %v1726, 5
        %v2073 = vrot.slane %v1727, 5
        %v2074 = vrot.slane %v1728, 5
        %v2091 = vrot.slane %v1776, 2
        %v2092 = vrot.slane %v1777, 2
        %v2093 = vrot.slane %v1778, 2
        %v2094 = vrot.slane %v1779, 2
        %v2095 = vrot.slane %v1780, 2
        %v2096 = vrot.slane %v1781, 2
        %v2097 = vrot.slane %v1782, 2
        %v2098 = vrot.slane %v1783, 2
        %v2115 = vrot.slane %v1831, 7
        %v2116 = vrot.slane %v1832, 7
        %v2117 = vrot.slane %v1833, 7
        %v2118 = vrot.slane %v1834, 7
        %v2119 = vrot.slane %v1835, 7
        %v2120 = vrot.slane %v1836, 7
        %v2121 = vrot.slane %v1837, 7
        %v2122 = vrot.slane %v1838, 7
        %s2131 = scalar_lea.vmem [#allocation1], 1
        %2132 = vst [vmem:[%s2131] ss:$2 sm:$0xff] %v1611
        %s2133 = scalar_lea.vmem [#allocation1], 17
        %2134 = vst [vmem:[%s2133] ss:$2 sm:$0xff] %v1612
        %s2135 = scalar_lea.vmem [#allocation1], 33
        %2136 = vst [vmem:[%s2135] ss:$2 sm:$0xff] %v1613
        %s2137 = scalar_lea.vmem [#allocation1], 49
        %2138 = vst [vmem:[%s2137] ss:$2 sm:$0xff] %v1614
        %v2139 = vld.sshfl [vmem:[#allocation1] sm:$0xff pattern:$0x75316420]
        %v2140 = vld.sshfl [vmem:[#allocation1 + $0x8] sm:$0xff pattern:$0x75316420]
        %v2141 = vld.sshfl [vmem:[#allocation1 + $0x10] sm:$0xff pattern:$0x75316420]
        %v2142 = vld.sshfl [vmem:[#allocation1 + $0x18] sm:$0xff pattern:$0x75316420]
        %v2143 = vld.sshfl [vmem:[#allocation1 + $0x20] sm:$0xff pattern:$0x75316420]
        %v2144 = vld.sshfl [vmem:[#allocation1 + $0x28] sm:$0xff pattern:$0x75316420]
        %v2145 = vld.sshfl [vmem:[#allocation1 + $0x30] sm:$0xff pattern:$0x75316420]
        %v2146 = vld.sshfl [vmem:[#allocation1 + $0x38] sm:$0xff pattern:$0x75316420]
        %v2163 = vrot.slane %v1886, 1
        %v2164 = vrot.slane %v1887, 1
        %v2165 = vrot.slane %v1888, 1
        %v2166 = vrot.slane %v1889, 1
        %v2167 = vrot.slane %v1890, 1
        %v2168 = vrot.slane %v1891, 1
        %v2169 = vrot.slane %v1892, 1
        %v2170 = vrot.slane %v1893, 1
        %v2187 = vrot.slane %v1941, 6
        %v2188 = vrot.slane %v1942, 6
        %v2189 = vrot.slane %v1943, 6
        %v2190 = vrot.slane %v1944, 6
        %v2191 = vrot.slane %v1945, 6
        %v2192 = vrot.slane %v1946, 6
        %v2193 = vrot.slane %v1947, 6
        %v2194 = vrot.slane %v1948, 6
        %v2211 = vrot.slane %v1996, 3
        %v2212 = vrot.slane %v1997, 3
        %v2213 = vrot.slane %v1998, 3
        %v2214 = vrot.slane %v1999, 3
        %v2215 = vrot.slane %v2000, 3
        %v2216 = vrot.slane %v2001, 3
        %v2217 = vrot.slane %v2002, 3
        %v2218 = vrot.slane %v2003, 3
        %v2227 = vsel %vm1018, %v1666, %v2067
        %v2228 = vsel %vm1018, %v1667, %v2068
        %v2229 = vsel %vm1018, %v1668, %v2069
        %v2230 = vsel %vm1018, %v1669, %v2070
        %v2231 = vsel %vm1018, %v1670, %v2071
        %v2232 = vsel %vm1018, %v1671, %v2072
        %v2233 = vsel %vm1018, %v1672, %v2073
        %v2234 = vsel %vm1018, %v1673, %v2074
        %v2235 = vsel %vm1027, %v2227, %v2091
        %v2236 = vsel %vm1027, %v2228, %v2092
        %v2237 = vsel %vm1027, %v2229, %v2093
        %v2238 = vsel %vm1027, %v2230, %v2094
        %v2239 = vsel %vm1027, %v2231, %v2095
        %v2240 = vsel %vm1027, %v2232, %v2096
        %v2241 = vsel %vm1027, %v2233, %v2097
        %v2242 = vsel %vm1027, %v2234, %v2098
        %v2243 = vsel %vm1036, %v2091, %v2115
        %v2244 = vsel %vm1036, %v2092, %v2116
        %v2245 = vsel %vm1036, %v2093, %v2117
        %v2246 = vsel %vm1036, %v2094, %v2118
        %v2247 = vsel %vm1036, %v2095, %v2119
        %v2248 = vsel %vm1036, %v2096, %v2120
        %v2249 = vsel %vm1036, %v2097, %v2121
        %v2250 = vsel %vm1036, %v2098, %v2122
        %v2251 = vsel %vm1045, %v2243, %v2139
        %v2252 = vsel %vm1045, %v2244, %v2140
        %v2253 = vsel %vm1045, %v2245, %v2141
        %v2254 = vsel %vm1045, %v2246, %v2142
        %v2255 = vsel %vm1045, %v2247, %v2143
        %v2256 = vsel %vm1045, %v2248, %v2144
        %v2257 = vsel %vm1045, %v2249, %v2145
        %v2258 = vsel %vm1045, %v2250, %v2146
        %v2259 = vsel %vm1054, %v2251, %v2163
        %v2260 = vsel %vm1054, %v2252, %v2164
        %v2261 = vsel %vm1054, %v2253, %v2165
        %v2262 = vsel %vm1054, %v2254, %v2166
        %v2263 = vsel %vm1054, %v2255, %v2167
        %v2264 = vsel %vm1054, %v2256, %v2168
        %v2265 = vsel %vm1054, %v2257, %v2169
        %v2266 = vsel %vm1054, %v2258, %v2170
        %v2267 = vsel %vm1063, %v2163, %v2187
        %v2268 = vsel %vm1063, %v2164, %v2188
        %v2269 = vsel %vm1063, %v2165, %v2189
        %v2270 = vsel %vm1063, %v2166, %v2190
        %v2271 = vsel %vm1063, %v2167, %v2191
        %v2272 = vsel %vm1063, %v2168, %v2192
        %v2273 = vsel %vm1063, %v2169, %v2193
        %v2274 = vsel %vm1063, %v2170, %v2194
        %v2275 = vsel %vm1072, %v2267, %v2211
        %v2276 = vsel %vm1072, %v2268, %v2212
        %v2277 = vsel %vm1072, %v2269, %v2213
        %v2278 = vsel %vm1072, %v2270, %v2214
        %v2279 = vsel %vm1072, %v2271, %v2215
        %v2280 = vsel %vm1072, %v2272, %v2216
        %v2281 = vsel %vm1072, %v2273, %v2217
        %v2282 = vsel %vm1072, %v2274, %v2218
        %v2284 = vsel %vm1018, %v2051, 0
        %v2287 = vsel %vm1018, %v2052, 0
        %v2290 = vsel %vm1018, %v2053, 0
        %v2293 = vsel %vm1018, %v2054, 0
        %v2296 = vsel %vm1018, %v2055, 0
        %v2299 = vsel %vm1018, %v2056, 0
        %v2302 = vsel %vm1018, %v2057, 0
        %v2305 = vsel %vm1018, %v2058, 0
        %2307 = vmatpush.msra.mxu0 0.0
        %2308 = vmatpush.msra.mxu0 0.0
        %2309 = vmatpush.msra.mxu0 0.0
        %2310 = vmatpush.msra.mxu0 0.0
        %2311 = vmatpush.msra.mxu0 0.0
        %2312 = vmatpush.msra.mxu0 0.0
        %2313 = vmatpush.msra.mxu0 0.0
        %2314 = vmatpush.msra.mxu0 0.0
        %2315 = vmatpush.msra.mxu0 0.0
        %2316 = vmatpush.msra.mxu0 0.0
        %2317 = vmatpush.msra.mxu0 0.0
        %2318 = vmatpush.msra.mxu0 0.0
        %2319 = vmatpush.msra.mxu0 %v2284
        %2320 = vmatpush.msra.mxu0 %v2275
        %2321 = vmatpush.msra.mxu0 %v2259
        %2322 = vmatpush.msra.mxu0 %v2235
        %2323 = vmatmul.f32.gmra.mxu0 %v1093
        %v2324 = vpop.f32.mrf.mxu0
        %v2325 = vadd.f32 %v1084, %v2324
        %2326 = vmatmul.f32.gmra.mxu0 %v1096
        %v2327 = vpop.f32.mrf.mxu0
        %v2328 = vadd.f32 %v1089, %v2327
        %2329 = vdwg.mxu0
        %2330 = vmatpush.msra.mxu0 0.0
        %2331 = vmatpush.msra.mxu0 0.0
        %2332 = vmatpush.msra.mxu0 0.0
        %2333 = vmatpush.msra.mxu0 0.0
        %2334 = vmatpush.msra.mxu0 0.0
        %2335 = vmatpush.msra.mxu0 0.0
        %2336 = vmatpush.msra.mxu0 0.0
        %2337 = vmatpush.msra.mxu0 0.0
        %2338 = vmatpush.msra.mxu0 0.0
        %2339 = vmatpush.msra.mxu0 0.0
        %2340 = vmatpush.msra.mxu0 0.0
        %2341 = vmatpush.msra.mxu0 0.0
        %2342 = vmatpush.msra.mxu0 %v2287
        %2343 = vmatpush.msra.mxu0 %v2276
        %2344 = vmatpush.msra.mxu0 %v2260
        %2345 = vmatpush.msra.mxu0 %v2236
        %2346 = vmatmul.f32.gmra.mxu0 %v1093
        %v2347 = vpop.f32.mrf.mxu0
        %v2348 = vadd.f32 %v1084, %v2347
        %2349 = vmatmul.f32.gmra.mxu0 %v1096
        %v2350 = vpop.f32.mrf.mxu0
        %v2351 = vadd.f32 %v1089, %v2350
        %2352 = vdwg.mxu0
        %2353 = vmatpush.msra.mxu0 0.0
        %2354 = vmatpush.msra.mxu0 0.0
        %2355 = vmatpush.msra.mxu0 0.0
        %2356 = vmatpush.msra.mxu0 0.0
        %2357 = vmatpush.msra.mxu0 0.0
        %2358 = vmatpush.msra.mxu0 0.0
        %2359 = vmatpush.msra.mxu0 0.0
        %2360 = vmatpush.msra.mxu0 0.0
        %2361 = vmatpush.msra.mxu0 0.0
        %2362 = vmatpush.msra.mxu0 0.0
        %2363 = vmatpush.msra.mxu0 0.0
        %2364 = vmatpush.msra.mxu0 0.0
        %2365 = vmatpush.msra.mxu0 %v2290
        %2366 = vmatpush.msra.mxu0 %v2277
        %2367 = vmatpush.msra.mxu0 %v2261
        %2368 = vmatpush.msra.mxu0 %v2237
        %2369 = vmatmul.f32.gmra.mxu0 %v1093
        %v2370 = vpop.f32.mrf.mxu0
        %v2371 = vadd.f32 %v1084, %v2370
        %2372 = vmatmul.f32.gmra.mxu0 %v1096
        %v2373 = vpop.f32.mrf.mxu0
        %v2374 = vadd.f32 %v1089, %v2373
        %2375 = vdwg.mxu0
        %2376 = vmatpush.msra.mxu0 0.0
        %2377 = vmatpush.msra.mxu0 0.0
        %2378 = vmatpush.msra.mxu0 0.0
        %2379 = vmatpush.msra.mxu0 0.0
        %2380 = vmatpush.msra.mxu0 0.0
        %2381 = vmatpush.msra.mxu0 0.0
        %2382 = vmatpush.msra.mxu0 0.0
        %2383 = vmatpush.msra.mxu0 0.0
        %2384 = vmatpush.msra.mxu0 0.0
        %2385 = vmatpush.msra.mxu0 0.0
        %2386 = vmatpush.msra.mxu0 0.0
        %2387 = vmatpush.msra.mxu0 0.0
        %2388 = vmatpush.msra.mxu0 %v2293
        %2389 = vmatpush.msra.mxu0 %v2278
        %2390 = vmatpush.msra.mxu0 %v2262
        %2391 = vmatpush.msra.mxu0 %v2238
        %2392 = vmatmul.f32.gmra.mxu0 %v1093
        %v2393 = vpop.f32.mrf.mxu0
        %v2394 = vadd.f32 %v1084, %v2393
        %2395 = vmatmul.f32.gmra.mxu0 %v1096
        %v2396 = vpop.f32.mrf.mxu0
        %v2397 = vadd.f32 %v1089, %v2396
        %2398 = vdwg.mxu0
        %2399 = vmatpush.msra.mxu0 0.0
        %2400 = vmatpush.msra.mxu0 0.0
        %2401 = vmatpush.msra.mxu0 0.0
        %2402 = vmatpush.msra.mxu0 0.0
        %2403 = vmatpush.msra.mxu0 0.0
        %2404 = vmatpush.msra.mxu0 0.0
        %2405 = vmatpush.msra.mxu0 0.0
        %2406 = vmatpush.msra.mxu0 0.0
        %2407 = vmatpush.msra.mxu0 0.0
        %2408 = vmatpush.msra.mxu0 0.0
        %2409 = vmatpush.msra.mxu0 0.0
        %2410 = vmatpush.msra.mxu0 0.0
        %2411 = vmatpush.msra.mxu0 %v2296
        %2412 = vmatpush.msra.mxu0 %v2279
        %2413 = vmatpush.msra.mxu0 %v2263
        %2414 = vmatpush.msra.mxu0 %v2239
        %2415 = vmatmul.f32.gmra.mxu0 %v1093
        %v2416 = vpop.f32.mrf.mxu0
        %v2417 = vadd.f32 %v1084, %v2416
        %2418 = vmatmul.f32.gmra.mxu0 %v1096
        %v2419 = vpop.f32.mrf.mxu0
        %v2420 = vadd.f32 %v1089, %v2419
        %2421 = vdwg.mxu0
        %2422 = vmatpush.msra.mxu0 0.0
        %2423 = vmatpush.msra.mxu0 0.0
        %2424 = vmatpush.msra.mxu0 0.0
        %2425 = vmatpush.msra.mxu0 0.0
        %2426 = vmatpush.msra.mxu0 0.0
        %2427 = vmatpush.msra.mxu0 0.0
        %2428 = vmatpush.msra.mxu0 0.0
        %2429 = vmatpush.msra.mxu0 0.0
        %2430 = vmatpush.msra.mxu0 0.0
        %2431 = vmatpush.msra.mxu0 0.0
        %2432 = vmatpush.msra.mxu0 0.0
        %2433 = vmatpush.msra.mxu0 0.0
        %2434 = vmatpush.msra.mxu0 %v2299
        %2435 = vmatpush.msra.mxu0 %v2280
        %2436 = vmatpush.msra.mxu0 %v2264
        %2437 = vmatpush.msra.mxu0 %v2240
        %2438 = vmatmul.f32.gmra.mxu0 %v1093
        %v2439 = vpop.f32.mrf.mxu0
        %v2440 = vadd.f32 %v1084, %v2439
        %2441 = vmatmul.f32.gmra.mxu0 %v1096
        %v2442 = vpop.f32.mrf.mxu0
        %v2443 = vadd.f32 %v1089, %v2442
        %2444 = vdwg.mxu0
        %2445 = vmatpush.msra.mxu0 0.0
        %2446 = vmatpush.msra.mxu0 0.0
        %2447 = vmatpush.msra.mxu0 0.0
        %2448 = vmatpush.msra.mxu0 0.0
        %2449 = vmatpush.msra.mxu0 0.0
        %2450 = vmatpush.msra.mxu0 0.0
        %2451 = vmatpush.msra.mxu0 0.0
        %2452 = vmatpush.msra.mxu0 0.0
        %2453 = vmatpush.msra.mxu0 0.0
        %2454 = vmatpush.msra.mxu0 0.0
        %2455 = vmatpush.msra.mxu0 0.0
        %2456 = vmatpush.msra.mxu0 0.0
        %2457 = vmatpush.msra.mxu0 %v2302
        %2458 = vmatpush.msra.mxu0 %v2281
        %2459 = vmatpush.msra.mxu0 %v2265
        %2460 = vmatpush.msra.mxu0 %v2241
        %2461 = vmatmul.f32.gmra.mxu0 %v1093
        %v2462 = vpop.f32.mrf.mxu0
        %v2463 = vadd.f32 %v1084, %v2462
        %2464 = vmatmul.f32.gmra.mxu0 %v1096
        %v2465 = vpop.f32.mrf.mxu0
        %v2466 = vadd.f32 %v1089, %v2465
        %2467 = vdwg.mxu0
        %2468 = vmatpush.msra.mxu0 0.0
        %2469 = vmatpush.msra.mxu0 0.0
        %2470 = vmatpush.msra.mxu0 0.0
        %2471 = vmatpush.msra.mxu0 0.0
        %2472 = vmatpush.msra.mxu0 0.0
        %2473 = vmatpush.msra.mxu0 0.0
        %2474 = vmatpush.msra.mxu0 0.0
        %2475 = vmatpush.msra.mxu0 0.0
        %2476 = vmatpush.msra.mxu0 0.0
        %2477 = vmatpush.msra.mxu0 0.0
        %2478 = vmatpush.msra.mxu0 0.0
        %2479 = vmatpush.msra.mxu0 0.0
        %2480 = vmatpush.msra.mxu0 %v2305
        %2481 = vmatpush.msra.mxu0 %v2282
        %2482 = vmatpush.msra.mxu0 %v2266
        %2483 = vmatpush.msra.mxu0 %v2242
        %2484 = vmatmul.f32.gmra.mxu0 %v1093
        %v2485 = vpop.f32.mrf.mxu0
        %v2486 = vadd.f32 %v1084, %v2485
        %2487 = vmatmul.f32.gmra.mxu0 %v1096
        %v2488 = vpop.f32.mrf.mxu0
        %v2489 = vadd.f32 %v1089, %v2488
        %2490 = vdwg.mxu0
        %v2491 = vsub.f32 0.0, %v2325
        %v2492 = vsub.f32 0.0, %v2348
        %v2493 = vsub.f32 0.0, %v2371
        %v2494 = vsub.f32 0.0, %v2394
        %v2495 = vsub.f32 0.0, %v2417
        %v2496 = vsub.f32 0.0, %v2440
        %v2497 = vsub.f32 0.0, %v2463
        %v2498 = vsub.f32 0.0, %v2486
        %v2499 = vsub.f32 0.0, %v2328
        %v2500 = vsub.f32 0.0, %v2351
        %v2501 = vsub.f32 0.0, %v2374
        %v2502 = vsub.f32 0.0, %v2397
        %v2503 = vsub.f32 0.0, %v2420
        %v2504 = vsub.f32 0.0, %v2443
        %v2505 = vsub.f32 0.0, %v2466
        %v2506 = vsub.f32 0.0, %v2489
        %v2507 = vmul.f32 %v2491, 1.442695
        %v2508 = vpow.pop %v2507
        %v2509 = vmul.f32 %v2492, 1.442695
        %v2510 = vpow.pop %v2509
        %v2511 = vmul.f32 %v2493, 1.442695
        %v2512 = vpow.pop %v2511
        %v2513 = vmul.f32 %v2494, 1.442695
        %v2514 = vpow.pop %v2513
        %v2515 = vmul.f32 %v2495, 1.442695
        %v2516 = vpow.pop %v2515
        %v2517 = vmul.f32 %v2496, 1.442695
        %v2518 = vpow.pop %v2517
        %v2519 = vmul.f32 %v2497, 1.442695
        %v2520 = vpow.pop %v2519
        %v2521 = vmul.f32 %v2498, 1.442695
        %v2522 = vpow.pop %v2521
        %v2523 = vmul.f32 %v2499, 1.442695
        %v2524 = vpow.pop %v2523
        %v2525 = vmul.f32 %v2500, 1.442695
        %v2526 = vpow.pop %v2525
        %v2527 = vmul.f32 %v2501, 1.442695
        %v2528 = vpow.pop %v2527
        %v2529 = vmul.f32 %v2502, 1.442695
        %v2530 = vpow.pop %v2529
        %v2531 = vmul.f32 %v2503, 1.442695
        %v2532 = vpow.pop %v2531
        %v2533 = vmul.f32 %v2504, 1.442695
        %v2534 = vpow.pop %v2533
        %v2535 = vmul.f32 %v2505, 1.442695
        %v2536 = vpow.pop %v2535
        %v2537 = vmul.f32 %v2506, 1.442695
        %v2538 = vpow.pop %v2537
        %v2539 = vadd.f32 %v2508, 1.0
        %v2540 = vadd.f32 %v2510, 1.0
        %v2541 = vadd.f32 %v2512, 1.0
        %v2542 = vadd.f32 %v2514, 1.0
        %v2543 = vadd.f32 %v2516, 1.0
        %v2544 = vadd.f32 %v2518, 1.0
        %v2545 = vadd.f32 %v2520, 1.0
        %v2546 = vadd.f32 %v2522, 1.0
        %v2547 = vadd.f32 %v2524, 1.0
        %v2548 = vadd.f32 %v2526, 1.0
        %v2549 = vadd.f32 %v2528, 1.0
        %v2550 = vadd.f32 %v2530, 1.0
        %v2551 = vadd.f32 %v2532, 1.0
        %v2552 = vadd.f32 %v2534, 1.0
        %v2553 = vadd.f32 %v2536, 1.0
        %v2554 = vadd.f32 %v2538, 1.0
        %v2555 = vrcp.pop %v2539
        %v2556 = vmul.f32 %v2539, %v2555
        %v2557 = vsub.f32 1.0, %v2556
        %v2558 = vmul.f32 %v2555, %v2557
        %v2559 = vadd.f32 %v2555, %v2558
        %vm2560 = vweird.f32 %v2539
        %vm2561 = vweird.f32 %v2555
        %vm2562 = vmor %vm2560, %vm2561
        %v2563 = vsel %vm2562, %v2555, %v2559
        %v2564 = vand.u32 2147483647, %v2539
        %vm2565 = vcmp.eq.f32.partialorder %v2564, 8.507059e+37
        %v2566 = vand.u32 %v2539, 2147483648
        %v2567 = vor.u32 1.1754944e-38, %v2566
        %v2568 = vsel %vm2565, %v2567, %v2563
        %v2569 = vmul.f32 1.0, %v2568
        %v2570 = vrcp.pop %v2540
        %v2571 = vmul.f32 %v2540, %v2570
        %v2572 = vsub.f32 1.0, %v2571
        %v2573 = vmul.f32 %v2570, %v2572
        %v2574 = vadd.f32 %v2570, %v2573
        %vm2575 = vweird.f32 %v2540
        %vm2576 = vweird.f32 %v2570
        %vm2577 = vmor %vm2575, %vm2576
        %v2578 = vsel %vm2577, %v2570, %v2574
        %v2579 = vand.u32 2147483647, %v2540
        %vm2580 = vcmp.eq.f32.partialorder %v2579, 8.507059e+37
        %v2581 = vand.u32 %v2540, 2147483648
        %v2582 = vor.u32 1.1754944e-38, %v2581
        %v2583 = vsel %vm2580, %v2582, %v2578
        %v2584 = vmul.f32 1.0, %v2583
        %v2585 = vrcp.pop %v2541
        %v2586 = vmul.f32 %v2541, %v2585
        %v2587 = vsub.f32 1.0, %v2586
        %v2588 = vmul.f32 %v2585, %v2587
        %v2589 = vadd.f32 %v2585, %v2588
        %vm2590 = vweird.f32 %v2541
        %vm2591 = vweird.f32 %v2585
        %vm2592 = vmor %vm2590, %vm2591
        %v2593 = vsel %vm2592, %v2585, %v2589
        %v2594 = vand.u32 2147483647, %v2541
        %vm2595 = vcmp.eq.f32.partialorder %v2594, 8.507059e+37
        %v2596 = vand.u32 %v2541, 2147483648
        %v2597 = vor.u32 1.1754944e-38, %v2596
        %v2598 = vsel %vm2595, %v2597, %v2593
        %v2599 = vmul.f32 1.0, %v2598
        %v2600 = vrcp.pop %v2542
        %v2601 = vmul.f32 %v2542, %v2600
        %v2602 = vsub.f32 1.0, %v2601
        %v2603 = vmul.f32 %v2600, %v2602
        %v2604 = vadd.f32 %v2600, %v2603
        %vm2605 = vweird.f32 %v2542
        %vm2606 = vweird.f32 %v2600
        %vm2607 = vmor %vm2605, %vm2606
        %v2608 = vsel %vm2607, %v2600, %v2604
        %v2609 = vand.u32 2147483647, %v2542
        %vm2610 = vcmp.eq.f32.partialorder %v2609, 8.507059e+37
        %v2611 = vand.u32 %v2542, 2147483648
        %v2612 = vor.u32 1.1754944e-38, %v2611
        %v2613 = vsel %vm2610, %v2612, %v2608
        %v2614 = vmul.f32 1.0, %v2613
        %v2615 = vrcp.pop %v2543
        %v2616 = vmul.f32 %v2543, %v2615
        %v2617 = vsub.f32 1.0, %v2616
        %v2618 = vmul.f32 %v2615, %v2617
        %v2619 = vadd.f32 %v2615, %v2618
        %vm2620 = vweird.f32 %v2543
        %vm2621 = vweird.f32 %v2615
        %vm2622 = vmor %vm2620, %vm2621
        %v2623 = vsel %vm2622, %v2615, %v2619
        %v2624 = vand.u32 2147483647, %v2543
        %vm2625 = vcmp.eq.f32.partialorder %v2624, 8.507059e+37
        %v2626 = vand.u32 %v2543, 2147483648
        %v2627 = vor.u32 1.1754944e-38, %v2626
        %v2628 = vsel %vm2625, %v2627, %v2623
        %v2629 = vmul.f32 1.0, %v2628
        %v2630 = vrcp.pop %v2544
        %v2631 = vmul.f32 %v2544, %v2630
        %v2632 = vsub.f32 1.0, %v2631
        %v2633 = vmul.f32 %v2630, %v2632
        %v2634 = vadd.f32 %v2630, %v2633
        %vm2635 = vweird.f32 %v2544
        %vm2636 = vweird.f32 %v2630
        %vm2637 = vmor %vm2635, %vm2636
        %v2638 = vsel %vm2637, %v2630, %v2634
        %v2639 = vand.u32 2147483647, %v2544
        %vm2640 = vcmp.eq.f32.partialorder %v2639, 8.507059e+37
        %v2641 = vand.u32 %v2544, 2147483648
        %v2642 = vor.u32 1.1754944e-38, %v2641
        %v2643 = vsel %vm2640, %v2642, %v2638
        %v2644 = vmul.f32 1.0, %v2643
        %v2645 = vrcp.pop %v2545
        %v2646 = vmul.f32 %v2545, %v2645
        %v2647 = vsub.f32 1.0, %v2646
        %v2648 = vmul.f32 %v2645, %v2647
        %v2649 = vadd.f32 %v2645, %v2648
        %vm2650 = vweird.f32 %v2545
        %vm2651 = vweird.f32 %v2645
        %vm2652 = vmor %vm2650, %vm2651
        %v2653 = vsel %vm2652, %v2645, %v2649
        %v2654 = vand.u32 2147483647, %v2545
        %vm2655 = vcmp.eq.f32.partialorder %v2654, 8.507059e+37
        %v2656 = vand.u32 %v2545, 2147483648
        %v2657 = vor.u32 1.1754944e-38, %v2656
        %v2658 = vsel %vm2655, %v2657, %v2653
        %v2659 = vmul.f32 1.0, %v2658
        %v2660 = vrcp.pop %v2546
        %v2661 = vmul.f32 %v2546, %v2660
        %v2662 = vsub.f32 1.0, %v2661
        %v2663 = vmul.f32 %v2660, %v2662
        %v2664 = vadd.f32 %v2660, %v2663
        %vm2665 = vweird.f32 %v2546
        %vm2666 = vweird.f32 %v2660
        %vm2667 = vmor %vm2665, %vm2666
        %v2668 = vsel %vm2667, %v2660, %v2664
        %v2669 = vand.u32 2147483647, %v2546
        %vm2670 = vcmp.eq.f32.partialorder %v2669, 8.507059e+37
        %v2671 = vand.u32 %v2546, 2147483648
        %v2672 = vor.u32 1.1754944e-38, %v2671
        %v2673 = vsel %vm2670, %v2672, %v2668
        %v2674 = vmul.f32 1.0, %v2673
        %v2675 = vrcp.pop %v2547
        %v2676 = vmul.f32 %v2547, %v2675
        %v2677 = vsub.f32 1.0, %v2676
        %v2678 = vmul.f32 %v2675, %v2677
        %v2679 = vadd.f32 %v2675, %v2678
        %vm2680 = vweird.f32 %v2547
        %vm2681 = vweird.f32 %v2675
        %vm2682 = vmor %vm2680, %vm2681
        %v2683 = vsel %vm2682, %v2675, %v2679
        %v2684 = vand.u32 2147483647, %v2547
        %vm2685 = vcmp.eq.f32.partialorder %v2684, 8.507059e+37
        %v2686 = vand.u32 %v2547, 2147483648
        %v2687 = vor.u32 1.1754944e-38, %v2686
        %v2688 = vsel %vm2685, %v2687, %v2683
        %v2689 = vmul.f32 1.0, %v2688
        %v2690 = vrcp.pop %v2548
        %v2691 = vmul.f32 %v2548, %v2690
        %v2692 = vsub.f32 1.0, %v2691
        %v2693 = vmul.f32 %v2690, %v2692
        %v2694 = vadd.f32 %v2690, %v2693
        %vm2695 = vweird.f32 %v2548
        %vm2696 = vweird.f32 %v2690
        %vm2697 = vmor %vm2695, %vm2696
        %v2698 = vsel %vm2697, %v2690, %v2694
        %v2699 = vand.u32 2147483647, %v2548
        %vm2700 = vcmp.eq.f32.partialorder %v2699, 8.507059e+37
        %v2701 = vand.u32 %v2548, 2147483648
        %v2702 = vor.u32 1.1754944e-38, %v2701
        %v2703 = vsel %vm2700, %v2702, %v2698
        %v2704 = vmul.f32 1.0, %v2703
        %v2705 = vrcp.pop %v2549
        %v2706 = vmul.f32 %v2549, %v2705
        %v2707 = vsub.f32 1.0, %v2706
        %v2708 = vmul.f32 %v2705, %v2707
        %v2709 = vadd.f32 %v2705, %v2708
        %vm2710 = vweird.f32 %v2549
        %vm2711 = vweird.f32 %v2705
        %vm2712 = vmor %vm2710, %vm2711
        %v2713 = vsel %vm2712, %v2705, %v2709
        %v2714 = vand.u32 2147483647, %v2549
        %vm2715 = vcmp.eq.f32.partialorder %v2714, 8.507059e+37
        %v2716 = vand.u32 %v2549, 2147483648
        %v2717 = vor.u32 1.1754944e-38, %v2716
        %v2718 = vsel %vm2715, %v2717, %v2713
        %v2719 = vmul.f32 1.0, %v2718
        %v2720 = vrcp.pop %v2550
        %v2721 = vmul.f32 %v2550, %v2720
        %v2722 = vsub.f32 1.0, %v2721
        %v2723 = vmul.f32 %v2720, %v2722
        %v2724 = vadd.f32 %v2720, %v2723
        %vm2725 = vweird.f32 %v2550
        %vm2726 = vweird.f32 %v2720
        %vm2727 = vmor %vm2725, %vm2726
        %v2728 = vsel %vm2727, %v2720, %v2724
        %v2729 = vand.u32 2147483647, %v2550
        %vm2730 = vcmp.eq.f32.partialorder %v2729, 8.507059e+37
        %v2731 = vand.u32 %v2550, 2147483648
        %v2732 = vor.u32 1.1754944e-38, %v2731
        %v2733 = vsel %vm2730, %v2732, %v2728
        %v2734 = vmul.f32 1.0, %v2733
        %v2735 = vrcp.pop %v2551
        %v2736 = vmul.f32 %v2551, %v2735
        %v2737 = vsub.f32 1.0, %v2736
        %v2738 = vmul.f32 %v2735, %v2737
        %v2739 = vadd.f32 %v2735, %v2738
        %vm2740 = vweird.f32 %v2551
        %vm2741 = vweird.f32 %v2735
        %vm2742 = vmor %vm2740, %vm2741
        %v2743 = vsel %vm2742, %v2735, %v2739
        %v2744 = vand.u32 2147483647, %v2551
        %vm2745 = vcmp.eq.f32.partialorder %v2744, 8.507059e+37
        %v2746 = vand.u32 %v2551, 2147483648
        %v2747 = vor.u32 1.1754944e-38, %v2746
        %v2748 = vsel %vm2745, %v2747, %v2743
        %v2749 = vmul.f32 1.0, %v2748
        %v2750 = vrcp.pop %v2552
        %v2751 = vmul.f32 %v2552, %v2750
        %v2752 = vsub.f32 1.0, %v2751
        %v2753 = vmul.f32 %v2750, %v2752
        %v2754 = vadd.f32 %v2750, %v2753
        %vm2755 = vweird.f32 %v2552
        %vm2756 = vweird.f32 %v2750
        %vm2757 = vmor %vm2755, %vm2756
        %v2758 = vsel %vm2757, %v2750, %v2754
        %v2759 = vand.u32 2147483647, %v2552
        %vm2760 = vcmp.eq.f32.partialorder %v2759, 8.507059e+37
        %v2761 = vand.u32 %v2552, 2147483648
        %v2762 = vor.u32 1.1754944e-38, %v2761
        %v2763 = vsel %vm2760, %v2762, %v2758
        %v2764 = vmul.f32 1.0, %v2763
        %v2765 = vrcp.pop %v2553
        %v2766 = vmul.f32 %v2553, %v2765
        %v2767 = vsub.f32 1.0, %v2766
        %v2768 = vmul.f32 %v2765, %v2767
        %v2769 = vadd.f32 %v2765, %v2768
        %vm2770 = vweird.f32 %v2553
        %vm2771 = vweird.f32 %v2765
        %vm2772 = vmor %vm2770, %vm2771
        %v2773 = vsel %vm2772, %v2765, %v2769
        %v2774 = vand.u32 2147483647, %v2553
        %vm2775 = vcmp.eq.f32.partialorder %v2774, 8.507059e+37
        %v2776 = vand.u32 %v2553, 2147483648
        %v2777 = vor.u32 1.1754944e-38, %v2776
        %v2778 = vsel %vm2775, %v2777, %v2773
        %v2779 = vmul.f32 1.0, %v2778
        %v2780 = vrcp.pop %v2554
        %v2781 = vmul.f32 %v2554, %v2780
        %v2782 = vsub.f32 1.0, %v2781
        %v2783 = vmul.f32 %v2780, %v2782
        %v2784 = vadd.f32 %v2780, %v2783
        %vm2785 = vweird.f32 %v2554
        %vm2786 = vweird.f32 %v2780
        %vm2787 = vmor %vm2785, %vm2786
        %v2788 = vsel %vm2787, %v2780, %v2784
        %v2789 = vand.u32 2147483647, %v2554
        %vm2790 = vcmp.eq.f32.partialorder %v2789, 8.507059e+37
        %v2791 = vand.u32 %v2554, 2147483648
        %v2792 = vor.u32 1.1754944e-38, %v2791
        %v2793 = vsel %vm2790, %v2792, %v2788
        %v2794 = vmul.f32 1.0, %v2793
        %s2795 = scalar_lea.vmem %s307, 64
        %v2796 = vld [vmem:[%s2795] sm:$0x77]
        %v2797 = vld [vmem:[%s2795 + $0x8] sm:$0x77]
        %v2798 = vld [vmem:[%s2795 + $0x10] sm:$0x77]
        %v2799 = vld [vmem:[%s2795 + $0x18] sm:$0x77]
        %2804 = vst [vmem:[#allocation1] ss:$2 sm:$0xff] %v2796
        %s2805 = scalar_lea.vmem [#allocation1], 16
        %2806 = vst [vmem:[%s2805] ss:$2 sm:$0xff] %v2797
        %s2807 = scalar_lea.vmem [#allocation1], 32
        %2808 = vst [vmem:[%s2807] ss:$2 sm:$0xff] %v2798
        %s2809 = scalar_lea.vmem [#allocation1], 48
        %2810 = vst [vmem:[%s2809] ss:$2 sm:$0xff] %v2799
        %v2811 = vld.sshfl [vmem:[#allocation1] sm:$0xff pattern:$0x75316420]
        %v2812 = vld.sshfl [vmem:[#allocation1 + $0x8] sm:$0xff pattern:$0x75316420]
        %v2813 = vld.sshfl [vmem:[#allocation1 + $0x10] sm:$0xff pattern:$0x75316420]
        %v2814 = vld.sshfl [vmem:[#allocation1 + $0x18] sm:$0xff pattern:$0x75316420]
        %v2815 = vld.sshfl [vmem:[#allocation1 + $0x20] sm:$0xff pattern:$0x75316420]
        %v2816 = vld.sshfl [vmem:[#allocation1 + $0x28] sm:$0xff pattern:$0x75316420]
        %v2817 = vld.sshfl [vmem:[#allocation1 + $0x30] sm:$0xff pattern:$0x75316420]
        %v2818 = vld.sshfl [vmem:[#allocation1 + $0x38] sm:$0xff pattern:$0x75316420]
        %2827 = vrot.lane.b32.xlu0 %v2811, 33
        %v2828 = vpop.permute.xlu0 %2827
        %2829 = vrot.lane.b32.xlu0 %v2812, 33
        %v2830 = vpop.permute.xlu0 %2829
        %2831 = vrot.lane.b32.xlu0 %v2813, 33
        %v2832 = vpop.permute.xlu0 %2831
        %2833 = vrot.lane.b32.xlu0 %v2814, 33
        %v2834 = vpop.permute.xlu0 %2833
        %2835 = vrot.lane.b32.xlu0 %v2815, 33
        %v2836 = vpop.permute.xlu0 %2835
        %2837 = vrot.lane.b32.xlu0 %v2816, 33
        %v2838 = vpop.permute.xlu0 %2837
        %2839 = vrot.lane.b32.xlu0 %v2817, 33
        %v2840 = vpop.permute.xlu0 %2839
        %2841 = vrot.lane.b32.xlu0 %v2818, 33
        %v2842 = vpop.permute.xlu0 %2841
        %v2843 = vsel %vm441, %v2840, %v2842
        %v2844 = vsel %vm441, %v2838, %v2840
        %v2845 = vsel %vm441, %v2836, %v2838
        %v2846 = vsel %vm441, %v2834, %v2836
        %v2847 = vsel %vm441, %v2832, %v2834
        %v2848 = vsel %vm441, %v2830, %v2832
        %v2849 = vsel %vm441, %v2828, %v2830
        %v2850 = vsel %vm441, %v2842, %v2828
        %v2851 = vsel %vm346, %v2850, 0.0
        %v2852 = vsel %vm347, %v2849, 0.0
        %v2853 = vsel %vm348, %v2848, 0.0
        %v2854 = vsel %vm349, %v2847, 0.0
        %v2855 = vsel %vm350, %v2846, 0.0
        %v2856 = vsel %vm351, %v2845, 0.0
        %v2857 = vsel %vm352, %v2844, 0.0
        %v2858 = vsel %vm353, %v2843, 0.0
        %2859 = vst [vmem:[#allocation1] ss:$2 sm:$0xff] %v2796
        %s2860 = scalar_lea.vmem [#allocation1], 16
        %2861 = vst [vmem:[%s2860] ss:$2 sm:$0xff] %v2797
        %s2862 = scalar_lea.vmem [#allocation1], 32
        %2863 = vst [vmem:[%s2862] ss:$2 sm:$0xff] %v2798
        %s2864 = scalar_lea.vmem [#allocation1], 48
        %2865 = vst [vmem:[%s2864] ss:$2 sm:$0xff] %v2799
        %v2866 = vld.sshfl [vmem:[#allocation1] sm:$0xff pattern:$0x75316420]
        %v2867 = vld.sshfl [vmem:[#allocation1 + $0x8] sm:$0xff pattern:$0x75316420]
        %v2868 = vld.sshfl [vmem:[#allocation1 + $0x10] sm:$0xff pattern:$0x75316420]
        %v2869 = vld.sshfl [vmem:[#allocation1 + $0x18] sm:$0xff pattern:$0x75316420]
        %v2870 = vld.sshfl [vmem:[#allocation1 + $0x20] sm:$0xff pattern:$0x75316420]
        %v2871 = vld.sshfl [vmem:[#allocation1 + $0x28] sm:$0xff pattern:$0x75316420]
        %v2872 = vld.sshfl [vmem:[#allocation1 + $0x30] sm:$0xff pattern:$0x75316420]
        %v2873 = vld.sshfl [vmem:[#allocation1 + $0x38] sm:$0xff pattern:$0x75316420]
        %2882 = vrot.lane.b32.xlu0 %v2866, 32
        %v2883 = vpop.permute.xlu0 %2882
        %2884 = vrot.lane.b32.xlu0 %v2867, 32
        %v2885 = vpop.permute.xlu0 %2884
        %2886 = vrot.lane.b32.xlu0 %v2868, 32
        %v2887 = vpop.permute.xlu0 %2886
        %2888 = vrot.lane.b32.xlu0 %v2869, 32
        %v2889 = vpop.permute.xlu0 %2888
        %2890 = vrot.lane.b32.xlu0 %v2870, 32
        %v2891 = vpop.permute.xlu0 %2890
        %2892 = vrot.lane.b32.xlu0 %v2871, 32
        %v2893 = vpop.permute.xlu0 %2892
        %2894 = vrot.lane.b32.xlu0 %v2872, 32
        %v2895 = vpop.permute.xlu0 %2894
        %2896 = vrot.lane.b32.xlu0 %v2873, 32
        %v2897 = vpop.permute.xlu0 %2896
        %v2898 = vsel %vm497, %v2895, %v2897
        %v2899 = vsel %vm497, %v2893, %v2895
        %v2900 = vsel %vm497, %v2891, %v2893
        %v2901 = vsel %vm497, %v2889, %v2891
        %v2902 = vsel %vm497, %v2887, %v2889
        %v2903 = vsel %vm497, %v2885, %v2887
        %v2904 = vsel %vm497, %v2883, %v2885
        %v2905 = vsel %vm497, %v2897, %v2883
        %v2906 = vsel %vm330, %v2905, 0.0
        %v2907 = vsel %vm331, %v2904, 0.0
        %v2908 = vsel %vm332, %v2903, 0.0
        %v2909 = vsel %vm333, %v2902, 0.0
        %v2910 = vsel %vm334, %v2901, 0.0
        %v2911 = vsel %vm335, %v2900, 0.0
        %v2912 = vsel %vm336, %v2899, 0.0
        %v2913 = vsel %vm337, %v2898, 0.0
        %2914 = vst [vmem:[#allocation1] ss:$2 sm:$0xff] %v2796
        %s2915 = scalar_lea.vmem [#allocation1], 16
        %2916 = vst [vmem:[%s2915] ss:$2 sm:$0xff] %v2797
        %s2917 = scalar_lea.vmem [#allocation1], 32
        %2918 = vst [vmem:[%s2917] ss:$2 sm:$0xff] %v2798
        %s2919 = scalar_lea.vmem [#allocation1], 48
        %2920 = vst [vmem:[%s2919] ss:$2 sm:$0xff] %v2799
        %v2921 = vld.sshfl [vmem:[#allocation1] sm:$0xff pattern:$0x75316420]
        %v2922 = vld.sshfl [vmem:[#allocation1 + $0x8] sm:$0xff pattern:$0x75316420]
        %v2923 = vld.sshfl [vmem:[#allocation1 + $0x10] sm:$0xff pattern:$0x75316420]
        %v2924 = vld.sshfl [vmem:[#allocation1 + $0x18] sm:$0xff pattern:$0x75316420]
        %v2925 = vld.sshfl [vmem:[#allocation1 + $0x20] sm:$0xff pattern:$0x75316420]
        %v2926 = vld.sshfl [vmem:[#allocation1 + $0x28] sm:$0xff pattern:$0x75316420]
        %v2927 = vld.sshfl [vmem:[#allocation1 + $0x30] sm:$0xff pattern:$0x75316420]
        %v2928 = vld.sshfl [vmem:[#allocation1 + $0x38] sm:$0xff pattern:$0x75316420]
        %2937 = vrot.lane.b32.xlu0 %v2921, 31
        %v2938 = vpop.permute.xlu0 %2937
        %2939 = vrot.lane.b32.xlu0 %v2922, 31
        %v2940 = vpop.permute.xlu0 %2939
        %2941 = vrot.lane.b32.xlu0 %v2923, 31
        %v2942 = vpop.permute.xlu0 %2941
        %2943 = vrot.lane.b32.xlu0 %v2924, 31
        %v2944 = vpop.permute.xlu0 %2943
        %2945 = vrot.lane.b32.xlu0 %v2925, 31
        %v2946 = vpop.permute.xlu0 %2945
        %2947 = vrot.lane.b32.xlu0 %v2926, 31
        %v2948 = vpop.permute.xlu0 %2947
        %2949 = vrot.lane.b32.xlu0 %v2927, 31
        %v2950 = vpop.permute.xlu0 %2949
        %2951 = vrot.lane.b32.xlu0 %v2928, 31
        %v2952 = vpop.permute.xlu0 %2951
        %v2953 = vsel %vm553, %v2950, %v2952
        %v2954 = vsel %vm553, %v2948, %v2950
        %v2955 = vsel %vm553, %v2946, %v2948
        %v2956 = vsel %vm553, %v2944, %v2946
        %v2957 = vsel %vm553, %v2942, %v2944
        %v2958 = vsel %vm553, %v2940, %v2942
        %v2959 = vsel %vm553, %v2938, %v2940
        %v2960 = vsel %vm553, %v2952, %v2938
        %v2961 = vsel %vm362, %v2960, 0.0
        %v2962 = vsel %vm363, %v2959, 0.0
        %v2963 = vsel %vm364, %v2958, 0.0
        %v2964 = vsel %vm365, %v2957, 0.0
        %v2965 = vsel %vm366, %v2956, 0.0
        %v2966 = vsel %vm367, %v2955, 0.0
        %v2967 = vsel %vm368, %v2954, 0.0
        %v2968 = vsel %vm369, %v2953, 0.0
        %2969 = vst [vmem:[#allocation1] ss:$2 sm:$0xff] %v2796
        %s2970 = scalar_lea.vmem [#allocation1], 16
        %2971 = vst [vmem:[%s2970] ss:$2 sm:$0xff] %v2797
        %s2972 = scalar_lea.vmem [#allocation1], 32
        %2973 = vst [vmem:[%s2972] ss:$2 sm:$0xff] %v2798
        %s2974 = scalar_lea.vmem [#allocation1], 48
        %2975 = vst [vmem:[%s2974] ss:$2 sm:$0xff] %v2799
        %v2976 = vld.sshfl [vmem:[#allocation1] sm:$0xff pattern:$0x75316420]
        %v2977 = vld.sshfl [vmem:[#allocation1 + $0x8] sm:$0xff pattern:$0x75316420]
        %v2978 = vld.sshfl [vmem:[#allocation1 + $0x10] sm:$0xff pattern:$0x75316420]
        %v2979 = vld.sshfl [vmem:[#allocation1 + $0x18] sm:$0xff pattern:$0x75316420]
        %v2980 = vld.sshfl [vmem:[#allocation1 + $0x20] sm:$0xff pattern:$0x75316420]
        %v2981 = vld.sshfl [vmem:[#allocation1 + $0x28] sm:$0xff pattern:$0x75316420]
        %v2982 = vld.sshfl [vmem:[#allocation1 + $0x30] sm:$0xff pattern:$0x75316420]
        %v2983 = vld.sshfl [vmem:[#allocation1 + $0x38] sm:$0xff pattern:$0x75316420]
        %2992 = vrot.lane.b32.xlu0 %v2976, 1
        %v2993 = vpop.permute.xlu0 %2992
        %2994 = vrot.lane.b32.xlu0 %v2977, 1
        %v2995 = vpop.permute.xlu0 %2994
        %2996 = vrot.lane.b32.xlu0 %v2978, 1
        %v2997 = vpop.permute.xlu0 %2996
        %2998 = vrot.lane.b32.xlu0 %v2979, 1
        %v2999 = vpop.permute.xlu0 %2998
        %3000 = vrot.lane.b32.xlu0 %v2980, 1
        %v3001 = vpop.permute.xlu0 %3000
        %3002 = vrot.lane.b32.xlu0 %v2981, 1
        %v3003 = vpop.permute.xlu0 %3002
        %3004 = vrot.lane.b32.xlu0 %v2982, 1
        %v3005 = vpop.permute.xlu0 %3004
        %3006 = vrot.lane.b32.xlu0 %v2983, 1
        %v3007 = vpop.permute.xlu0 %3006
        %v3008 = vsel %vm609, %v3005, %v3007
        %v3009 = vsel %vm609, %v3003, %v3005
        %v3010 = vsel %vm609, %v3001, %v3003
        %v3011 = vsel %vm609, %v2999, %v3001
        %v3012 = vsel %vm609, %v2997, %v2999
        %v3013 = vsel %vm609, %v2995, %v2997
        %v3014 = vsel %vm609, %v2993, %v2995
        %v3015 = vsel %vm609, %v3007, %v2993
        %v3016 = vsel %vm338, %v3015, 0.0
        %v3017 = vsel %vm339, %v3014, 0.0
        %v3018 = vsel %vm340, %v3013, 0.0
        %v3019 = vsel %vm341, %v3012, 0.0
        %v3020 = vsel %vm342, %v3011, 0.0
        %v3021 = vsel %vm343, %v3010, 0.0
        %v3022 = vsel %vm344, %v3009, 0.0
        %v3023 = vsel %vm345, %v3008, 0.0
        %3024 = vst [vmem:[#allocation1] ss:$2 sm:$0xff] %v2796
        %s3025 = scalar_lea.vmem [#allocation1], 16
        %3026 = vst [vmem:[%s3025] ss:$2 sm:$0xff] %v2797
        %s3027 = scalar_lea.vmem [#allocation1], 32
        %3028 = vst [vmem:[%s3027] ss:$2 sm:$0xff] %v2798
        %s3029 = scalar_lea.vmem [#allocation1], 48
        %3030 = vst [vmem:[%s3029] ss:$2 sm:$0xff] %v2799
        %v3031 = vld.sshfl [vmem:[#allocation1] sm:$0xff pattern:$0x75316420]
        %v3032 = vld.sshfl [vmem:[#allocation1 + $0x8] sm:$0xff pattern:$0x75316420]
        %v3033 = vld.sshfl [vmem:[#allocation1 + $0x10] sm:$0xff pattern:$0x75316420]
        %v3034 = vld.sshfl [vmem:[#allocation1 + $0x18] sm:$0xff pattern:$0x75316420]
        %v3035 = vld.sshfl [vmem:[#allocation1 + $0x20] sm:$0xff pattern:$0x75316420]
        %v3036 = vld.sshfl [vmem:[#allocation1 + $0x28] sm:$0xff pattern:$0x75316420]
        %v3037 = vld.sshfl [vmem:[#allocation1 + $0x30] sm:$0xff pattern:$0x75316420]
        %v3038 = vld.sshfl [vmem:[#allocation1 + $0x38] sm:$0xff pattern:$0x75316420]
        %3047 = vrot.lane.b32.xlu0 %v3031, 127
        %v3048 = vpop.permute.xlu0 %3047
        %3049 = vrot.lane.b32.xlu0 %v3032, 127
        %v3050 = vpop.permute.xlu0 %3049
        %3051 = vrot.lane.b32.xlu0 %v3033, 127
        %v3052 = vpop.permute.xlu0 %3051
        %3053 = vrot.lane.b32.xlu0 %v3034, 127
        %v3054 = vpop.permute.xlu0 %3053
        %3055 = vrot.lane.b32.xlu0 %v3035, 127
        %v3056 = vpop.permute.xlu0 %3055
        %3057 = vrot.lane.b32.xlu0 %v3036, 127
        %v3058 = vpop.permute.xlu0 %3057
        %3059 = vrot.lane.b32.xlu0 %v3037, 127
        %v3060 = vpop.permute.xlu0 %3059
        %3061 = vrot.lane.b32.xlu0 %v3038, 127
        %v3062 = vpop.permute.xlu0 %3061
        %v3063 = vsel %vm665, %v3060, %v3062
        %v3064 = vsel %vm665, %v3058, %v3060
        %v3065 = vsel %vm665, %v3056, %v3058
        %v3066 = vsel %vm665, %v3054, %v3056
        %v3067 = vsel %vm665, %v3052, %v3054
        %v3068 = vsel %vm665, %v3050, %v3052
        %v3069 = vsel %vm665, %v3048, %v3050
        %v3070 = vsel %vm665, %v3062, %v3048
        %v3071 = vsel %vm354, %v3069, 0.0
        %v3072 = vsel %vm355, %v3068, 0.0
        %v3073 = vsel %vm356, %v3067, 0.0
        %v3074 = vsel %vm357, %v3066, 0.0
        %v3075 = vsel %vm358, %v3065, 0.0
        %v3076 = vsel %vm359, %v3064, 0.0
        %v3077 = vsel %vm360, %v3063, 0.0
        %v3078 = vsel %vm361, %v3070, 0.0
        %3079 = vst [vmem:[#allocation1] ss:$2 sm:$0xff] %v2796
        %s3080 = scalar_lea.vmem [#allocation1], 16
        %3081 = vst [vmem:[%s3080] ss:$2 sm:$0xff] %v2797
        %s3082 = scalar_lea.vmem [#allocation1], 32
        %3083 = vst [vmem:[%s3082] ss:$2 sm:$0xff] %v2798
        %s3084 = scalar_lea.vmem [#allocation1], 48
        %3085 = vst [vmem:[%s3084] ss:$2 sm:$0xff] %v2799
        %v3086 = vld.sshfl [vmem:[#allocation1] sm:$0xff pattern:$0x75316420]
        %v3087 = vld.sshfl [vmem:[#allocation1 + $0x8] sm:$0xff pattern:$0x75316420]
        %v3088 = vld.sshfl [vmem:[#allocation1 + $0x10] sm:$0xff pattern:$0x75316420]
        %v3089 = vld.sshfl [vmem:[#allocation1 + $0x18] sm:$0xff pattern:$0x75316420]
        %v3090 = vld.sshfl [vmem:[#allocation1 + $0x20] sm:$0xff pattern:$0x75316420]
        %v3091 = vld.sshfl [vmem:[#allocation1 + $0x28] sm:$0xff pattern:$0x75316420]
        %v3092 = vld.sshfl [vmem:[#allocation1 + $0x30] sm:$0xff pattern:$0x75316420]
        %v3093 = vld.sshfl [vmem:[#allocation1 + $0x38] sm:$0xff pattern:$0x75316420]
        %3102 = vrot.lane.b32.xlu0 %v3086, 97
        %v3103 = vpop.permute.xlu0 %3102
        %3104 = vrot.lane.b32.xlu0 %v3087, 97
        %v3105 = vpop.permute.xlu0 %3104
        %3106 = vrot.lane.b32.xlu0 %v3088, 97
        %v3107 = vpop.permute.xlu0 %3106
        %3108 = vrot.lane.b32.xlu0 %v3089, 97
        %v3109 = vpop.permute.xlu0 %3108
        %3110 = vrot.lane.b32.xlu0 %v3090, 97
        %v3111 = vpop.permute.xlu0 %3110
        %3112 = vrot.lane.b32.xlu0 %v3091, 97
        %v3113 = vpop.permute.xlu0 %3112
        %3114 = vrot.lane.b32.xlu0 %v3092, 97
        %v3115 = vpop.permute.xlu0 %3114
        %3116 = vrot.lane.b32.xlu0 %v3093, 97
        %v3117 = vpop.permute.xlu0 %3116
        %v3118 = vsel %vm721, %v3115, %v3117
        %v3119 = vsel %vm721, %v3113, %v3115
        %v3120 = vsel %vm721, %v3111, %v3113
        %v3121 = vsel %vm721, %v3109, %v3111
        %v3122 = vsel %vm721, %v3107, %v3109
        %v3123 = vsel %vm721, %v3105, %v3107
        %v3124 = vsel %vm721, %v3103, %v3105
        %v3125 = vsel %vm721, %v3117, %v3103
        %v3126 = vsel %vm378, %v3124, 0.0
        %v3127 = vsel %vm379, %v3123, 0.0
        %v3128 = vsel %vm380, %v3122, 0.0
        %v3129 = vsel %vm381, %v3121, 0.0
        %v3130 = vsel %vm382, %v3120, 0.0
        %v3131 = vsel %vm383, %v3119, 0.0
        %v3132 = vsel %vm384, %v3118, 0.0
        %v3133 = vsel %vm385, %v3125, 0.0
        %3134 = vst [vmem:[#allocation1] ss:$2 sm:$0xff] %v2796
        %s3135 = scalar_lea.vmem [#allocation1], 16
        %3136 = vst [vmem:[%s3135] ss:$2 sm:$0xff] %v2797
        %s3137 = scalar_lea.vmem [#allocation1], 32
        %3138 = vst [vmem:[%s3137] ss:$2 sm:$0xff] %v2798
        %s3139 = scalar_lea.vmem [#allocation1], 48
        %3140 = vst [vmem:[%s3139] ss:$2 sm:$0xff] %v2799
        %v3141 = vld.sshfl [vmem:[#allocation1] sm:$0xff pattern:$0x75316420]
        %v3142 = vld.sshfl [vmem:[#allocation1 + $0x8] sm:$0xff pattern:$0x75316420]
        %v3143 = vld.sshfl [vmem:[#allocation1 + $0x10] sm:$0xff pattern:$0x75316420]
        %v3144 = vld.sshfl [vmem:[#allocation1 + $0x18] sm:$0xff pattern:$0x75316420]
        %v3145 = vld.sshfl [vmem:[#allocation1 + $0x20] sm:$0xff pattern:$0x75316420]
        %v3146 = vld.sshfl [vmem:[#allocation1 + $0x28] sm:$0xff pattern:$0x75316420]
        %v3147 = vld.sshfl [vmem:[#allocation1 + $0x30] sm:$0xff pattern:$0x75316420]
        %v3148 = vld.sshfl [vmem:[#allocation1 + $0x38] sm:$0xff pattern:$0x75316420]
        %3157 = vrot.lane.b32.xlu0 %v3141, 96
        %v3158 = vpop.permute.xlu0 %3157
        %3159 = vrot.lane.b32.xlu0 %v3142, 96
        %v3160 = vpop.permute.xlu0 %3159
        %3161 = vrot.lane.b32.xlu0 %v3143, 96
        %v3162 = vpop.permute.xlu0 %3161
        %3163 = vrot.lane.b32.xlu0 %v3144, 96
        %v3164 = vpop.permute.xlu0 %3163
        %3165 = vrot.lane.b32.xlu0 %v3145, 96
        %v3166 = vpop.permute.xlu0 %3165
        %3167 = vrot.lane.b32.xlu0 %v3146, 96
        %v3168 = vpop.permute.xlu0 %3167
        %3169 = vrot.lane.b32.xlu0 %v3147, 96
        %v3170 = vpop.permute.xlu0 %3169
        %3171 = vrot.lane.b32.xlu0 %v3148, 96
        %v3172 = vpop.permute.xlu0 %3171
        %v3173 = vsel %vm777, %v3170, %v3172
        %v3174 = vsel %vm777, %v3168, %v3170
        %v3175 = vsel %vm777, %v3166, %v3168
        %v3176 = vsel %vm777, %v3164, %v3166
        %v3177 = vsel %vm777, %v3162, %v3164
        %v3178 = vsel %vm777, %v3160, %v3162
        %v3179 = vsel %vm777, %v3158, %v3160
        %v3180 = vsel %vm777, %v3172, %v3158
        %v3181 = vsel %vm370, %v3179, 0.0
        %v3182 = vsel %vm371, %v3178, 0.0
        %v3183 = vsel %vm372, %v3177, 0.0
        %v3184 = vsel %vm373, %v3176, 0.0
        %v3185 = vsel %vm374, %v3175, 0.0
        %v3186 = vsel %vm375, %v3174, 0.0
        %v3187 = vsel %vm376, %v3173, 0.0
        %v3188 = vsel %vm377, %v3180, 0.0
        %3189 = vst [vmem:[#allocation1] ss:$2 sm:$0xff] %v2796
        %s3190 = scalar_lea.vmem [#allocation1], 16
        %3191 = vst [vmem:[%s3190] ss:$2 sm:$0xff] %v2797
        %s3192 = scalar_lea.vmem [#allocation1], 32
        %3193 = vst [vmem:[%s3192] ss:$2 sm:$0xff] %v2798
        %s3194 = scalar_lea.vmem [#allocation1], 48
        %3195 = vst [vmem:[%s3194] ss:$2 sm:$0xff] %v2799
        %v3196 = vld.sshfl [vmem:[#allocation1] sm:$0xff pattern:$0x75316420]
        %v3197 = vld.sshfl [vmem:[#allocation1 + $0x8] sm:$0xff pattern:$0x75316420]
        %v3198 = vld.sshfl [vmem:[#allocation1 + $0x10] sm:$0xff pattern:$0x75316420]
        %v3199 = vld.sshfl [vmem:[#allocation1 + $0x18] sm:$0xff pattern:$0x75316420]
        %v3200 = vld.sshfl [vmem:[#allocation1 + $0x20] sm:$0xff pattern:$0x75316420]
        %v3201 = vld.sshfl [vmem:[#allocation1 + $0x28] sm:$0xff pattern:$0x75316420]
        %v3202 = vld.sshfl [vmem:[#allocation1 + $0x30] sm:$0xff pattern:$0x75316420]
        %v3203 = vld.sshfl [vmem:[#allocation1 + $0x38] sm:$0xff pattern:$0x75316420]
        %3212 = vrot.lane.b32.xlu0 %v3196, 95
        %v3213 = vpop.permute.xlu0 %3212
        %3214 = vrot.lane.b32.xlu0 %v3197, 95
        %v3215 = vpop.permute.xlu0 %3214
        %3216 = vrot.lane.b32.xlu0 %v3198, 95
        %v3217 = vpop.permute.xlu0 %3216
        %3218 = vrot.lane.b32.xlu0 %v3199, 95
        %v3219 = vpop.permute.xlu0 %3218
        %3220 = vrot.lane.b32.xlu0 %v3200, 95
        %v3221 = vpop.permute.xlu0 %3220
        %3222 = vrot.lane.b32.xlu0 %v3201, 95
        %v3223 = vpop.permute.xlu0 %3222
        %3224 = vrot.lane.b32.xlu0 %v3202, 95
        %v3225 = vpop.permute.xlu0 %3224
        %3226 = vrot.lane.b32.xlu0 %v3203, 95
        %v3227 = vpop.permute.xlu0 %3226
        %v3228 = vsel %vm833, %v3225, %v3227
        %v3229 = vsel %vm833, %v3223, %v3225
        %v3230 = vsel %vm833, %v3221, %v3223
        %v3231 = vsel %vm833, %v3219, %v3221
        %v3232 = vsel %vm833, %v3217, %v3219
        %v3233 = vsel %vm833, %v3215, %v3217
        %v3234 = vsel %vm833, %v3213, %v3215
        %v3235 = vsel %vm833, %v3227, %v3213
        %v3236 = vsel %vm386, %v3234, 0.0
        %v3237 = vsel %vm387, %v3233, 0.0
        %v3238 = vsel %vm388, %v3232, 0.0
        %v3239 = vsel %vm389, %v3231, 0.0
        %v3240 = vsel %vm390, %v3230, 0.0
        %v3241 = vsel %vm391, %v3229, 0.0
        %v3242 = vsel %vm392, %v3228, 0.0
        %v3243 = vsel %vm393, %v3235, 0.0
        %v3252 = vrot.slane %v2906, 5
        %v3253 = vrot.slane %v2907, 5
        %v3254 = vrot.slane %v2908, 5
        %v3255 = vrot.slane %v2909, 5
        %v3256 = vrot.slane %v2910, 5
        %v3257 = vrot.slane %v2911, 5
        %v3258 = vrot.slane %v2912, 5
        %v3259 = vrot.slane %v2913, 5
        %v3276 = vrot.slane %v2961, 2
        %v3277 = vrot.slane %v2962, 2
        %v3278 = vrot.slane %v2963, 2
        %v3279 = vrot.slane %v2964, 2
        %v3280 = vrot.slane %v2965, 2
        %v3281 = vrot.slane %v2966, 2
        %v3282 = vrot.slane %v2967, 2
        %v3283 = vrot.slane %v2968, 2
        %v3300 = vrot.slane %v3016, 7
        %v3301 = vrot.slane %v3017, 7
        %v3302 = vrot.slane %v3018, 7
        %v3303 = vrot.slane %v3019, 7
        %v3304 = vrot.slane %v3020, 7
        %v3305 = vrot.slane %v3021, 7
        %v3306 = vrot.slane %v3022, 7
        %v3307 = vrot.slane %v3023, 7
        %s3316 = scalar_lea.vmem [#allocation1], 1
        %3317 = vst [vmem:[%s3316] ss:$2 sm:$0xff] %v2796
        %s3318 = scalar_lea.vmem [#allocation1], 17
        %3319 = vst [vmem:[%s3318] ss:$2 sm:$0xff] %v2797
        %s3320 = scalar_lea.vmem [#allocation1], 33
        %3321 = vst [vmem:[%s3320] ss:$2 sm:$0xff] %v2798
        %s3322 = scalar_lea.vmem [#allocation1], 49
        %3323 = vst [vmem:[%s3322] ss:$2 sm:$0xff] %v2799
        %v3324 = vld.sshfl [vmem:[#allocation1] sm:$0xff pattern:$0x75316420]
        %v3325 = vld.sshfl [vmem:[#allocation1 + $0x8] sm:$0xff pattern:$0x75316420]
        %v3326 = vld.sshfl [vmem:[#allocation1 + $0x10] sm:$0xff pattern:$0x75316420]
        %v3327 = vld.sshfl [vmem:[#allocation1 + $0x18] sm:$0xff pattern:$0x75316420]
        %v3328 = vld.sshfl [vmem:[#allocation1 + $0x20] sm:$0xff pattern:$0x75316420]
        %v3329 = vld.sshfl [vmem:[#allocation1 + $0x28] sm:$0xff pattern:$0x75316420]
        %v3330 = vld.sshfl [vmem:[#allocation1 + $0x30] sm:$0xff pattern:$0x75316420]
        %v3331 = vld.sshfl [vmem:[#allocation1 + $0x38] sm:$0xff pattern:$0x75316420]
        %v3348 = vrot.slane %v3071, 1
        %v3349 = vrot.slane %v3072, 1
        %v3350 = vrot.slane %v3073, 1
        %v3351 = vrot.slane %v3074, 1
        %v3352 = vrot.slane %v3075, 1
        %v3353 = vrot.slane %v3076, 1
        %v3354 = vrot.slane %v3077, 1
        %v3355 = vrot.slane %v3078, 1
        %v3372 = vrot.slane %v3126, 6
        %v3373 = vrot.slane %v3127, 6
        %v3374 = vrot.slane %v3128, 6
        %v3375 = vrot.slane %v3129, 6
        %v3376 = vrot.slane %v3130, 6
        %v3377 = vrot.slane %v3131, 6
        %v3378 = vrot.slane %v3132, 6
        %v3379 = vrot.slane %v3133, 6
        %v3396 = vrot.slane %v3181, 3
        %v3397 = vrot.slane %v3182, 3
        %v3398 = vrot.slane %v3183, 3
        %v3399 = vrot.slane %v3184, 3
        %v3400 = vrot.slane %v3185, 3
        %v3401 = vrot.slane %v3186, 3
        %v3402 = vrot.slane %v3187, 3
        %v3403 = vrot.slane %v3188, 3
        %v3412 = vsel %vm1018, %v2851, %v3252
        %v3413 = vsel %vm1018, %v2852, %v3253
        %v3414 = vsel %vm1018, %v2853, %v3254
        %v3415 = vsel %vm1018, %v2854, %v3255
        %v3416 = vsel %vm1018, %v2855, %v3256
        %v3417 = vsel %vm1018, %v2856, %v3257
        %v3418 = vsel %vm1018, %v2857, %v3258
        %v3419 = vsel %vm1018, %v2858, %v3259
        %v3420 = vsel %vm1027, %v3412, %v3276
        %v3421 = vsel %vm1027, %v3413, %v3277
        %v3422 = vsel %vm1027, %v3414, %v3278
        %v3423 = vsel %vm1027, %v3415, %v3279
        %v3424 = vsel %vm1027, %v3416, %v3280
        %v3425 = vsel %vm1027, %v3417, %v3281
        %v3426 = vsel %vm1027, %v3418, %v3282
        %v3427 = vsel %vm1027, %v3419, %v3283
        %v3428 = vsel %vm1036, %v3276, %v3300
        %v3429 = vsel %vm1036, %v3277, %v3301
        %v3430 = vsel %vm1036, %v3278, %v3302
        %v3431 = vsel %vm1036, %v3279, %v3303
        %v3432 = vsel %vm1036, %v3280, %v3304
        %v3433 = vsel %vm1036, %v3281, %v3305
        %v3434 = vsel %vm1036, %v3282, %v3306
        %v3435 = vsel %vm1036, %v3283, %v3307
        %v3436 = vsel %vm1045, %v3428, %v3324
        %v3437 = vsel %vm1045, %v3429, %v3325
        %v3438 = vsel %vm1045, %v3430, %v3326
        %v3439 = vsel %vm1045, %v3431, %v3327
        %v3440 = vsel %vm1045, %v3432, %v3328
        %v3441 = vsel %vm1045, %v3433, %v3329
        %v3442 = vsel %vm1045, %v3434, %v3330
        %v3443 = vsel %vm1045, %v3435, %v3331
        %v3444 = vsel %vm1054, %v3436, %v3348
        %v3445 = vsel %vm1054, %v3437, %v3349
        %v3446 = vsel %vm1054, %v3438, %v3350
        %v3447 = vsel %vm1054, %v3439, %v3351
        %v3448 = vsel %vm1054, %v3440, %v3352
        %v3449 = vsel %vm1054, %v3441, %v3353
        %v3450 = vsel %vm1054, %v3442, %v3354
        %v3451 = vsel %vm1054, %v3443, %v3355
        %v3452 = vsel %vm1063, %v3348, %v3372
        %v3453 = vsel %vm1063, %v3349, %v3373
        %v3454 = vsel %vm1063, %v3350, %v3374
        %v3455 = vsel %vm1063, %v3351, %v3375
        %v3456 = vsel %vm1063, %v3352, %v3376
        %v3457 = vsel %vm1063, %v3353, %v3377
        %v3458 = vsel %vm1063, %v3354, %v3378
        %v3459 = vsel %vm1063, %v3355, %v3379
        %v3460 = vsel %vm1072, %v3452, %v3396
        %v3461 = vsel %vm1072, %v3453, %v3397
        %v3462 = vsel %vm1072, %v3454, %v3398
        %v3463 = vsel %vm1072, %v3455, %v3399
        %v3464 = vsel %vm1072, %v3456, %v3400
        %v3465 = vsel %vm1072, %v3457, %v3401
        %v3466 = vsel %vm1072, %v3458, %v3402
        %v3467 = vsel %vm1072, %v3459, %v3403
        %v3469 = vsel %vm1018, %v3236, 0
        %v3472 = vsel %vm1018, %v3237, 0
        %v3475 = vsel %vm1018, %v3238, 0
        %v3478 = vsel %vm1018, %v3239, 0
        %v3481 = vsel %vm1018, %v3240, 0
        %v3484 = vsel %vm1018, %v3241, 0
        %v3487 = vsel %vm1018, %v3242, 0
        %v3490 = vsel %vm1018, %v3243, 0
        %3492 = vmatpush.msra.mxu0 0.0
        %3493 = vmatpush.msra.mxu0 0.0
        %3494 = vmatpush.msra.mxu0 0.0
        %3495 = vmatpush.msra.mxu0 0.0
        %3496 = vmatpush.msra.mxu0 0.0
        %3497 = vmatpush.msra.mxu0 0.0
        %3498 = vmatpush.msra.mxu0 0.0
        %3499 = vmatpush.msra.mxu0 0.0
        %3500 = vmatpush.msra.mxu0 0.0
        %3501 = vmatpush.msra.mxu0 0.0
        %3502 = vmatpush.msra.mxu0 0.0
        %3503 = vmatpush.msra.mxu0 0.0
        %3504 = vmatpush.msra.mxu0 %v3469
        %3505 = vmatpush.msra.mxu0 %v3460
        %3506 = vmatpush.msra.mxu0 %v3444
        %3507 = vmatpush.msra.mxu0 %v3420
        %3508 = vmatmul.f32.gmra.mxu0 %v1093
        %v3509 = vpop.f32.mrf.mxu0
        %v3510 = vadd.f32 %v1084, %v3509
        %3511 = vmatmul.f32.gmra.mxu0 %v1096
        %v3512 = vpop.f32.mrf.mxu0
        %v3513 = vadd.f32 %v1089, %v3512
        %3514 = vdwg.mxu0
        %3515 = vmatpush.msra.mxu0 0.0
        %3516 = vmatpush.msra.mxu0 0.0
        %3517 = vmatpush.msra.mxu0 0.0
        %3518 = vmatpush.msra.mxu0 0.0
        %3519 = vmatpush.msra.mxu0 0.0
        %3520 = vmatpush.msra.mxu0 0.0
        %3521 = vmatpush.msra.mxu0 0.0
        %3522 = vmatpush.msra.mxu0 0.0
        %3523 = vmatpush.msra.mxu0 0.0
        %3524 = vmatpush.msra.mxu0 0.0
        %3525 = vmatpush.msra.mxu0 0.0
        %3526 = vmatpush.msra.mxu0 0.0
        %3527 = vmatpush.msra.mxu0 %v3472
        %3528 = vmatpush.msra.mxu0 %v3461
        %3529 = vmatpush.msra.mxu0 %v3445
        %3530 = vmatpush.msra.mxu0 %v3421
        %3531 = vmatmul.f32.gmra.mxu0 %v1093
        %v3532 = vpop.f32.mrf.mxu0
        %v3533 = vadd.f32 %v1084, %v3532
        %3534 = vmatmul.f32.gmra.mxu0 %v1096
        %v3535 = vpop.f32.mrf.mxu0
        %v3536 = vadd.f32 %v1089, %v3535
        %3537 = vdwg.mxu0
        %3538 = vmatpush.msra.mxu0 0.0
        %3539 = vmatpush.msra.mxu0 0.0
        %3540 = vmatpush.msra.mxu0 0.0
        %3541 = vmatpush.msra.mxu0 0.0
        %3542 = vmatpush.msra.mxu0 0.0
        %3543 = vmatpush.msra.mxu0 0.0
        %3544 = vmatpush.msra.mxu0 0.0
        %3545 = vmatpush.msra.mxu0 0.0
        %3546 = vmatpush.msra.mxu0 0.0
        %3547 = vmatpush.msra.mxu0 0.0
        %3548 = vmatpush.msra.mxu0 0.0
        %3549 = vmatpush.msra.mxu0 0.0
        %3550 = vmatpush.msra.mxu0 %v3475
        %3551 = vmatpush.msra.mxu0 %v3462
        %3552 = vmatpush.msra.mxu0 %v3446
        %3553 = vmatpush.msra.mxu0 %v3422
        %3554 = vmatmul.f32.gmra.mxu0 %v1093
        %v3555 = vpop.f32.mrf.mxu0
        %v3556 = vadd.f32 %v1084, %v3555
        %3557 = vmatmul.f32.gmra.mxu0 %v1096
        %v3558 = vpop.f32.mrf.mxu0
        %v3559 = vadd.f32 %v1089, %v3558
        %3560 = vdwg.mxu0
        %3561 = vmatpush.msra.mxu0 0.0
        %3562 = vmatpush.msra.mxu0 0.0
        %3563 = vmatpush.msra.mxu0 0.0
        %3564 = vmatpush.msra.mxu0 0.0
        %3565 = vmatpush.msra.mxu0 0.0
        %3566 = vmatpush.msra.mxu0 0.0
        %3567 = vmatpush.msra.mxu0 0.0
        %3568 = vmatpush.msra.mxu0 0.0
        %3569 = vmatpush.msra.mxu0 0.0
        %3570 = vmatpush.msra.mxu0 0.0
        %3571 = vmatpush.msra.mxu0 0.0
        %3572 = vmatpush.msra.mxu0 0.0
        %3573 = vmatpush.msra.mxu0 %v3478
        %3574 = vmatpush.msra.mxu0 %v3463
        %3575 = vmatpush.msra.mxu0 %v3447
        %3576 = vmatpush.msra.mxu0 %v3423
        %3577 = vmatmul.f32.gmra.mxu0 %v1093
        %v3578 = vpop.f32.mrf.mxu0
        %v3579 = vadd.f32 %v1084, %v3578
        %3580 = vmatmul.f32.gmra.mxu0 %v1096
        %v3581 = vpop.f32.mrf.mxu0
        %v3582 = vadd.f32 %v1089, %v3581
        %3583 = vdwg.mxu0
        %3584 = vmatpush.msra.mxu0 0.0
        %3585 = vmatpush.msra.mxu0 0.0
        %3586 = vmatpush.msra.mxu0 0.0
        %3587 = vmatpush.msra.mxu0 0.0
        %3588 = vmatpush.msra.mxu0 0.0
        %3589 = vmatpush.msra.mxu0 0.0
        %3590 = vmatpush.msra.mxu0 0.0
        %3591 = vmatpush.msra.mxu0 0.0
        %3592 = vmatpush.msra.mxu0 0.0
        %3593 = vmatpush.msra.mxu0 0.0
        %3594 = vmatpush.msra.mxu0 0.0
        %3595 = vmatpush.msra.mxu0 0.0
        %3596 = vmatpush.msra.mxu0 %v3481
        %3597 = vmatpush.msra.mxu0 %v3464
        %3598 = vmatpush.msra.mxu0 %v3448
        %3599 = vmatpush.msra.mxu0 %v3424
        %3600 = vmatmul.f32.gmra.mxu0 %v1093
        %v3601 = vpop.f32.mrf.mxu0
        %v3602 = vadd.f32 %v1084, %v3601
        %3603 = vmatmul.f32.gmra.mxu0 %v1096
        %v3604 = vpop.f32.mrf.mxu0
        %v3605 = vadd.f32 %v1089, %v3604
        %3606 = vdwg.mxu0
        %3607 = vmatpush.msra.mxu0 0.0
        %3608 = vmatpush.msra.mxu0 0.0
        %3609 = vmatpush.msra.mxu0 0.0
        %3610 = vmatpush.msra.mxu0 0.0
        %3611 = vmatpush.msra.mxu0 0.0
        %3612 = vmatpush.msra.mxu0 0.0
        %3613 = vmatpush.msra.mxu0 0.0
        %3614 = vmatpush.msra.mxu0 0.0
        %3615 = vmatpush.msra.mxu0 0.0
        %3616 = vmatpush.msra.mxu0 0.0
        %3617 = vmatpush.msra.mxu0 0.0
        %3618 = vmatpush.msra.mxu0 0.0
        %3619 = vmatpush.msra.mxu0 %v3484
        %3620 = vmatpush.msra.mxu0 %v3465
        %3621 = vmatpush.msra.mxu0 %v3449
        %3622 = vmatpush.msra.mxu0 %v3425
        %3623 = vmatmul.f32.gmra.mxu0 %v1093
        %v3624 = vpop.f32.mrf.mxu0
        %v3625 = vadd.f32 %v1084, %v3624
        %3626 = vmatmul.f32.gmra.mxu0 %v1096
        %v3627 = vpop.f32.mrf.mxu0
        %v3628 = vadd.f32 %v1089, %v3627
        %3629 = vdwg.mxu0
        %3630 = vmatpush.msra.mxu0 0.0
        %3631 = vmatpush.msra.mxu0 0.0
        %3632 = vmatpush.msra.mxu0 0.0
        %3633 = vmatpush.msra.mxu0 0.0
        %3634 = vmatpush.msra.mxu0 0.0
        %3635 = vmatpush.msra.mxu0 0.0
        %3636 = vmatpush.msra.mxu0 0.0
        %3637 = vmatpush.msra.mxu0 0.0
        %3638 = vmatpush.msra.mxu0 0.0
        %3639 = vmatpush.msra.mxu0 0.0
        %3640 = vmatpush.msra.mxu0 0.0
        %3641 = vmatpush.msra.mxu0 0.0
        %3642 = vmatpush.msra.mxu0 %v3487
        %3643 = vmatpush.msra.mxu0 %v3466
        %3644 = vmatpush.msra.mxu0 %v3450
        %3645 = vmatpush.msra.mxu0 %v3426
        %3646 = vmatmul.f32.gmra.mxu0 %v1093
        %v3647 = vpop.f32.mrf.mxu0
        %v3648 = vadd.f32 %v1084, %v3647
        %3649 = vmatmul.f32.gmra.mxu0 %v1096
        %v3650 = vpop.f32.mrf.mxu0
        %v3651 = vadd.f32 %v1089, %v3650
        %3652 = vdwg.mxu0
        %3653 = vmatpush.msra.mxu0 0.0
        %3654 = vmatpush.msra.mxu0 0.0
        %3655 = vmatpush.msra.mxu0 0.0
        %3656 = vmatpush.msra.mxu0 0.0
        %3657 = vmatpush.msra.mxu0 0.0
        %3658 = vmatpush.msra.mxu0 0.0
        %3659 = vmatpush.msra.mxu0 0.0
        %3660 = vmatpush.msra.mxu0 0.0
        %3661 = vmatpush.msra.mxu0 0.0
        %3662 = vmatpush.msra.mxu0 0.0
        %3663 = vmatpush.msra.mxu0 0.0
        %3664 = vmatpush.msra.mxu0 0.0
        %3665 = vmatpush.msra.mxu0 %v3490
        %3666 = vmatpush.msra.mxu0 %v3467
        %3667 = vmatpush.msra.mxu0 %v3451
        %3668 = vmatpush.msra.mxu0 %v3427
        %3669 = vmatmul.f32.gmra.mxu0 %v1093
        %v3670 = vpop.f32.mrf.mxu0
        %v3671 = vadd.f32 %v1084, %v3670
        %3672 = vmatmul.f32.gmra.mxu0 %v1096
        %v3673 = vpop.f32.mrf.mxu0
        %v3674 = vadd.f32 %v1089, %v3673
        %3675 = vdwg.mxu0
        %v3676 = vsub.f32 0.0, %v3510
        %v3677 = vsub.f32 0.0, %v3533
        %v3678 = vsub.f32 0.0, %v3556
        %v3679 = vsub.f32 0.0, %v3579
        %v3680 = vsub.f32 0.0, %v3602
        %v3681 = vsub.f32 0.0, %v3625
        %v3682 = vsub.f32 0.0, %v3648
        %v3683 = vsub.f32 0.0, %v3671
        %v3684 = vsub.f32 0.0, %v3513
        %v3685 = vsub.f32 0.0, %v3536
        %v3686 = vsub.f32 0.0, %v3559
        %v3687 = vsub.f32 0.0, %v3582
        %v3688 = vsub.f32 0.0, %v3605
        %v3689 = vsub.f32 0.0, %v3628
        %v3690 = vsub.f32 0.0, %v3651
        %v3691 = vsub.f32 0.0, %v3674
        %v3692 = vmul.f32 %v3676, 1.442695
        %v3693 = vpow.pop %v3692
        %v3694 = vmul.f32 %v3677, 1.442695
        %v3695 = vpow.pop %v3694
        %v3696 = vmul.f32 %v3678, 1.442695
        %v3697 = vpow.pop %v3696
        %v3698 = vmul.f32 %v3679, 1.442695
        %v3699 = vpow.pop %v3698
        %v3700 = vmul.f32 %v3680, 1.442695
        %v3701 = vpow.pop %v3700
        %v3702 = vmul.f32 %v3681, 1.442695
        %v3703 = vpow.pop %v3702
        %v3704 = vmul.f32 %v3682, 1.442695
        %v3705 = vpow.pop %v3704
        %v3706 = vmul.f32 %v3683, 1.442695
        %v3707 = vpow.pop %v3706
        %v3708 = vmul.f32 %v3684, 1.442695
        %v3709 = vpow.pop %v3708
        %v3710 = vmul.f32 %v3685, 1.442695
        %v3711 = vpow.pop %v3710
        %v3712 = vmul.f32 %v3686, 1.442695
        %v3713 = vpow.pop %v3712
        %v3714 = vmul.f32 %v3687, 1.442695
        %v3715 = vpow.pop %v3714
        %v3716 = vmul.f32 %v3688, 1.442695
        %v3717 = vpow.pop %v3716
        %v3718 = vmul.f32 %v3689, 1.442695
        %v3719 = vpow.pop %v3718
        %v3720 = vmul.f32 %v3690, 1.442695
        %v3721 = vpow.pop %v3720
        %v3722 = vmul.f32 %v3691, 1.442695
        %v3723 = vpow.pop %v3722
        %v3724 = vadd.f32 %v3693, 1.0
        %v3725 = vadd.f32 %v3695, 1.0
        %v3726 = vadd.f32 %v3697, 1.0
        %v3727 = vadd.f32 %v3699, 1.0
        %v3728 = vadd.f32 %v3701, 1.0
        %v3729 = vadd.f32 %v3703, 1.0
        %v3730 = vadd.f32 %v3705, 1.0
        %v3731 = vadd.f32 %v3707, 1.0
        %v3732 = vadd.f32 %v3709, 1.0
        %v3733 = vadd.f32 %v3711, 1.0
        %v3734 = vadd.f32 %v3713, 1.0
        %v3735 = vadd.f32 %v3715, 1.0
        %v3736 = vadd.f32 %v3717, 1.0
        %v3737 = vadd.f32 %v3719, 1.0
        %v3738 = vadd.f32 %v3721, 1.0
        %v3739 = vadd.f32 %v3723, 1.0
        %v3740 = vrcp.pop %v3724
        %v3741 = vmul.f32 %v3724, %v3740
        %v3742 = vsub.f32 1.0, %v3741
        %v3743 = vmul.f32 %v3740, %v3742
        %v3744 = vadd.f32 %v3740, %v3743
        %vm3745 = vweird.f32 %v3724
        %vm3746 = vweird.f32 %v3740
        %vm3747 = vmor %vm3745, %vm3746
        %v3748 = vsel %vm3747, %v3740, %v3744
        %v3749 = vand.u32 2147483647, %v3724
        %vm3750 = vcmp.eq.f32.partialorder %v3749, 8.507059e+37
        %v3751 = vand.u32 %v3724, 2147483648
        %v3752 = vor.u32 1.1754944e-38, %v3751
        %v3753 = vsel %vm3750, %v3752, %v3748
        %v3754 = vmul.f32 1.0, %v3753
        %v3755 = vrcp.pop %v3725
        %v3756 = vmul.f32 %v3725, %v3755
        %v3757 = vsub.f32 1.0, %v3756
        %v3758 = vmul.f32 %v3755, %v3757
        %v3759 = vadd.f32 %v3755, %v3758
        %vm3760 = vweird.f32 %v3725
        %vm3761 = vweird.f32 %v3755
        %vm3762 = vmor %vm3760, %vm3761
        %v3763 = vsel %vm3762, %v3755, %v3759
        %v3764 = vand.u32 2147483647, %v3725
        %vm3765 = vcmp.eq.f32.partialorder %v3764, 8.507059e+37
        %v3766 = vand.u32 %v3725, 2147483648
        %v3767 = vor.u32 1.1754944e-38, %v3766
        %v3768 = vsel %vm3765, %v3767, %v3763
        %v3769 = vmul.f32 1.0, %v3768
        %v3770 = vrcp.pop %v3726
        %v3771 = vmul.f32 %v3726, %v3770
        %v3772 = vsub.f32 1.0, %v3771
        %v3773 = vmul.f32 %v3770, %v3772
        %v3774 = vadd.f32 %v3770, %v3773
        %vm3775 = vweird.f32 %v3726
        %vm3776 = vweird.f32 %v3770
        %vm3777 = vmor %vm3775, %vm3776
        %v3778 = vsel %vm3777, %v3770, %v3774
        %v3779 = vand.u32 2147483647, %v3726
        %vm3780 = vcmp.eq.f32.partialorder %v3779, 8.507059e+37
        %v3781 = vand.u32 %v3726, 2147483648
        %v3782 = vor.u32 1.1754944e-38, %v3781
        %v3783 = vsel %vm3780, %v3782, %v3778
        %v3784 = vmul.f32 1.0, %v3783
        %v3785 = vrcp.pop %v3727
        %v3786 = vmul.f32 %v3727, %v3785
        %v3787 = vsub.f32 1.0, %v3786
        %v3788 = vmul.f32 %v3785, %v3787
        %v3789 = vadd.f32 %v3785, %v3788
        %vm3790 = vweird.f32 %v3727
        %vm3791 = vweird.f32 %v3785
        %vm3792 = vmor %vm3790, %vm3791
        %v3793 = vsel %vm3792, %v3785, %v3789
        %v3794 = vand.u32 2147483647, %v3727
        %vm3795 = vcmp.eq.f32.partialorder %v3794, 8.507059e+37
        %v3796 = vand.u32 %v3727, 2147483648
        %v3797 = vor.u32 1.1754944e-38, %v3796
        %v3798 = vsel %vm3795, %v3797, %v3793
        %v3799 = vmul.f32 1.0, %v3798
        %v3800 = vrcp.pop %v3728
        %v3801 = vmul.f32 %v3728, %v3800
        %v3802 = vsub.f32 1.0, %v3801
        %v3803 = vmul.f32 %v3800, %v3802
        %v3804 = vadd.f32 %v3800, %v3803
        %vm3805 = vweird.f32 %v3728
        %vm3806 = vweird.f32 %v3800
        %vm3807 = vmor %vm3805, %vm3806
        %v3808 = vsel %vm3807, %v3800, %v3804
        %v3809 = vand.u32 2147483647, %v3728
        %vm3810 = vcmp.eq.f32.partialorder %v3809, 8.507059e+37
        %v3811 = vand.u32 %v3728, 2147483648
        %v3812 = vor.u32 1.1754944e-38, %v3811
        %v3813 = vsel %vm3810, %v3812, %v3808
        %v3814 = vmul.f32 1.0, %v3813
        %v3815 = vrcp.pop %v3729
        %v3816 = vmul.f32 %v3729, %v3815
        %v3817 = vsub.f32 1.0, %v3816
        %v3818 = vmul.f32 %v3815, %v3817
        %v3819 = vadd.f32 %v3815, %v3818
        %vm3820 = vweird.f32 %v3729
        %vm3821 = vweird.f32 %v3815
        %vm3822 = vmor %vm3820, %vm3821
        %v3823 = vsel %vm3822, %v3815, %v3819
        %v3824 = vand.u32 2147483647, %v3729
        %vm3825 = vcmp.eq.f32.partialorder %v3824, 8.507059e+37
        %v3826 = vand.u32 %v3729, 2147483648
        %v3827 = vor.u32 1.1754944e-38, %v3826
        %v3828 = vsel %vm3825, %v3827, %v3823
        %v3829 = vmul.f32 1.0, %v3828
        %v3830 = vrcp.pop %v3730
        %v3831 = vmul.f32 %v3730, %v3830
        %v3832 = vsub.f32 1.0, %v3831
        %v3833 = vmul.f32 %v3830, %v3832
        %v3834 = vadd.f32 %v3830, %v3833
        %vm3835 = vweird.f32 %v3730
        %vm3836 = vweird.f32 %v3830
        %vm3837 = vmor %vm3835, %vm3836
        %v3838 = vsel %vm3837, %v3830, %v3834
        %v3839 = vand.u32 2147483647, %v3730
        %vm3840 = vcmp.eq.f32.partialorder %v3839, 8.507059e+37
        %v3841 = vand.u32 %v3730, 2147483648
        %v3842 = vor.u32 1.1754944e-38, %v3841
        %v3843 = vsel %vm3840, %v3842, %v3838
        %v3844 = vmul.f32 1.0, %v3843
        %v3845 = vrcp.pop %v3731
        %v3846 = vmul.f32 %v3731, %v3845
        %v3847 = vsub.f32 1.0, %v3846
        %v3848 = vmul.f32 %v3845, %v3847
        %v3849 = vadd.f32 %v3845, %v3848
        %vm3850 = vweird.f32 %v3731
        %vm3851 = vweird.f32 %v3845
        %vm3852 = vmor %vm3850, %vm3851
        %v3853 = vsel %vm3852, %v3845, %v3849
        %v3854 = vand.u32 2147483647, %v3731
        %vm3855 = vcmp.eq.f32.partialorder %v3854, 8.507059e+37
        %v3856 = vand.u32 %v3731, 2147483648
        %v3857 = vor.u32 1.1754944e-38, %v3856
        %v3858 = vsel %vm3855, %v3857, %v3853
        %v3859 = vmul.f32 1.0, %v3858
        %v3860 = vrcp.pop %v3732
        %v3861 = vmul.f32 %v3732, %v3860
        %v3862 = vsub.f32 1.0, %v3861
        %v3863 = vmul.f32 %v3860, %v3862
        %v3864 = vadd.f32 %v3860, %v3863
        %vm3865 = vweird.f32 %v3732
        %vm3866 = vweird.f32 %v3860
        %vm3867 = vmor %vm3865, %vm3866
        %v3868 = vsel %vm3867, %v3860, %v3864
        %v3869 = vand.u32 2147483647, %v3732
        %vm3870 = vcmp.eq.f32.partialorder %v3869, 8.507059e+37
        %v3871 = vand.u32 %v3732, 2147483648
        %v3872 = vor.u32 1.1754944e-38, %v3871
        %v3873 = vsel %vm3870, %v3872, %v3868
        %v3874 = vmul.f32 1.0, %v3873
        %v3875 = vrcp.pop %v3733
        %v3876 = vmul.f32 %v3733, %v3875
        %v3877 = vsub.f32 1.0, %v3876
        %v3878 = vmul.f32 %v3875, %v3877
        %v3879 = vadd.f32 %v3875, %v3878
        %vm3880 = vweird.f32 %v3733
        %vm3881 = vweird.f32 %v3875
        %vm3882 = vmor %vm3880, %vm3881
        %v3883 = vsel %vm3882, %v3875, %v3879
        %v3884 = vand.u32 2147483647, %v3733
        %vm3885 = vcmp.eq.f32.partialorder %v3884, 8.507059e+37
        %v3886 = vand.u32 %v3733, 2147483648
        %v3887 = vor.u32 1.1754944e-38, %v3886
        %v3888 = vsel %vm3885, %v3887, %v3883
        %v3889 = vmul.f32 1.0, %v3888
        %v3890 = vrcp.pop %v3734
        %v3891 = vmul.f32 %v3734, %v3890
        %v3892 = vsub.f32 1.0, %v3891
        %v3893 = vmul.f32 %v3890, %v3892
        %v3894 = vadd.f32 %v3890, %v3893
        %vm3895 = vweird.f32 %v3734
        %vm3896 = vweird.f32 %v3890
        %vm3897 = vmor %vm3895, %vm3896
        %v3898 = vsel %vm3897, %v3890, %v3894
        %v3899 = vand.u32 2147483647, %v3734
        %vm3900 = vcmp.eq.f32.partialorder %v3899, 8.507059e+37
        %v3901 = vand.u32 %v3734, 2147483648
        %v3902 = vor.u32 1.1754944e-38, %v3901
        %v3903 = vsel %vm3900, %v3902, %v3898
        %v3904 = vmul.f32 1.0, %v3903
        %v3905 = vrcp.pop %v3735
        %v3906 = vmul.f32 %v3735, %v3905
        %v3907 = vsub.f32 1.0, %v3906
        %v3908 = vmul.f32 %v3905, %v3907
        %v3909 = vadd.f32 %v3905, %v3908
        %vm3910 = vweird.f32 %v3735
        %vm3911 = vweird.f32 %v3905
        %vm3912 = vmor %vm3910, %vm3911
        %v3913 = vsel %vm3912, %v3905, %v3909
        %v3914 = vand.u32 2147483647, %v3735
        %vm3915 = vcmp.eq.f32.partialorder %v3914, 8.507059e+37
        %v3916 = vand.u32 %v3735, 2147483648
        %v3917 = vor.u32 1.1754944e-38, %v3916
        %v3918 = vsel %vm3915, %v3917, %v3913
        %v3919 = vmul.f32 1.0, %v3918
        %v3920 = vrcp.pop %v3736
        %v3921 = vmul.f32 %v3736, %v3920
        %v3922 = vsub.f32 1.0, %v3921
        %v3923 = vmul.f32 %v3920, %v3922
        %v3924 = vadd.f32 %v3920, %v3923
        %vm3925 = vweird.f32 %v3736
        %vm3926 = vweird.f32 %v3920
        %vm3927 = vmor %vm3925, %vm3926
        %v3928 = vsel %vm3927, %v3920, %v3924
        %v3929 = vand.u32 2147483647, %v3736
        %vm3930 = vcmp.eq.f32.partialorder %v3929, 8.507059e+37
        %v3931 = vand.u32 %v3736, 2147483648
        %v3932 = vor.u32 1.1754944e-38, %v3931
        %v3933 = vsel %vm3930, %v3932, %v3928
        %v3934 = vmul.f32 1.0, %v3933
        %v3935 = vrcp.pop %v3737
        %v3936 = vmul.f32 %v3737, %v3935
        %v3937 = vsub.f32 1.0, %v3936
        %v3938 = vmul.f32 %v3935, %v3937
        %v3939 = vadd.f32 %v3935, %v3938
        %vm3940 = vweird.f32 %v3737
        %vm3941 = vweird.f32 %v3935
        %vm3942 = vmor %vm3940, %vm3941
        %v3943 = vsel %vm3942, %v3935, %v3939
        %v3944 = vand.u32 2147483647, %v3737
        %vm3945 = vcmp.eq.f32.partialorder %v3944, 8.507059e+37
        %v3946 = vand.u32 %v3737, 2147483648
        %v3947 = vor.u32 1.1754944e-38, %v3946
        %v3948 = vsel %vm3945, %v3947, %v3943
        %v3949 = vmul.f32 1.0, %v3948
        %v3950 = vrcp.pop %v3738
        %v3951 = vmul.f32 %v3738, %v3950
        %v3952 = vsub.f32 1.0, %v3951
        %v3953 = vmul.f32 %v3950, %v3952
        %v3954 = vadd.f32 %v3950, %v3953
        %vm3955 = vweird.f32 %v3738
        %vm3956 = vweird.f32 %v3950
        %vm3957 = vmor %vm3955, %vm3956
        %v3958 = vsel %vm3957, %v3950, %v3954
        %v3959 = vand.u32 2147483647, %v3738
        %vm3960 = vcmp.eq.f32.partialorder %v3959, 8.507059e+37
        %v3961 = vand.u32 %v3738, 2147483648
        %v3962 = vor.u32 1.1754944e-38, %v3961
        %v3963 = vsel %vm3960, %v3962, %v3958
        %v3964 = vmul.f32 1.0, %v3963
        %v3965 = vrcp.pop %v3739
        %v3966 = vmul.f32 %v3739, %v3965
        %v3967 = vsub.f32 1.0, %v3966
        %v3968 = vmul.f32 %v3965, %v3967
        %v3969 = vadd.f32 %v3965, %v3968
        %vm3970 = vweird.f32 %v3739
        %vm3971 = vweird.f32 %v3965
        %vm3972 = vmor %vm3970, %vm3971
        %v3973 = vsel %vm3972, %v3965, %v3969
        %v3974 = vand.u32 2147483647, %v3739
        %vm3975 = vcmp.eq.f32.partialorder %v3974, 8.507059e+37
        %v3976 = vand.u32 %v3739, 2147483648
        %v3977 = vor.u32 1.1754944e-38, %v3976
        %v3978 = vsel %vm3975, %v3977, %v3973
        %v3979 = vmul.f32 1.0, %v3978
        %s3980 = scalar_lea.vmem %s307, 96
        %v3981 = vld [vmem:[%s3980] sm:$0x77]
        %v3982 = vld [vmem:[%s3980 + $0x8] sm:$0x77]
        %v3983 = vld [vmem:[%s3980 + $0x10] sm:$0x77]
        %v3984 = vld [vmem:[%s3980 + $0x18] sm:$0x77]
        %3989 = vst [vmem:[#allocation1] ss:$2 sm:$0xff] %v3981
        %s3990 = scalar_lea.vmem [#allocation1], 16
        %3991 = vst [vmem:[%s3990] ss:$2 sm:$0xff] %v3982
        %s3992 = scalar_lea.vmem [#allocation1], 32
        %3993 = vst [vmem:[%s3992] ss:$2 sm:$0xff] %v3983
        %s3994 = scalar_lea.vmem [#allocation1], 48
        %3995 = vst [vmem:[%s3994] ss:$2 sm:$0xff] %v3984
        %v3996 = vld.sshfl [vmem:[#allocation1] sm:$0xff pattern:$0x75316420]
        %v3997 = vld.sshfl [vmem:[#allocation1 + $0x8] sm:$0xff pattern:$0x75316420]
        %v3998 = vld.sshfl [vmem:[#allocation1 + $0x10] sm:$0xff pattern:$0x75316420]
        %v3999 = vld.sshfl [vmem:[#allocation1 + $0x18] sm:$0xff pattern:$0x75316420]
        %v4000 = vld.sshfl [vmem:[#allocation1 + $0x20] sm:$0xff pattern:$0x75316420]
        %v4001 = vld.sshfl [vmem:[#allocation1 + $0x28] sm:$0xff pattern:$0x75316420]
        %v4002 = vld.sshfl [vmem:[#allocation1 + $0x30] sm:$0xff pattern:$0x75316420]
        %v4003 = vld.sshfl [vmem:[#allocation1 + $0x38] sm:$0xff pattern:$0x75316420]
        %4012 = vrot.lane.b32.xlu0 %v3996, 33
        %v4013 = vpop.permute.xlu0 %4012
        %4014 = vrot.lane.b32.xlu0 %v3997, 33
        %v4015 = vpop.permute.xlu0 %4014
        %4016 = vrot.lane.b32.xlu0 %v3998, 33
        %v4017 = vpop.permute.xlu0 %4016
        %4018 = vrot.lane.b32.xlu0 %v3999, 33
        %v4019 = vpop.permute.xlu0 %4018
        %4020 = vrot.lane.b32.xlu0 %v4000, 33
        %v4021 = vpop.permute.xlu0 %4020
        %4022 = vrot.lane.b32.xlu0 %v4001, 33
        %v4023 = vpop.permute.xlu0 %4022
        %4024 = vrot.lane.b32.xlu0 %v4002, 33
        %v4025 = vpop.permute.xlu0 %4024
        %4026 = vrot.lane.b32.xlu0 %v4003, 33
        %v4027 = vpop.permute.xlu0 %4026
        %v4028 = vsel %vm441, %v4025, %v4027
        %v4029 = vsel %vm441, %v4023, %v4025
        %v4030 = vsel %vm441, %v4021, %v4023
        %v4031 = vsel %vm441, %v4019, %v4021
        %v4032 = vsel %vm441, %v4017, %v4019
        %v4033 = vsel %vm441, %v4015, %v4017
        %v4034 = vsel %vm441, %v4013, %v4015
        %v4035 = vsel %vm441, %v4027, %v4013
        %v4036 = vsel %vm346, %v4035, 0.0
        %v4037 = vsel %vm347, %v4034, 0.0
        %v4038 = vsel %vm348, %v4033, 0.0
        %v4039 = vsel %vm349, %v4032, 0.0
        %v4040 = vsel %vm350, %v4031, 0.0
        %v4041 = vsel %vm351, %v4030, 0.0
        %v4042 = vsel %vm352, %v4029, 0.0
        %v4043 = vsel %vm353, %v4028, 0.0
        %4044 = vst [vmem:[#allocation1] ss:$2 sm:$0xff] %v3981
        %s4045 = scalar_lea.vmem [#allocation1], 16
        %4046 = vst [vmem:[%s4045] ss:$2 sm:$0xff] %v3982
        %s4047 = scalar_lea.vmem [#allocation1], 32
        %4048 = vst [vmem:[%s4047] ss:$2 sm:$0xff] %v3983
        %s4049 = scalar_lea.vmem [#allocation1], 48
        %4050 = vst [vmem:[%s4049] ss:$2 sm:$0xff] %v3984
        %v4051 = vld.sshfl [vmem:[#allocation1] sm:$0xff pattern:$0x75316420]
        %v4052 = vld.sshfl [vmem:[#allocation1 + $0x8] sm:$0xff pattern:$0x75316420]
        %v4053 = vld.sshfl [vmem:[#allocation1 + $0x10] sm:$0xff pattern:$0x75316420]
        %v4054 = vld.sshfl [vmem:[#allocation1 + $0x18] sm:$0xff pattern:$0x75316420]
        %v4055 = vld.sshfl [vmem:[#allocation1 + $0x20] sm:$0xff pattern:$0x75316420]
        %v4056 = vld.sshfl [vmem:[#allocation1 + $0x28] sm:$0xff pattern:$0x75316420]
        %v4057 = vld.sshfl [vmem:[#allocation1 + $0x30] sm:$0xff pattern:$0x75316420]
        %v4058 = vld.sshfl [vmem:[#allocation1 + $0x38] sm:$0xff pattern:$0x75316420]
        %4067 = vrot.lane.b32.xlu0 %v4051, 32
        %v4068 = vpop.permute.xlu0 %4067
        %4069 = vrot.lane.b32.xlu0 %v4052, 32
        %v4070 = vpop.permute.xlu0 %4069
        %4071 = vrot.lane.b32.xlu0 %v4053, 32
        %v4072 = vpop.permute.xlu0 %4071
        %4073 = vrot.lane.b32.xlu0 %v4054, 32
        %v4074 = vpop.permute.xlu0 %4073
        %4075 = vrot.lane.b32.xlu0 %v4055, 32
        %v4076 = vpop.permute.xlu0 %4075
        %4077 = vrot.lane.b32.xlu0 %v4056, 32
        %v4078 = vpop.permute.xlu0 %4077
        %4079 = vrot.lane.b32.xlu0 %v4057, 32
        %v4080 = vpop.permute.xlu0 %4079
        %4081 = vrot.lane.b32.xlu0 %v4058, 32
        %v4082 = vpop.permute.xlu0 %4081
        %v4083 = vsel %vm497, %v4080, %v4082
        %v4084 = vsel %vm497, %v4078, %v4080
        %v4085 = vsel %vm497, %v4076, %v4078
        %v4086 = vsel %vm497, %v4074, %v4076
        %v4087 = vsel %vm497, %v4072, %v4074
        %v4088 = vsel %vm497, %v4070, %v4072
        %v4089 = vsel %vm497, %v4068, %v4070
        %v4090 = vsel %vm497, %v4082, %v4068
        %v4091 = vsel %vm330, %v4090, 0.0
        %v4092 = vsel %vm331, %v4089, 0.0
        %v4093 = vsel %vm332, %v4088, 0.0
        %v4094 = vsel %vm333, %v4087, 0.0
        %v4095 = vsel %vm334, %v4086, 0.0
        %v4096 = vsel %vm335, %v4085, 0.0
        %v4097 = vsel %vm336, %v4084, 0.0
        %v4098 = vsel %vm337, %v4083, 0.0
        %4099 = vst [vmem:[#allocation1] ss:$2 sm:$0xff] %v3981
        %s4100 = scalar_lea.vmem [#allocation1], 16
        %4101 = vst [vmem:[%s4100] ss:$2 sm:$0xff] %v3982
        %s4102 = scalar_lea.vmem [#allocation1], 32
        %4103 = vst [vmem:[%s4102] ss:$2 sm:$0xff] %v3983
        %s4104 = scalar_lea.vmem [#allocation1], 48
        %4105 = vst [vmem:[%s4104] ss:$2 sm:$0xff] %v3984
        %v4106 = vld.sshfl [vmem:[#allocation1] sm:$0xff pattern:$0x75316420]
        %v4107 = vld.sshfl [vmem:[#allocation1 + $0x8] sm:$0xff pattern:$0x75316420]
        %v4108 = vld.sshfl [vmem:[#allocation1 + $0x10] sm:$0xff pattern:$0x75316420]
        %v4109 = vld.sshfl [vmem:[#allocation1 + $0x18] sm:$0xff pattern:$0x75316420]
        %v4110 = vld.sshfl [vmem:[#allocation1 + $0x20] sm:$0xff pattern:$0x75316420]
        %v4111 = vld.sshfl [vmem:[#allocation1 + $0x28] sm:$0xff pattern:$0x75316420]
        %v4112 = vld.sshfl [vmem:[#allocation1 + $0x30] sm:$0xff pattern:$0x75316420]
        %v4113 = vld.sshfl [vmem:[#allocation1 + $0x38] sm:$0xff pattern:$0x75316420]
        %4122 = vrot.lane.b32.xlu0 %v4106, 31
        %v4123 = vpop.permute.xlu0 %4122
        %4124 = vrot.lane.b32.xlu0 %v4107, 31
        %v4125 = vpop.permute.xlu0 %4124
        %4126 = vrot.lane.b32.xlu0 %v4108, 31
        %v4127 = vpop.permute.xlu0 %4126
        %4128 = vrot.lane.b32.xlu0 %v4109, 31
        %v4129 = vpop.permute.xlu0 %4128
        %4130 = vrot.lane.b32.xlu0 %v4110, 31
        %v4131 = vpop.permute.xlu0 %4130
        %4132 = vrot.lane.b32.xlu0 %v4111, 31
        %v4133 = vpop.permute.xlu0 %4132
        %4134 = vrot.lane.b32.xlu0 %v4112, 31
        %v4135 = vpop.permute.xlu0 %4134
        %4136 = vrot.lane.b32.xlu0 %v4113, 31
        %v4137 = vpop.permute.xlu0 %4136
        %v4138 = vsel %vm553, %v4135, %v4137
        %v4139 = vsel %vm553, %v4133, %v4135
        %v4140 = vsel %vm553, %v4131, %v4133
        %v4141 = vsel %vm553, %v4129, %v4131
        %v4142 = vsel %vm553, %v4127, %v4129
        %v4143 = vsel %vm553, %v4125, %v4127
        %v4144 = vsel %vm553, %v4123, %v4125
        %v4145 = vsel %vm553, %v4137, %v4123
        %v4146 = vsel %vm362, %v4145, 0.0
        %v4147 = vsel %vm363, %v4144, 0.0
        %v4148 = vsel %vm364, %v4143, 0.0
        %v4149 = vsel %vm365, %v4142, 0.0
        %v4150 = vsel %vm366, %v4141, 0.0
        %v4151 = vsel %vm367, %v4140, 0.0
        %v4152 = vsel %vm368, %v4139, 0.0
        %v4153 = vsel %vm369, %v4138, 0.0
        %4154 = vst [vmem:[#allocation1] ss:$2 sm:$0xff] %v3981
        %s4155 = scalar_lea.vmem [#allocation1], 16
        %4156 = vst [vmem:[%s4155] ss:$2 sm:$0xff] %v3982
        %s4157 = scalar_lea.vmem [#allocation1], 32
        %4158 = vst [vmem:[%s4157] ss:$2 sm:$0xff] %v3983
        %s4159 = scalar_lea.vmem [#allocation1], 48
        %4160 = vst [vmem:[%s4159] ss:$2 sm:$0xff] %v3984
        %v4161 = vld.sshfl [vmem:[#allocation1] sm:$0xff pattern:$0x75316420]
        %v4162 = vld.sshfl [vmem:[#allocation1 + $0x8] sm:$0xff pattern:$0x75316420]
        %v4163 = vld.sshfl [vmem:[#allocation1 + $0x10] sm:$0xff pattern:$0x75316420]
        %v4164 = vld.sshfl [vmem:[#allocation1 + $0x18] sm:$0xff pattern:$0x75316420]
        %v4165 = vld.sshfl [vmem:[#allocation1 + $0x20] sm:$0xff pattern:$0x75316420]
        %v4166 = vld.sshfl [vmem:[#allocation1 + $0x28] sm:$0xff pattern:$0x75316420]
        %v4167 = vld.sshfl [vmem:[#allocation1 + $0x30] sm:$0xff pattern:$0x75316420]
        %v4168 = vld.sshfl [vmem:[#allocation1 + $0x38] sm:$0xff pattern:$0x75316420]
        %4177 = vrot.lane.b32.xlu0 %v4161, 1
        %v4178 = vpop.permute.xlu0 %4177
        %4179 = vrot.lane.b32.xlu0 %v4162, 1
        %v4180 = vpop.permute.xlu0 %4179
        %4181 = vrot.lane.b32.xlu0 %v4163, 1
        %v4182 = vpop.permute.xlu0 %4181
        %4183 = vrot.lane.b32.xlu0 %v4164, 1
        %v4184 = vpop.permute.xlu0 %4183
        %4185 = vrot.lane.b32.xlu0 %v4165, 1
        %v4186 = vpop.permute.xlu0 %4185
        %4187 = vrot.lane.b32.xlu0 %v4166, 1
        %v4188 = vpop.permute.xlu0 %4187
        %4189 = vrot.lane.b32.xlu0 %v4167, 1
        %v4190 = vpop.permute.xlu0 %4189
        %4191 = vrot.lane.b32.xlu0 %v4168, 1
        %v4192 = vpop.permute.xlu0 %4191
        %v4193 = vsel %vm609, %v4190, %v4192
        %v4194 = vsel %vm609, %v4188, %v4190
        %v4195 = vsel %vm609, %v4186, %v4188
        %v4196 = vsel %vm609, %v4184, %v4186
        %v4197 = vsel %vm609, %v4182, %v4184
        %v4198 = vsel %vm609, %v4180, %v4182
        %v4199 = vsel %vm609, %v4178, %v4180
        %v4200 = vsel %vm609, %v4192, %v4178
        %v4201 = vsel %vm338, %v4200, 0.0
        %v4202 = vsel %vm339, %v4199, 0.0
        %v4203 = vsel %vm340, %v4198, 0.0
        %v4204 = vsel %vm341, %v4197, 0.0
        %v4205 = vsel %vm342, %v4196, 0.0
        %v4206 = vsel %vm343, %v4195, 0.0
        %v4207 = vsel %vm344, %v4194, 0.0
        %v4208 = vsel %vm345, %v4193, 0.0
        %4209 = vst [vmem:[#allocation1] ss:$2 sm:$0xff] %v3981
        %s4210 = scalar_lea.vmem [#allocation1], 16
        %4211 = vst [vmem:[%s4210] ss:$2 sm:$0xff] %v3982
        %s4212 = scalar_lea.vmem [#allocation1], 32
        %4213 = vst [vmem:[%s4212] ss:$2 sm:$0xff] %v3983
        %s4214 = scalar_lea.vmem [#allocation1], 48
        %4215 = vst [vmem:[%s4214] ss:$2 sm:$0xff] %v3984
        %v4216 = vld.sshfl [vmem:[#allocation1] sm:$0xff pattern:$0x75316420]
        %v4217 = vld.sshfl [vmem:[#allocation1 + $0x8] sm:$0xff pattern:$0x75316420]
        %v4218 = vld.sshfl [vmem:[#allocation1 + $0x10] sm:$0xff pattern:$0x75316420]
        %v4219 = vld.sshfl [vmem:[#allocation1 + $0x18] sm:$0xff pattern:$0x75316420]
        %v4220 = vld.sshfl [vmem:[#allocation1 + $0x20] sm:$0xff pattern:$0x75316420]
        %v4221 = vld.sshfl [vmem:[#allocation1 + $0x28] sm:$0xff pattern:$0x75316420]
        %v4222 = vld.sshfl [vmem:[#allocation1 + $0x30] sm:$0xff pattern:$0x75316420]
        %v4223 = vld.sshfl [vmem:[#allocation1 + $0x38] sm:$0xff pattern:$0x75316420]
        %4232 = vrot.lane.b32.xlu0 %v4216, 127
        %v4233 = vpop.permute.xlu0 %4232
        %4234 = vrot.lane.b32.xlu0 %v4217, 127
        %v4235 = vpop.permute.xlu0 %4234
        %4236 = vrot.lane.b32.xlu0 %v4218, 127
        %v4237 = vpop.permute.xlu0 %4236
        %4238 = vrot.lane.b32.xlu0 %v4219, 127
        %v4239 = vpop.permute.xlu0 %4238
        %4240 = vrot.lane.b32.xlu0 %v4220, 127
        %v4241 = vpop.permute.xlu0 %4240
        %4242 = vrot.lane.b32.xlu0 %v4221, 127
        %v4243 = vpop.permute.xlu0 %4242
        %4244 = vrot.lane.b32.xlu0 %v4222, 127
        %v4245 = vpop.permute.xlu0 %4244
        %4246 = vrot.lane.b32.xlu0 %v4223, 127
        %v4247 = vpop.permute.xlu0 %4246
        %v4248 = vsel %vm665, %v4245, %v4247
        %v4249 = vsel %vm665, %v4243, %v4245
        %v4250 = vsel %vm665, %v4241, %v4243
        %v4251 = vsel %vm665, %v4239, %v4241
        %v4252 = vsel %vm665, %v4237, %v4239
        %v4253 = vsel %vm665, %v4235, %v4237
        %v4254 = vsel %vm665, %v4233, %v4235
        %v4255 = vsel %vm665, %v4247, %v4233
        %v4256 = vsel %vm354, %v4254, 0.0
        %v4257 = vsel %vm355, %v4253, 0.0
        %v4258 = vsel %vm356, %v4252, 0.0
        %v4259 = vsel %vm357, %v4251, 0.0
        %v4260 = vsel %vm358, %v4250, 0.0
        %v4261 = vsel %vm359, %v4249, 0.0
        %v4262 = vsel %vm360, %v4248, 0.0
        %v4263 = vsel %vm361, %v4255, 0.0
        %4264 = vst [vmem:[#allocation1] ss:$2 sm:$0xff] %v3981
        %s4265 = scalar_lea.vmem [#allocation1], 16
        %4266 = vst [vmem:[%s4265] ss:$2 sm:$0xff] %v3982
        %s4267 = scalar_lea.vmem [#allocation1], 32
        %4268 = vst [vmem:[%s4267] ss:$2 sm:$0xff] %v3983
        %s4269 = scalar_lea.vmem [#allocation1], 48
        %4270 = vst [vmem:[%s4269] ss:$2 sm:$0xff] %v3984
        %v4271 = vld.sshfl [vmem:[#allocation1] sm:$0xff pattern:$0x75316420]
        %v4272 = vld.sshfl [vmem:[#allocation1 + $0x8] sm:$0xff pattern:$0x75316420]
        %v4273 = vld.sshfl [vmem:[#allocation1 + $0x10] sm:$0xff pattern:$0x75316420]
        %v4274 = vld.sshfl [vmem:[#allocation1 + $0x18] sm:$0xff pattern:$0x75316420]
        %v4275 = vld.sshfl [vmem:[#allocation1 + $0x20] sm:$0xff pattern:$0x75316420]
        %v4276 = vld.sshfl [vmem:[#allocation1 + $0x28] sm:$0xff pattern:$0x75316420]
        %v4277 = vld.sshfl [vmem:[#allocation1 + $0x30] sm:$0xff pattern:$0x75316420]
        %v4278 = vld.sshfl [vmem:[#allocation1 + $0x38] sm:$0xff pattern:$0x75316420]
        %4287 = vrot.lane.b32.xlu0 %v4271, 97
        %v4288 = vpop.permute.xlu0 %4287
        %4289 = vrot.lane.b32.xlu0 %v4272, 97
        %v4290 = vpop.permute.xlu0 %4289
        %4291 = vrot.lane.b32.xlu0 %v4273, 97
        %v4292 = vpop.permute.xlu0 %4291
        %4293 = vrot.lane.b32.xlu0 %v4274, 97
        %v4294 = vpop.permute.xlu0 %4293
        %4295 = vrot.lane.b32.xlu0 %v4275, 97
        %v4296 = vpop.permute.xlu0 %4295
        %4297 = vrot.lane.b32.xlu0 %v4276, 97
        %v4298 = vpop.permute.xlu0 %4297
        %4299 = vrot.lane.b32.xlu0 %v4277, 97
        %v4300 = vpop.permute.xlu0 %4299
        %4301 = vrot.lane.b32.xlu0 %v4278, 97
        %v4302 = vpop.permute.xlu0 %4301
        %v4303 = vsel %vm721, %v4300, %v4302
        %v4304 = vsel %vm721, %v4298, %v4300
        %v4305 = vsel %vm721, %v4296, %v4298
        %v4306 = vsel %vm721, %v4294, %v4296
        %v4307 = vsel %vm721, %v4292, %v4294
        %v4308 = vsel %vm721, %v4290, %v4292
        %v4309 = vsel %vm721, %v4288, %v4290
        %v4310 = vsel %vm721, %v4302, %v4288
        %v4311 = vsel %vm378, %v4309, 0.0
        %v4312 = vsel %vm379, %v4308, 0.0
        %v4313 = vsel %vm380, %v4307, 0.0
        %v4314 = vsel %vm381, %v4306, 0.0
        %v4315 = vsel %vm382, %v4305, 0.0
        %v4316 = vsel %vm383, %v4304, 0.0
        %v4317 = vsel %vm384, %v4303, 0.0
        %v4318 = vsel %vm385, %v4310, 0.0
        %4319 = vst [vmem:[#allocation1] ss:$2 sm:$0xff] %v3981
        %s4320 = scalar_lea.vmem [#allocation1], 16
        %4321 = vst [vmem:[%s4320] ss:$2 sm:$0xff] %v3982
        %s4322 = scalar_lea.vmem [#allocation1], 32
        %4323 = vst [vmem:[%s4322] ss:$2 sm:$0xff] %v3983
        %s4324 = scalar_lea.vmem [#allocation1], 48
        %4325 = vst [vmem:[%s4324] ss:$2 sm:$0xff] %v3984
        %v4326 = vld.sshfl [vmem:[#allocation1] sm:$0xff pattern:$0x75316420]
        %v4327 = vld.sshfl [vmem:[#allocation1 + $0x8] sm:$0xff pattern:$0x75316420]
        %v4328 = vld.sshfl [vmem:[#allocation1 + $0x10] sm:$0xff pattern:$0x75316420]
        %v4329 = vld.sshfl [vmem:[#allocation1 + $0x18] sm:$0xff pattern:$0x75316420]
        %v4330 = vld.sshfl [vmem:[#allocation1 + $0x20] sm:$0xff pattern:$0x75316420]
        %v4331 = vld.sshfl [vmem:[#allocation1 + $0x28] sm:$0xff pattern:$0x75316420]
        %v4332 = vld.sshfl [vmem:[#allocation1 + $0x30] sm:$0xff pattern:$0x75316420]
        %v4333 = vld.sshfl [vmem:[#allocation1 + $0x38] sm:$0xff pattern:$0x75316420]
        %4342 = vrot.lane.b32.xlu0 %v4326, 96
        %v4343 = vpop.permute.xlu0 %4342
        %4344 = vrot.lane.b32.xlu0 %v4327, 96
        %v4345 = vpop.permute.xlu0 %4344
        %4346 = vrot.lane.b32.xlu0 %v4328, 96
        %v4347 = vpop.permute.xlu0 %4346
        %4348 = vrot.lane.b32.xlu0 %v4329, 96
        %v4349 = vpop.permute.xlu0 %4348
        %4350 = vrot.lane.b32.xlu0 %v4330, 96
        %v4351 = vpop.permute.xlu0 %4350
        %4352 = vrot.lane.b32.xlu0 %v4331, 96
        %v4353 = vpop.permute.xlu0 %4352
        %4354 = vrot.lane.b32.xlu0 %v4332, 96
        %v4355 = vpop.permute.xlu0 %4354
        %4356 = vrot.lane.b32.xlu0 %v4333, 96
        %v4357 = vpop.permute.xlu0 %4356
        %v4358 = vsel %vm777, %v4355, %v4357
        %v4359 = vsel %vm777, %v4353, %v4355
        %v4360 = vsel %vm777, %v4351, %v4353
        %v4361 = vsel %vm777, %v4349, %v4351
        %v4362 = vsel %vm777, %v4347, %v4349
        %v4363 = vsel %vm777, %v4345, %v4347
        %v4364 = vsel %vm777, %v4343, %v4345
        %v4365 = vsel %vm777, %v4357, %v4343
        %v4366 = vsel %vm370, %v4364, 0.0
        %v4367 = vsel %vm371, %v4363, 0.0
        %v4368 = vsel %vm372, %v4362, 0.0
        %v4369 = vsel %vm373, %v4361, 0.0
        %v4370 = vsel %vm374, %v4360, 0.0
        %v4371 = vsel %vm375, %v4359, 0.0
        %v4372 = vsel %vm376, %v4358, 0.0
        %v4373 = vsel %vm377, %v4365, 0.0
        %4374 = vst [vmem:[#allocation1] ss:$2 sm:$0xff] %v3981
        %s4375 = scalar_lea.vmem [#allocation1], 16
        %4376 = vst [vmem:[%s4375] ss:$2 sm:$0xff] %v3982
        %s4377 = scalar_lea.vmem [#allocation1], 32
        %4378 = vst [vmem:[%s4377] ss:$2 sm:$0xff] %v3983
        %s4379 = scalar_lea.vmem [#allocation1], 48
        %4380 = vst [vmem:[%s4379] ss:$2 sm:$0xff] %v3984
        %v4381 = vld.sshfl [vmem:[#allocation1] sm:$0xff pattern:$0x75316420]
        %v4382 = vld.sshfl [vmem:[#allocation1 + $0x8] sm:$0xff pattern:$0x75316420]
        %v4383 = vld.sshfl [vmem:[#allocation1 + $0x10] sm:$0xff pattern:$0x75316420]
        %v4384 = vld.sshfl [vmem:[#allocation1 + $0x18] sm:$0xff pattern:$0x75316420]
        %v4385 = vld.sshfl [vmem:[#allocation1 + $0x20] sm:$0xff pattern:$0x75316420]
        %v4386 = vld.sshfl [vmem:[#allocation1 + $0x28] sm:$0xff pattern:$0x75316420]
        %v4387 = vld.sshfl [vmem:[#allocation1 + $0x30] sm:$0xff pattern:$0x75316420]
        %v4388 = vld.sshfl [vmem:[#allocation1 + $0x38] sm:$0xff pattern:$0x75316420]
        %4397 = vrot.lane.b32.xlu0 %v4381, 95
        %v4398 = vpop.permute.xlu0 %4397
        %4399 = vrot.lane.b32.xlu0 %v4382, 95
        %v4400 = vpop.permute.xlu0 %4399
        %4401 = vrot.lane.b32.xlu0 %v4383, 95
        %v4402 = vpop.permute.xlu0 %4401
        %4403 = vrot.lane.b32.xlu0 %v4384, 95
        %v4404 = vpop.permute.xlu0 %4403
        %4405 = vrot.lane.b32.xlu0 %v4385, 95
        %v4406 = vpop.permute.xlu0 %4405
        %4407 = vrot.lane.b32.xlu0 %v4386, 95
        %v4408 = vpop.permute.xlu0 %4407
        %4409 = vrot.lane.b32.xlu0 %v4387, 95
        %v4410 = vpop.permute.xlu0 %4409
        %4411 = vrot.lane.b32.xlu0 %v4388, 95
        %v4412 = vpop.permute.xlu0 %4411
        %v4413 = vsel %vm833, %v4410, %v4412
        %v4414 = vsel %vm833, %v4408, %v4410
        %v4415 = vsel %vm833, %v4406, %v4408
        %v4416 = vsel %vm833, %v4404, %v4406
        %v4417 = vsel %vm833, %v4402, %v4404
        %v4418 = vsel %vm833, %v4400, %v4402
        %v4419 = vsel %vm833, %v4398, %v4400
        %v4420 = vsel %vm833, %v4412, %v4398
        %v4421 = vsel %vm386, %v4419, 0.0
        %v4422 = vsel %vm387, %v4418, 0.0
        %v4423 = vsel %vm388, %v4417, 0.0
        %v4424 = vsel %vm389, %v4416, 0.0
        %v4425 = vsel %vm390, %v4415, 0.0
        %v4426 = vsel %vm391, %v4414, 0.0
        %v4427 = vsel %vm392, %v4413, 0.0
        %v4428 = vsel %vm393, %v4420, 0.0
        %v4437 = vrot.slane %v4091, 5
        %v4438 = vrot.slane %v4092, 5
        %v4439 = vrot.slane %v4093, 5
        %v4440 = vrot.slane %v4094, 5
        %v4441 = vrot.slane %v4095, 5
        %v4442 = vrot.slane %v4096, 5
        %v4443 = vrot.slane %v4097, 5
        %v4444 = vrot.slane %v4098, 5
        %v4461 = vrot.slane %v4146, 2
        %v4462 = vrot.slane %v4147, 2
        %v4463 = vrot.slane %v4148, 2
        %v4464 = vrot.slane %v4149, 2
        %v4465 = vrot.slane %v4150, 2
        %v4466 = vrot.slane %v4151, 2
        %v4467 = vrot.slane %v4152, 2
        %v4468 = vrot.slane %v4153, 2
        %v4485 = vrot.slane %v4201, 7
        %v4486 = vrot.slane %v4202, 7
        %v4487 = vrot.slane %v4203, 7
        %v4488 = vrot.slane %v4204, 7
        %v4489 = vrot.slane %v4205, 7
        %v4490 = vrot.slane %v4206, 7
        %v4491 = vrot.slane %v4207, 7
        %v4492 = vrot.slane %v4208, 7
        %s4501 = scalar_lea.vmem [#allocation1], 1
        %4502 = vst [vmem:[%s4501] ss:$2 sm:$0xff] %v3981
        %s4503 = scalar_lea.vmem [#allocation1], 17
        %4504 = vst [vmem:[%s4503] ss:$2 sm:$0xff] %v3982
        %s4505 = scalar_lea.vmem [#allocation1], 33
        %4506 = vst [vmem:[%s4505] ss:$2 sm:$0xff] %v3983
        %s4507 = scalar_lea.vmem [#allocation1], 49
        %4508 = vst [vmem:[%s4507] ss:$2 sm:$0xff] %v3984
        %v4509 = vld.sshfl [vmem:[#allocation1] sm:$0xff pattern:$0x75316420]
        %v4510 = vld.sshfl [vmem:[#allocation1 + $0x8] sm:$0xff pattern:$0x75316420]
        %v4511 = vld.sshfl [vmem:[#allocation1 + $0x10] sm:$0xff pattern:$0x75316420]
        %v4512 = vld.sshfl [vmem:[#allocation1 + $0x18] sm:$0xff pattern:$0x75316420]
        %v4513 = vld.sshfl [vmem:[#allocation1 + $0x20] sm:$0xff pattern:$0x75316420]
        %v4514 = vld.sshfl [vmem:[#allocation1 + $0x28] sm:$0xff pattern:$0x75316420]
        %v4515 = vld.sshfl [vmem:[#allocation1 + $0x30] sm:$0xff pattern:$0x75316420]
        %v4516 = vld.sshfl [vmem:[#allocation1 + $0x38] sm:$0xff pattern:$0x75316420]
        %v4533 = vrot.slane %v4256, 1
        %v4534 = vrot.slane %v4257, 1
        %v4535 = vrot.slane %v4258, 1
        %v4536 = vrot.slane %v4259, 1
        %v4537 = vrot.slane %v4260, 1
        %v4538 = vrot.slane %v4261, 1
        %v4539 = vrot.slane %v4262, 1
        %v4540 = vrot.slane %v4263, 1
        %v4557 = vrot.slane %v4311, 6
        %v4558 = vrot.slane %v4312, 6
        %v4559 = vrot.slane %v4313, 6
        %v4560 = vrot.slane %v4314, 6
        %v4561 = vrot.slane %v4315, 6
        %v4562 = vrot.slane %v4316, 6
        %v4563 = vrot.slane %v4317, 6
        %v4564 = vrot.slane %v4318, 6
        %v4581 = vrot.slane %v4366, 3
        %v4582 = vrot.slane %v4367, 3
        %v4583 = vrot.slane %v4368, 3
        %v4584 = vrot.slane %v4369, 3
        %v4585 = vrot.slane %v4370, 3
        %v4586 = vrot.slane %v4371, 3
        %v4587 = vrot.slane %v4372, 3
        %v4588 = vrot.slane %v4373, 3
        %v4597 = vsel %vm1018, %v4036, %v4437
        %v4598 = vsel %vm1018, %v4037, %v4438
        %v4599 = vsel %vm1018, %v4038, %v4439
        %v4600 = vsel %vm1018, %v4039, %v4440
        %v4601 = vsel %vm1018, %v4040, %v4441
        %v4602 = vsel %vm1018, %v4041, %v4442
        %v4603 = vsel %vm1018, %v4042, %v4443
        %v4604 = vsel %vm1018, %v4043, %v4444
        %v4605 = vsel %vm1027, %v4597, %v4461
        %v4606 = vsel %vm1027, %v4598, %v4462
        %v4607 = vsel %vm1027, %v4599, %v4463
        %v4608 = vsel %vm1027, %v4600, %v4464
        %v4609 = vsel %vm1027, %v4601, %v4465
        %v4610 = vsel %vm1027, %v4602, %v4466
        %v4611 = vsel %vm1027, %v4603, %v4467
        %v4612 = vsel %vm1027, %v4604, %v4468
        %v4613 = vsel %vm1036, %v4461, %v4485
        %v4614 = vsel %vm1036, %v4462, %v4486
        %v4615 = vsel %vm1036, %v4463, %v4487
        %v4616 = vsel %vm1036, %v4464, %v4488
        %v4617 = vsel %vm1036, %v4465, %v4489
        %v4618 = vsel %vm1036, %v4466, %v4490
        %v4619 = vsel %vm1036, %v4467, %v4491
        %v4620 = vsel %vm1036, %v4468, %v4492
        %v4621 = vsel %vm1045, %v4613, %v4509
        %v4622 = vsel %vm1045, %v4614, %v4510
        %v4623 = vsel %vm1045, %v4615, %v4511
        %v4624 = vsel %vm1045, %v4616, %v4512
        %v4625 = vsel %vm1045, %v4617, %v4513
        %v4626 = vsel %vm1045, %v4618, %v4514
        %v4627 = vsel %vm1045, %v4619, %v4515
        %v4628 = vsel %vm1045, %v4620, %v4516
        %v4629 = vsel %vm1054, %v4621, %v4533
        %v4630 = vsel %vm1054, %v4622, %v4534
        %v4631 = vsel %vm1054, %v4623, %v4535
        %v4632 = vsel %vm1054, %v4624, %v4536
        %v4633 = vsel %vm1054, %v4625, %v4537
        %v4634 = vsel %vm1054, %v4626, %v4538
        %v4635 = vsel %vm1054, %v4627, %v4539
        %v4636 = vsel %vm1054, %v4628, %v4540
        %v4637 = vsel %vm1063, %v4533, %v4557
        %v4638 = vsel %vm1063, %v4534, %v4558
        %v4639 = vsel %vm1063, %v4535, %v4559
        %v4640 = vsel %vm1063, %v4536, %v4560
        %v4641 = vsel %vm1063, %v4537, %v4561
        %v4642 = vsel %vm1063, %v4538, %v4562
        %v4643 = vsel %vm1063, %v4539, %v4563
        %v4644 = vsel %vm1063, %v4540, %v4564
        %v4645 = vsel %vm1072, %v4637, %v4581
        %v4646 = vsel %vm1072, %v4638, %v4582
        %v4647 = vsel %vm1072, %v4639, %v4583
        %v4648 = vsel %vm1072, %v4640, %v4584
        %v4649 = vsel %vm1072, %v4641, %v4585
        %v4650 = vsel %vm1072, %v4642, %v4586
        %v4651 = vsel %vm1072, %v4643, %v4587
        %v4652 = vsel %vm1072, %v4644, %v4588
        %v4654 = vsel %vm1018, %v4421, 0
        %v4657 = vsel %vm1018, %v4422, 0
        %v4660 = vsel %vm1018, %v4423, 0
        %v4663 = vsel %vm1018, %v4424, 0
        %v4666 = vsel %vm1018, %v4425, 0
        %v4669 = vsel %vm1018, %v4426, 0
        %v4672 = vsel %vm1018, %v4427, 0
        %v4675 = vsel %vm1018, %v4428, 0
        %4677 = vmatpush.msra.mxu0 0.0
        %4678 = vmatpush.msra.mxu0 0.0
        %4679 = vmatpush.msra.mxu0 0.0
        %4680 = vmatpush.msra.mxu0 0.0
        %4681 = vmatpush.msra.mxu0 0.0
        %4682 = vmatpush.msra.mxu0 0.0
        %4683 = vmatpush.msra.mxu0 0.0
        %4684 = vmatpush.msra.mxu0 0.0
        %4685 = vmatpush.msra.mxu0 0.0
        %4686 = vmatpush.msra.mxu0 0.0
        %4687 = vmatpush.msra.mxu0 0.0
        %4688 = vmatpush.msra.mxu0 0.0
        %4689 = vmatpush.msra.mxu0 %v4654
        %4690 = vmatpush.msra.mxu0 %v4645
        %4691 = vmatpush.msra.mxu0 %v4629
        %4692 = vmatpush.msra.mxu0 %v4605
        %4693 = vmatmul.f32.gmra.mxu0 %v1093
        %v4694 = vpop.f32.mrf.mxu0
        %v4695 = vadd.f32 %v1084, %v4694
        %4696 = vmatmul.f32.gmra.mxu0 %v1096
        %v4697 = vpop.f32.mrf.mxu0
        %v4698 = vadd.f32 %v1089, %v4697
        %4699 = vdwg.mxu0
        %4700 = vmatpush.msra.mxu0 0.0
        %4701 = vmatpush.msra.mxu0 0.0
        %4702 = vmatpush.msra.mxu0 0.0
        %4703 = vmatpush.msra.mxu0 0.0
        %4704 = vmatpush.msra.mxu0 0.0
        %4705 = vmatpush.msra.mxu0 0.0
        %4706 = vmatpush.msra.mxu0 0.0
        %4707 = vmatpush.msra.mxu0 0.0
        %4708 = vmatpush.msra.mxu0 0.0
        %4709 = vmatpush.msra.mxu0 0.0
        %4710 = vmatpush.msra.mxu0 0.0
        %4711 = vmatpush.msra.mxu0 0.0
        %4712 = vmatpush.msra.mxu0 %v4657
        %4713 = vmatpush.msra.mxu0 %v4646
        %4714 = vmatpush.msra.mxu0 %v4630
        %4715 = vmatpush.msra.mxu0 %v4606
        %4716 = vmatmul.f32.gmra.mxu0 %v1093
        %v4717 = vpop.f32.mrf.mxu0
        %v4718 = vadd.f32 %v1084, %v4717
        %4719 = vmatmul.f32.gmra.mxu0 %v1096
        %v4720 = vpop.f32.mrf.mxu0
        %v4721 = vadd.f32 %v1089, %v4720
        %4722 = vdwg.mxu0
        %4723 = vmatpush.msra.mxu0 0.0
        %4724 = vmatpush.msra.mxu0 0.0
        %4725 = vmatpush.msra.mxu0 0.0
        %4726 = vmatpush.msra.mxu0 0.0
        %4727 = vmatpush.msra.mxu0 0.0
        %4728 = vmatpush.msra.mxu0 0.0
        %4729 = vmatpush.msra.mxu0 0.0
        %4730 = vmatpush.msra.mxu0 0.0
        %4731 = vmatpush.msra.mxu0 0.0
        %4732 = vmatpush.msra.mxu0 0.0
        %4733 = vmatpush.msra.mxu0 0.0
        %4734 = vmatpush.msra.mxu0 0.0
        %4735 = vmatpush.msra.mxu0 %v4660
        %4736 = vmatpush.msra.mxu0 %v4647
        %4737 = vmatpush.msra.mxu0 %v4631
        %4738 = vmatpush.msra.mxu0 %v4607
        %4739 = vmatmul.f32.gmra.mxu0 %v1093
        %v4740 = vpop.f32.mrf.mxu0
        %v4741 = vadd.f32 %v1084, %v4740
        %4742 = vmatmul.f32.gmra.mxu0 %v1096
        %v4743 = vpop.f32.mrf.mxu0
        %v4744 = vadd.f32 %v1089, %v4743
        %4745 = vdwg.mxu0
        %4746 = vmatpush.msra.mxu0 0.0
        %4747 = vmatpush.msra.mxu0 0.0
        %4748 = vmatpush.msra.mxu0 0.0
        %4749 = vmatpush.msra.mxu0 0.0
        %4750 = vmatpush.msra.mxu0 0.0
        %4751 = vmatpush.msra.mxu0 0.0
        %4752 = vmatpush.msra.mxu0 0.0
        %4753 = vmatpush.msra.mxu0 0.0
        %4754 = vmatpush.msra.mxu0 0.0
        %4755 = vmatpush.msra.mxu0 0.0
        %4756 = vmatpush.msra.mxu0 0.0
        %4757 = vmatpush.msra.mxu0 0.0
        %4758 = vmatpush.msra.mxu0 %v4663
        %4759 = vmatpush.msra.mxu0 %v4648
        %4760 = vmatpush.msra.mxu0 %v4632
        %4761 = vmatpush.msra.mxu0 %v4608
        %4762 = vmatmul.f32.gmra.mxu0 %v1093
        %v4763 = vpop.f32.mrf.mxu0
        %v4764 = vadd.f32 %v1084, %v4763
        %4765 = vmatmul.f32.gmra.mxu0 %v1096
        %v4766 = vpop.f32.mrf.mxu0
        %v4767 = vadd.f32 %v1089, %v4766
        %4768 = vdwg.mxu0
        %4769 = vmatpush.msra.mxu0 0.0
        %4770 = vmatpush.msra.mxu0 0.0
        %4771 = vmatpush.msra.mxu0 0.0
        %4772 = vmatpush.msra.mxu0 0.0
        %4773 = vmatpush.msra.mxu0 0.0
        %4774 = vmatpush.msra.mxu0 0.0
        %4775 = vmatpush.msra.mxu0 0.0
        %4776 = vmatpush.msra.mxu0 0.0
        %4777 = vmatpush.msra.mxu0 0.0
        %4778 = vmatpush.msra.mxu0 0.0
        %4779 = vmatpush.msra.mxu0 0.0
        %4780 = vmatpush.msra.mxu0 0.0
        %4781 = vmatpush.msra.mxu0 %v4666
        %4782 = vmatpush.msra.mxu0 %v4649
        %4783 = vmatpush.msra.mxu0 %v4633
        %4784 = vmatpush.msra.mxu0 %v4609
        %4785 = vmatmul.f32.gmra.mxu0 %v1093
        %v4786 = vpop.f32.mrf.mxu0
        %v4787 = vadd.f32 %v1084, %v4786
        %4788 = vmatmul.f32.gmra.mxu0 %v1096
        %v4789 = vpop.f32.mrf.mxu0
        %v4790 = vadd.f32 %v1089, %v4789
        %4791 = vdwg.mxu0
        %4792 = vmatpush.msra.mxu0 0.0
        %4793 = vmatpush.msra.mxu0 0.0
        %4794 = vmatpush.msra.mxu0 0.0
        %4795 = vmatpush.msra.mxu0 0.0
        %4796 = vmatpush.msra.mxu0 0.0
        %4797 = vmatpush.msra.mxu0 0.0
        %4798 = vmatpush.msra.mxu0 0.0
        %4799 = vmatpush.msra.mxu0 0.0
        %4800 = vmatpush.msra.mxu0 0.0
        %4801 = vmatpush.msra.mxu0 0.0
        %4802 = vmatpush.msra.mxu0 0.0
        %4803 = vmatpush.msra.mxu0 0.0
        %4804 = vmatpush.msra.mxu0 %v4669
        %4805 = vmatpush.msra.mxu0 %v4650
        %4806 = vmatpush.msra.mxu0 %v4634
        %4807 = vmatpush.msra.mxu0 %v4610
        %4808 = vmatmul.f32.gmra.mxu0 %v1093
        %v4809 = vpop.f32.mrf.mxu0
        %v4810 = vadd.f32 %v1084, %v4809
        %4811 = vmatmul.f32.gmra.mxu0 %v1096
        %v4812 = vpop.f32.mrf.mxu0
        %v4813 = vadd.f32 %v1089, %v4812
        %4814 = vdwg.mxu0
        %4815 = vmatpush.msra.mxu0 0.0
        %4816 = vmatpush.msra.mxu0 0.0
        %4817 = vmatpush.msra.mxu0 0.0
        %4818 = vmatpush.msra.mxu0 0.0
        %4819 = vmatpush.msra.mxu0 0.0
        %4820 = vmatpush.msra.mxu0 0.0
        %4821 = vmatpush.msra.mxu0 0.0
        %4822 = vmatpush.msra.mxu0 0.0
        %4823 = vmatpush.msra.mxu0 0.0
        %4824 = vmatpush.msra.mxu0 0.0
        %4825 = vmatpush.msra.mxu0 0.0
        %4826 = vmatpush.msra.mxu0 0.0
        %4827 = vmatpush.msra.mxu0 %v4672
        %4828 = vmatpush.msra.mxu0 %v4651
        %4829 = vmatpush.msra.mxu0 %v4635
        %4830 = vmatpush.msra.mxu0 %v4611
        %4831 = vmatmul.f32.gmra.mxu0 %v1093
        %v4832 = vpop.f32.mrf.mxu0
        %v4833 = vadd.f32 %v1084, %v4832
        %4834 = vmatmul.f32.gmra.mxu0 %v1096
        %v4835 = vpop.f32.mrf.mxu0
        %v4836 = vadd.f32 %v1089, %v4835
        %4837 = vdwg.mxu0
        %4838 = vmatpush.msra.mxu0 0.0
        %4839 = vmatpush.msra.mxu0 0.0
        %4840 = vmatpush.msra.mxu0 0.0
        %4841 = vmatpush.msra.mxu0 0.0
        %4842 = vmatpush.msra.mxu0 0.0
        %4843 = vmatpush.msra.mxu0 0.0
        %4844 = vmatpush.msra.mxu0 0.0
        %4845 = vmatpush.msra.mxu0 0.0
        %4846 = vmatpush.msra.mxu0 0.0
        %4847 = vmatpush.msra.mxu0 0.0
        %4848 = vmatpush.msra.mxu0 0.0
        %4849 = vmatpush.msra.mxu0 0.0
        %4850 = vmatpush.msra.mxu0 %v4675
        %4851 = vmatpush.msra.mxu0 %v4652
        %4852 = vmatpush.msra.mxu0 %v4636
        %4853 = vmatpush.msra.mxu0 %v4612
        %4854 = vmatmul.f32.gmra.mxu0 %v1093
        %v4855 = vpop.f32.mrf.mxu0
        %v4856 = vadd.f32 %v1084, %v4855
        %4857 = vmatmul.f32.gmra.mxu0 %v1096
        %v4858 = vpop.f32.mrf.mxu0
        %v4859 = vadd.f32 %v1089, %v4858
        %4860 = vdwg.mxu0
        %v4861 = vsub.f32 0.0, %v4695
        %v4862 = vsub.f32 0.0, %v4718
        %v4863 = vsub.f32 0.0, %v4741
        %v4864 = vsub.f32 0.0, %v4764
        %v4865 = vsub.f32 0.0, %v4787
        %v4866 = vsub.f32 0.0, %v4810
        %v4867 = vsub.f32 0.0, %v4833
        %v4868 = vsub.f32 0.0, %v4856
        %v4869 = vsub.f32 0.0, %v4698
        %v4870 = vsub.f32 0.0, %v4721
        %v4871 = vsub.f32 0.0, %v4744
        %v4872 = vsub.f32 0.0, %v4767
        %v4873 = vsub.f32 0.0, %v4790
        %v4874 = vsub.f32 0.0, %v4813
        %v4875 = vsub.f32 0.0, %v4836
        %v4876 = vsub.f32 0.0, %v4859
        %v4877 = vmul.f32 %v4861, 1.442695
        %v4878 = vpow.pop %v4877
        %v4879 = vmul.f32 %v4862, 1.442695
        %v4880 = vpow.pop %v4879
        %v4881 = vmul.f32 %v4863, 1.442695
        %v4882 = vpow.pop %v4881
        %v4883 = vmul.f32 %v4864, 1.442695
        %v4884 = vpow.pop %v4883
        %v4885 = vmul.f32 %v4865, 1.442695
        %v4886 = vpow.pop %v4885
        %v4887 = vmul.f32 %v4866, 1.442695
        %v4888 = vpow.pop %v4887
        %v4889 = vmul.f32 %v4867, 1.442695
        %v4890 = vpow.pop %v4889
        %v4891 = vmul.f32 %v4868, 1.442695
        %v4892 = vpow.pop %v4891
        %v4893 = vmul.f32 %v4869, 1.442695
        %v4894 = vpow.pop %v4893
        %v4895 = vmul.f32 %v4870, 1.442695
        %v4896 = vpow.pop %v4895
        %v4897 = vmul.f32 %v4871, 1.442695
        %v4898 = vpow.pop %v4897
        %v4899 = vmul.f32 %v4872, 1.442695
        %v4900 = vpow.pop %v4899
        %v4901 = vmul.f32 %v4873, 1.442695
        %v4902 = vpow.pop %v4901
        %v4903 = vmul.f32 %v4874, 1.442695
        %v4904 = vpow.pop %v4903
        %v4905 = vmul.f32 %v4875, 1.442695
        %v4906 = vpow.pop %v4905
        %v4907 = vmul.f32 %v4876, 1.442695
        %v4908 = vpow.pop %v4907
        %v4909 = vadd.f32 %v4878, 1.0
        %v4910 = vadd.f32 %v4880, 1.0
        %v4911 = vadd.f32 %v4882, 1.0
        %v4912 = vadd.f32 %v4884, 1.0
        %v4913 = vadd.f32 %v4886, 1.0
        %v4914 = vadd.f32 %v4888, 1.0
        %v4915 = vadd.f32 %v4890, 1.0
        %v4916 = vadd.f32 %v4892, 1.0
        %v4917 = vadd.f32 %v4894, 1.0
        %v4918 = vadd.f32 %v4896, 1.0
        %v4919 = vadd.f32 %v4898, 1.0
        %v4920 = vadd.f32 %v4900, 1.0
        %v4921 = vadd.f32 %v4902, 1.0
        %v4922 = vadd.f32 %v4904, 1.0
        %v4923 = vadd.f32 %v4906, 1.0
        %v4924 = vadd.f32 %v4908, 1.0
        %v4925 = vrcp.pop %v4909
        %v4926 = vmul.f32 %v4909, %v4925
        %v4927 = vsub.f32 1.0, %v4926
        %v4928 = vmul.f32 %v4925, %v4927
        %v4929 = vadd.f32 %v4925, %v4928
        %vm4930 = vweird.f32 %v4909
        %vm4931 = vweird.f32 %v4925
        %vm4932 = vmor %vm4930, %vm4931
        %v4933 = vsel %vm4932, %v4925, %v4929
        %v4934 = vand.u32 2147483647, %v4909
        %vm4935 = vcmp.eq.f32.partialorder %v4934, 8.507059e+37
        %v4936 = vand.u32 %v4909, 2147483648
        %v4937 = vor.u32 1.1754944e-38, %v4936
        %v4938 = vsel %vm4935, %v4937, %v4933
        %v4939 = vmul.f32 1.0, %v4938
        %v4940 = vrcp.pop %v4910
        %v4941 = vmul.f32 %v4910, %v4940
        %v4942 = vsub.f32 1.0, %v4941
        %v4943 = vmul.f32 %v4940, %v4942
        %v4944 = vadd.f32 %v4940, %v4943
        %vm4945 = vweird.f32 %v4910
        %vm4946 = vweird.f32 %v4940
        %vm4947 = vmor %vm4945, %vm4946
        %v4948 = vsel %vm4947, %v4940, %v4944
        %v4949 = vand.u32 2147483647, %v4910
        %vm4950 = vcmp.eq.f32.partialorder %v4949, 8.507059e+37
        %v4951 = vand.u32 %v4910, 2147483648
        %v4952 = vor.u32 1.1754944e-38, %v4951
        %v4953 = vsel %vm4950, %v4952, %v4948
        %v4954 = vmul.f32 1.0, %v4953
        %v4955 = vrcp.pop %v4911
        %v4956 = vmul.f32 %v4911, %v4955
        %v4957 = vsub.f32 1.0, %v4956
        %v4958 = vmul.f32 %v4955, %v4957
        %v4959 = vadd.f32 %v4955, %v4958
        %vm4960 = vweird.f32 %v4911
        %vm4961 = vweird.f32 %v4955
        %vm4962 = vmor %vm4960, %vm4961
        %v4963 = vsel %vm4962, %v4955, %v4959
        %v4964 = vand.u32 2147483647, %v4911
        %vm4965 = vcmp.eq.f32.partialorder %v4964, 8.507059e+37
        %v4966 = vand.u32 %v4911, 2147483648
        %v4967 = vor.u32 1.1754944e-38, %v4966
        %v4968 = vsel %vm4965, %v4967, %v4963
        %v4969 = vmul.f32 1.0, %v4968
        %v4970 = vrcp.pop %v4912
        %v4971 = vmul.f32 %v4912, %v4970
        %v4972 = vsub.f32 1.0, %v4971
        %v4973 = vmul.f32 %v4970, %v4972
        %v4974 = vadd.f32 %v4970, %v4973
        %vm4975 = vweird.f32 %v4912
        %vm4976 = vweird.f32 %v4970
        %vm4977 = vmor %vm4975, %vm4976
        %v4978 = vsel %vm4977, %v4970, %v4974
        %v4979 = vand.u32 2147483647, %v4912
        %vm4980 = vcmp.eq.f32.partialorder %v4979, 8.507059e+37
        %v4981 = vand.u32 %v4912, 2147483648
        %v4982 = vor.u32 1.1754944e-38, %v4981
        %v4983 = vsel %vm4980, %v4982, %v4978
        %v4984 = vmul.f32 1.0, %v4983
        %v4985 = vrcp.pop %v4913
        %v4986 = vmul.f32 %v4913, %v4985
        %v4987 = vsub.f32 1.0, %v4986
        %v4988 = vmul.f32 %v4985, %v4987
        %v4989 = vadd.f32 %v4985, %v4988
        %vm4990 = vweird.f32 %v4913
        %vm4991 = vweird.f32 %v4985
        %vm4992 = vmor %vm4990, %vm4991
        %v4993 = vsel %vm4992, %v4985, %v4989
        %v4994 = vand.u32 2147483647, %v4913
        %vm4995 = vcmp.eq.f32.partialorder %v4994, 8.507059e+37
        %v4996 = vand.u32 %v4913, 2147483648
        %v4997 = vor.u32 1.1754944e-38, %v4996
        %v4998 = vsel %vm4995, %v4997, %v4993
        %v4999 = vmul.f32 1.0, %v4998
        %v5000 = vrcp.pop %v4914
        %v5001 = vmul.f32 %v4914, %v5000
        %v5002 = vsub.f32 1.0, %v5001
        %v5003 = vmul.f32 %v5000, %v5002
        %v5004 = vadd.f32 %v5000, %v5003
        %vm5005 = vweird.f32 %v4914
        %vm5006 = vweird.f32 %v5000
        %vm5007 = vmor %vm5005, %vm5006
        %v5008 = vsel %vm5007, %v5000, %v5004
        %v5009 = vand.u32 2147483647, %v4914
        %vm5010 = vcmp.eq.f32.partialorder %v5009, 8.507059e+37
        %v5011 = vand.u32 %v4914, 2147483648
        %v5012 = vor.u32 1.1754944e-38, %v5011
        %v5013 = vsel %vm5010, %v5012, %v5008
        %v5014 = vmul.f32 1.0, %v5013
        %v5015 = vrcp.pop %v4915
        %v5016 = vmul.f32 %v4915, %v5015
        %v5017 = vsub.f32 1.0, %v5016
        %v5018 = vmul.f32 %v5015, %v5017
        %v5019 = vadd.f32 %v5015, %v5018
        %vm5020 = vweird.f32 %v4915
        %vm5021 = vweird.f32 %v5015
        %vm5022 = vmor %vm5020, %vm5021
        %v5023 = vsel %vm5022, %v5015, %v5019
        %v5024 = vand.u32 2147483647, %v4915
        %vm5025 = vcmp.eq.f32.partialorder %v5024, 8.507059e+37
        %v5026 = vand.u32 %v4915, 2147483648
        %v5027 = vor.u32 1.1754944e-38, %v5026
        %v5028 = vsel %vm5025, %v5027, %v5023
        %v5029 = vmul.f32 1.0, %v5028
        %v5030 = vrcp.pop %v4916
        %v5031 = vmul.f32 %v4916, %v5030
        %v5032 = vsub.f32 1.0, %v5031
        %v5033 = vmul.f32 %v5030, %v5032
        %v5034 = vadd.f32 %v5030, %v5033
        %vm5035 = vweird.f32 %v4916
        %vm5036 = vweird.f32 %v5030
        %vm5037 = vmor %vm5035, %vm5036
        %v5038 = vsel %vm5037, %v5030, %v5034
        %v5039 = vand.u32 2147483647, %v4916
        %vm5040 = vcmp.eq.f32.partialorder %v5039, 8.507059e+37
        %v5041 = vand.u32 %v4916, 2147483648
        %v5042 = vor.u32 1.1754944e-38, %v5041
        %v5043 = vsel %vm5040, %v5042, %v5038
        %v5044 = vmul.f32 1.0, %v5043
        %v5045 = vrcp.pop %v4917
        %v5046 = vmul.f32 %v4917, %v5045
        %v5047 = vsub.f32 1.0, %v5046
        %v5048 = vmul.f32 %v5045, %v5047
        %v5049 = vadd.f32 %v5045, %v5048
        %vm5050 = vweird.f32 %v4917
        %vm5051 = vweird.f32 %v5045
        %vm5052 = vmor %vm5050, %vm5051
        %v5053 = vsel %vm5052, %v5045, %v5049
        %v5054 = vand.u32 2147483647, %v4917
        %vm5055 = vcmp.eq.f32.partialorder %v5054, 8.507059e+37
        %v5056 = vand.u32 %v4917, 2147483648
        %v5057 = vor.u32 1.1754944e-38, %v5056
        %v5058 = vsel %vm5055, %v5057, %v5053
        %v5059 = vmul.f32 1.0, %v5058
        %v5060 = vrcp.pop %v4918
        %v5061 = vmul.f32 %v4918, %v5060
        %v5062 = vsub.f32 1.0, %v5061
        %v5063 = vmul.f32 %v5060, %v5062
        %v5064 = vadd.f32 %v5060, %v5063
        %vm5065 = vweird.f32 %v4918
        %vm5066 = vweird.f32 %v5060
        %vm5067 = vmor %vm5065, %vm5066
        %v5068 = vsel %vm5067, %v5060, %v5064
        %v5069 = vand.u32 2147483647, %v4918
        %vm5070 = vcmp.eq.f32.partialorder %v5069, 8.507059e+37
        %v5071 = vand.u32 %v4918, 2147483648
        %v5072 = vor.u32 1.1754944e-38, %v5071
        %v5073 = vsel %vm5070, %v5072, %v5068
        %v5074 = vmul.f32 1.0, %v5073
        %v5075 = vrcp.pop %v4919
        %v5076 = vmul.f32 %v4919, %v5075
        %v5077 = vsub.f32 1.0, %v5076
        %v5078 = vmul.f32 %v5075, %v5077
        %v5079 = vadd.f32 %v5075, %v5078
        %vm5080 = vweird.f32 %v4919
        %vm5081 = vweird.f32 %v5075
        %vm5082 = vmor %vm5080, %vm5081
        %v5083 = vsel %vm5082, %v5075, %v5079
        %v5084 = vand.u32 2147483647, %v4919
        %vm5085 = vcmp.eq.f32.partialorder %v5084, 8.507059e+37
        %v5086 = vand.u32 %v4919, 2147483648
        %v5087 = vor.u32 1.1754944e-38, %v5086
        %v5088 = vsel %vm5085, %v5087, %v5083
        %v5089 = vmul.f32 1.0, %v5088
        %v5090 = vrcp.pop %v4920
        %v5091 = vmul.f32 %v4920, %v5090
        %v5092 = vsub.f32 1.0, %v5091
        %v5093 = vmul.f32 %v5090, %v5092
        %v5094 = vadd.f32 %v5090, %v5093
        %vm5095 = vweird.f32 %v4920
        %vm5096 = vweird.f32 %v5090
        %vm5097 = vmor %vm5095, %vm5096
        %v5098 = vsel %vm5097, %v5090, %v5094
        %v5099 = vand.u32 2147483647, %v4920
        %vm5100 = vcmp.eq.f32.partialorder %v5099, 8.507059e+37
        %v5101 = vand.u32 %v4920, 2147483648
        %v5102 = vor.u32 1.1754944e-38, %v5101
        %v5103 = vsel %vm5100, %v5102, %v5098
        %v5104 = vmul.f32 1.0, %v5103
        %v5105 = vrcp.pop %v4921
        %v5106 = vmul.f32 %v4921, %v5105
        %v5107 = vsub.f32 1.0, %v5106
        %v5108 = vmul.f32 %v5105, %v5107
        %v5109 = vadd.f32 %v5105, %v5108
        %vm5110 = vweird.f32 %v4921
        %vm5111 = vweird.f32 %v5105
        %vm5112 = vmor %vm5110, %vm5111
        %v5113 = vsel %vm5112, %v5105, %v5109
        %v5114 = vand.u32 2147483647, %v4921
        %vm5115 = vcmp.eq.f32.partialorder %v5114, 8.507059e+37
        %v5116 = vand.u32 %v4921, 2147483648
        %v5117 = vor.u32 1.1754944e-38, %v5116
        %v5118 = vsel %vm5115, %v5117, %v5113
        %v5119 = vmul.f32 1.0, %v5118
        %v5120 = vrcp.pop %v4922
        %v5121 = vmul.f32 %v4922, %v5120
        %v5122 = vsub.f32 1.0, %v5121
        %v5123 = vmul.f32 %v5120, %v5122
        %v5124 = vadd.f32 %v5120, %v5123
        %vm5125 = vweird.f32 %v4922
        %vm5126 = vweird.f32 %v5120
        %vm5127 = vmor %vm5125, %vm5126
        %v5128 = vsel %vm5127, %v5120, %v5124
        %v5129 = vand.u32 2147483647, %v4922
        %vm5130 = vcmp.eq.f32.partialorder %v5129, 8.507059e+37
        %v5131 = vand.u32 %v4922, 2147483648
        %v5132 = vor.u32 1.1754944e-38, %v5131
        %v5133 = vsel %vm5130, %v5132, %v5128
        %v5134 = vmul.f32 1.0, %v5133
        %v5135 = vrcp.pop %v4923
        %v5136 = vmul.f32 %v4923, %v5135
        %v5137 = vsub.f32 1.0, %v5136
        %v5138 = vmul.f32 %v5135, %v5137
        %v5139 = vadd.f32 %v5135, %v5138
        %vm5140 = vweird.f32 %v4923
        %vm5141 = vweird.f32 %v5135
        %vm5142 = vmor %vm5140, %vm5141
        %v5143 = vsel %vm5142, %v5135, %v5139
        %v5144 = vand.u32 2147483647, %v4923
        %vm5145 = vcmp.eq.f32.partialorder %v5144, 8.507059e+37
        %v5146 = vand.u32 %v4923, 2147483648
        %v5147 = vor.u32 1.1754944e-38, %v5146
        %v5148 = vsel %vm5145, %v5147, %v5143
        %v5149 = vmul.f32 1.0, %v5148
        %v5150 = vrcp.pop %v4924
        %v5151 = vmul.f32 %v4924, %v5150
        %v5152 = vsub.f32 1.0, %v5151
        %v5153 = vmul.f32 %v5150, %v5152
        %v5154 = vadd.f32 %v5150, %v5153
        %vm5155 = vweird.f32 %v4924
        %vm5156 = vweird.f32 %v5150
        %vm5157 = vmor %vm5155, %vm5156
        %v5158 = vsel %vm5157, %v5150, %v5154
        %v5159 = vand.u32 2147483647, %v4924
        %vm5160 = vcmp.eq.f32.partialorder %v5159, 8.507059e+37
        %v5161 = vand.u32 %v4924, 2147483648
        %v5162 = vor.u32 1.1754944e-38, %v5161
        %v5163 = vsel %vm5160, %v5162, %v5158
        %v5164 = vmul.f32 1.0, %v5163
        %v5165 = vld [vmem:[%s3] sm:$0xff]
        %v5166 = vld [vmem:[%s3 + $0x8] sm:$0xff]
        %v5167 = vld [vmem:[%s3 + $0x10] sm:$0xff]
        %v5168 = vld [vmem:[%s3 + $0x18] sm:$0xff]
        %v5169 = vld [vmem:[%s3 + $0x20] sm:$0xff]
        %v5170 = vld [vmem:[%s3 + $0x28] sm:$0xff]
        %v5171 = vld [vmem:[%s3 + $0x30] sm:$0xff]
        %v5172 = vld [vmem:[%s3 + $0x38] sm:$0xff]
        %v5173 = vld [vmem:[%s3 + $0x40] sm:$0xff]
        %v5174 = vld [vmem:[%s3 + $0x48] sm:$0xff]
        %v5175 = vld [vmem:[%s3 + $0x50] sm:$0xff]
        %v5176 = vld [vmem:[%s3 + $0x58] sm:$0xff]
        %v5177 = vld [vmem:[%s3 + $0x60] sm:$0xff]
        %v5178 = vld [vmem:[%s3 + $0x68] sm:$0xff]
        %v5179 = vld [vmem:[%s3 + $0x70] sm:$0xff]
        %v5180 = vld [vmem:[%s3 + $0x78] sm:$0xff]
        %v5181 = vld [vmem:[%s3 + $0x80] sm:$0xff]
        %v5182 = vld [vmem:[%s3 + $0x88] sm:$0xff]
        %v5183 = vld [vmem:[%s3 + $0x90] sm:$0xff]
        %v5184 = vld [vmem:[%s3 + $0x98] sm:$0xff]
        %v5185 = vld [vmem:[%s3 + $0xa0] sm:$0xff]
        %v5186 = vld [vmem:[%s3 + $0xa8] sm:$0xff]
        %v5187 = vld [vmem:[%s3 + $0xb0] sm:$0xff]
        %v5188 = vld [vmem:[%s3 + $0xb8] sm:$0xff]
        %v5189 = vld [vmem:[%s3 + $0xc0] sm:$0xff]
        %v5190 = vld [vmem:[%s3 + $0xc8] sm:$0xff]
        %v5191 = vld [vmem:[%s3 + $0xd0] sm:$0xff]
        %v5192 = vld [vmem:[%s3 + $0xd8] sm:$0xff]
        %v5193 = vld [vmem:[%s3 + $0xe0] sm:$0xff]
        %v5194 = vld [vmem:[%s3 + $0xe8] sm:$0xff]
        %v5195 = vld [vmem:[%s3 + $0xf0] sm:$0xff]
        %v5196 = vld [vmem:[%s3 + $0xf8] sm:$0xff]
        %v5197 = vld [vmem:[%s3 + $0x100] sm:$0xff]
        %v5198 = vld [vmem:[%s3 + $0x108] sm:$0xff]
        %v5199 = vld [vmem:[%s3 + $0x110] sm:$0xff]
        %v5200 = vld [vmem:[%s3 + $0x118] sm:$0xff]
        %v5201 = vld [vmem:[%s3 + $0x120] sm:$0xff]
        %v5202 = vld [vmem:[%s3 + $0x128] sm:$0xff]
        %v5203 = vld [vmem:[%s3 + $0x130] sm:$0xff]
        %v5204 = vld [vmem:[%s3 + $0x138] sm:$0xff]
        %v5205 = vld [vmem:[%s3 + $0x140] sm:$0xff]
        %v5206 = vld [vmem:[%s3 + $0x148] sm:$0xff]
        %v5207 = vld [vmem:[%s3 + $0x150] sm:$0xff]
        %v5208 = vld [vmem:[%s3 + $0x158] sm:$0xff]
        %v5209 = vld [vmem:[%s3 + $0x160] sm:$0xff]
        %v5210 = vld [vmem:[%s3 + $0x168] sm:$0xff]
        %v5211 = vld [vmem:[%s3 + $0x170] sm:$0xff]
        %v5212 = vld [vmem:[%s3 + $0x178] sm:$0xff]
        %v5213 = vld [vmem:[%s3 + $0x180] sm:$0xff]
        %v5214 = vld [vmem:[%s3 + $0x188] sm:$0xff]
        %v5215 = vld [vmem:[%s3 + $0x190] sm:$0xff]
        %v5216 = vld [vmem:[%s3 + $0x198] sm:$0xff]
        %v5217 = vld [vmem:[%s3 + $0x1a0] sm:$0xff]
        %v5218 = vld [vmem:[%s3 + $0x1a8] sm:$0xff]
        %v5219 = vld [vmem:[%s3 + $0x1b0] sm:$0xff]
        %v5220 = vld [vmem:[%s3 + $0x1b8] sm:$0xff]
        %v5221 = vld [vmem:[%s3 + $0x1c0] sm:$0xff]
        %v5222 = vld [vmem:[%s3 + $0x1c8] sm:$0xff]
        %v5223 = vld [vmem:[%s3 + $0x1d0] sm:$0xff]
        %v5224 = vld [vmem:[%s3 + $0x1d8] sm:$0xff]
        %v5225 = vld [vmem:[%s3 + $0x1e0] sm:$0xff]
        %v5226 = vld [vmem:[%s3 + $0x1e8] sm:$0xff]
        %v5227 = vld [vmem:[%s3 + $0x1f0] sm:$0xff]
        %v5228 = vld [vmem:[%s3 + $0x1f8] sm:$0xff]
        %v5229 = vld [vmem:[%s3 + $0x200] sm:$0xff]
        %v5230 = vld [vmem:[%s3 + $0x208] sm:$0xff]
        %v5231 = vld [vmem:[%s3 + $0x210] sm:$0xff]
        %v5232 = vld [vmem:[%s3 + $0x218] sm:$0xff]
        %v5233 = vld [vmem:[%s3 + $0x220] sm:$0xff]
        %v5234 = vld [vmem:[%s3 + $0x228] sm:$0xff]
        %v5235 = vld [vmem:[%s3 + $0x230] sm:$0xff]
        %v5236 = vld [vmem:[%s3 + $0x238] sm:$0xff]
        %v5237 = vld [vmem:[%s3 + $0x240] sm:$0xff]
        %v5238 = vld [vmem:[%s3 + $0x248] sm:$0xff]
        %v5239 = vld [vmem:[%s3 + $0x250] sm:$0xff]
        %v5240 = vld [vmem:[%s3 + $0x258] sm:$0xff]
        %v5241 = vld [vmem:[%s3 + $0x260] sm:$0xff]
        %v5242 = vld [vmem:[%s3 + $0x268] sm:$0xff]
        %v5243 = vld [vmem:[%s3 + $0x270] sm:$0xff]
        %v5244 = vld [vmem:[%s3 + $0x278] sm:$0xff]
        %v5245 = vld [vmem:[%s3 + $0x280] sm:$0xff]
        %v5246 = vld [vmem:[%s3 + $0x288] sm:$0xff]
        %v5247 = vld [vmem:[%s3 + $0x290] sm:$0xff]
        %v5248 = vld [vmem:[%s3 + $0x298] sm:$0xff]
        %v5249 = vld [vmem:[%s3 + $0x2a0] sm:$0xff]
        %v5250 = vld [vmem:[%s3 + $0x2a8] sm:$0xff]
        %v5251 = vld [vmem:[%s3 + $0x2b0] sm:$0xff]
        %v5252 = vld [vmem:[%s3 + $0x2b8] sm:$0xff]
        %v5253 = vld [vmem:[%s3 + $0x2c0] sm:$0xff]
        %v5254 = vld [vmem:[%s3 + $0x2c8] sm:$0xff]
        %v5255 = vld [vmem:[%s3 + $0x2d0] sm:$0xff]
        %v5256 = vld [vmem:[%s3 + $0x2d8] sm:$0xff]
        %v5257 = vld [vmem:[%s3 + $0x2e0] sm:$0xff]
        %v5258 = vld [vmem:[%s3 + $0x2e8] sm:$0xff]
        %v5259 = vld [vmem:[%s3 + $0x2f0] sm:$0xff]
        %v5260 = vld [vmem:[%s3 + $0x2f8] sm:$0xff]
        %v5261 = vld [vmem:[%s3 + $0x300] sm:$0xff]
        %v5262 = vld [vmem:[%s3 + $0x308] sm:$0xff]
        %v5263 = vld [vmem:[%s3 + $0x310] sm:$0xff]
        %v5264 = vld [vmem:[%s3 + $0x318] sm:$0xff]
        %v5265 = vld [vmem:[%s3 + $0x320] sm:$0xff]
        %v5266 = vld [vmem:[%s3 + $0x328] sm:$0xff]
        %v5267 = vld [vmem:[%s3 + $0x330] sm:$0xff]
        %v5268 = vld [vmem:[%s3 + $0x338] sm:$0xff]
        %v5269 = vld [vmem:[%s3 + $0x340] sm:$0xff]
        %v5270 = vld [vmem:[%s3 + $0x348] sm:$0xff]
        %v5271 = vld [vmem:[%s3 + $0x350] sm:$0xff]
        %v5272 = vld [vmem:[%s3 + $0x358] sm:$0xff]
        %v5273 = vld [vmem:[%s3 + $0x360] sm:$0xff]
        %v5274 = vld [vmem:[%s3 + $0x368] sm:$0xff]
        %v5275 = vld [vmem:[%s3 + $0x370] sm:$0xff]
        %v5276 = vld [vmem:[%s3 + $0x378] sm:$0xff]
        %v5277 = vld [vmem:[%s3 + $0x380] sm:$0xff]
        %v5278 = vld [vmem:[%s3 + $0x388] sm:$0xff]
        %v5279 = vld [vmem:[%s3 + $0x390] sm:$0xff]
        %v5280 = vld [vmem:[%s3 + $0x398] sm:$0xff]
        %v5281 = vld [vmem:[%s3 + $0x3a0] sm:$0xff]
        %v5282 = vld [vmem:[%s3 + $0x3a8] sm:$0xff]
        %v5283 = vld [vmem:[%s3 + $0x3b0] sm:$0xff]
        %v5284 = vld [vmem:[%s3 + $0x3b8] sm:$0xff]
        %v5285 = vld [vmem:[%s3 + $0x3c0] sm:$0xff]
        %v5286 = vld [vmem:[%s3 + $0x3c8] sm:$0xff]
        %v5287 = vld [vmem:[%s3 + $0x3d0] sm:$0xff]
        %v5288 = vld [vmem:[%s3 + $0x3d8] sm:$0xff]
        %v5289 = vld [vmem:[%s3 + $0x3e0] sm:$0xff]
        %v5290 = vld [vmem:[%s3 + $0x3e8] sm:$0xff]
        %v5291 = vld [vmem:[%s3 + $0x3f0] sm:$0xff]
        %v5292 = vld [vmem:[%s3 + $0x3f8] sm:$0xff]
        %v5293 = vld [vmem:[%s3 + $0x400] sm:$0xff]
        %v5294 = vld [vmem:[%s3 + $0x408] sm:$0xff]
        %v5295 = vld [vmem:[%s3 + $0x410] sm:$0xff]
        %v5296 = vld [vmem:[%s3 + $0x418] sm:$0xff]
        %v5297 = vld [vmem:[%s3 + $0x420] sm:$0xff]
        %v5298 = vld [vmem:[%s3 + $0x428] sm:$0xff]
        %v5299 = vld [vmem:[%s3 + $0x430] sm:$0xff]
        %v5300 = vld [vmem:[%s3 + $0x438] sm:$0xff]
        %v5301 = vld [vmem:[%s3 + $0x440] sm:$0xff]
        %v5302 = vld [vmem:[%s3 + $0x448] sm:$0xff]
        %v5303 = vld [vmem:[%s3 + $0x450] sm:$0xff]
        %v5304 = vld [vmem:[%s3 + $0x458] sm:$0xff]
        %v5305 = vld [vmem:[%s3 + $0x460] sm:$0xff]
        %v5306 = vld [vmem:[%s3 + $0x468] sm:$0xff]
        %v5307 = vld [vmem:[%s3 + $0x470] sm:$0xff]
        %v5308 = vld [vmem:[%s3 + $0x478] sm:$0xff]
        %v5309 = vld [vmem:[%s3 + $0x480] sm:$0xff]
        %v5310 = vld [vmem:[%s3 + $0x488] sm:$0xff]
        %v5311 = vld [vmem:[%s3 + $0x490] sm:$0xff]
        %v5312 = vld [vmem:[%s3 + $0x498] sm:$0xff]
        %v5313 = vld [vmem:[%s3 + $0x4a0] sm:$0xff]
        %v5314 = vld [vmem:[%s3 + $0x4a8] sm:$0xff]
        %v5315 = vld [vmem:[%s3 + $0x4b0] sm:$0xff]
        %v5316 = vld [vmem:[%s3 + $0x4b8] sm:$0xff]
        %v5317 = vld [vmem:[%s3 + $0x4c0] sm:$0xff]
        %v5318 = vld [vmem:[%s3 + $0x4c8] sm:$0xff]
        %v5319 = vld [vmem:[%s3 + $0x4d0] sm:$0xff]
        %v5320 = vld [vmem:[%s3 + $0x4d8] sm:$0xff]
        %v5321 = vld [vmem:[%s3 + $0x4e0] sm:$0xff]
        %v5322 = vld [vmem:[%s3 + $0x4e8] sm:$0xff]
        %v5323 = vld [vmem:[%s3 + $0x4f0] sm:$0xff]
        %v5324 = vld [vmem:[%s3 + $0x4f8] sm:$0xff]
        %v5325 = vld [vmem:[%s3 + $0x500] sm:$0xff]
        %v5326 = vld [vmem:[%s3 + $0x508] sm:$0xff]
        %v5327 = vld [vmem:[%s3 + $0x510] sm:$0xff]
        %v5328 = vld [vmem:[%s3 + $0x518] sm:$0xff]
        %v5329 = vld [vmem:[%s3 + $0x520] sm:$0xff]
        %v5330 = vld [vmem:[%s3 + $0x528] sm:$0xff]
        %v5331 = vld [vmem:[%s3 + $0x530] sm:$0xff]
        %v5332 = vld [vmem:[%s3 + $0x538] sm:$0xff]
        %v5333 = vld [vmem:[%s3 + $0x540] sm:$0xff]
        %v5334 = vld [vmem:[%s3 + $0x548] sm:$0xff]
        %v5335 = vld [vmem:[%s3 + $0x550] sm:$0xff]
        %v5336 = vld [vmem:[%s3 + $0x558] sm:$0xff]
        %v5337 = vld [vmem:[%s3 + $0x560] sm:$0xff]
        %v5338 = vld [vmem:[%s3 + $0x568] sm:$0xff]
        %v5339 = vld [vmem:[%s3 + $0x570] sm:$0xff]
        %v5340 = vld [vmem:[%s3 + $0x578] sm:$0xff]
        %v5341 = vld [vmem:[%s3 + $0x580] sm:$0xff]
        %v5342 = vld [vmem:[%s3 + $0x588] sm:$0xff]
        %v5343 = vld [vmem:[%s3 + $0x590] sm:$0xff]
        %v5344 = vld [vmem:[%s3 + $0x598] sm:$0xff]
        %v5345 = vld [vmem:[%s3 + $0x5a0] sm:$0xff]
        %v5346 = vld [vmem:[%s3 + $0x5a8] sm:$0xff]
        %v5347 = vld [vmem:[%s3 + $0x5b0] sm:$0xff]
        %v5348 = vld [vmem:[%s3 + $0x5b8] sm:$0xff]
        %v5349 = vld [vmem:[%s3 + $0x5c0] sm:$0xff]
        %v5350 = vld [vmem:[%s3 + $0x5c8] sm:$0xff]
        %v5351 = vld [vmem:[%s3 + $0x5d0] sm:$0xff]
        %v5352 = vld [vmem:[%s3 + $0x5d8] sm:$0xff]
        %v5353 = vld [vmem:[%s3 + $0x5e0] sm:$0xff]
        %v5354 = vld [vmem:[%s3 + $0x5e8] sm:$0xff]
        %v5355 = vld [vmem:[%s3 + $0x5f0] sm:$0xff]
        %v5356 = vld [vmem:[%s3 + $0x5f8] sm:$0xff]
        %v5357 = vld [vmem:[%s3 + $0x600] sm:$0xff]
        %v5358 = vld [vmem:[%s3 + $0x608] sm:$0xff]
        %v5359 = vld [vmem:[%s3 + $0x610] sm:$0xff]
        %v5360 = vld [vmem:[%s3 + $0x618] sm:$0xff]
        %v5361 = vld [vmem:[%s3 + $0x620] sm:$0xff]
        %v5362 = vld [vmem:[%s3 + $0x628] sm:$0xff]
        %v5363 = vld [vmem:[%s3 + $0x630] sm:$0xff]
        %v5364 = vld [vmem:[%s3 + $0x638] sm:$0xff]
        %v5365 = vld [vmem:[%s3 + $0x640] sm:$0xff]
        %v5366 = vld [vmem:[%s3 + $0x648] sm:$0xff]
        %v5367 = vld [vmem:[%s3 + $0x650] sm:$0xff]
        %v5368 = vld [vmem:[%s3 + $0x658] sm:$0xff]
        %v5369 = vld [vmem:[%s3 + $0x660] sm:$0xff]
        %v5370 = vld [vmem:[%s3 + $0x668] sm:$0xff]
        %v5371 = vld [vmem:[%s3 + $0x670] sm:$0xff]
        %v5372 = vld [vmem:[%s3 + $0x678] sm:$0xff]
        %v5373 = vld [vmem:[%s3 + $0x680] sm:$0xff]
        %v5374 = vld [vmem:[%s3 + $0x688] sm:$0xff]
        %v5375 = vld [vmem:[%s3 + $0x690] sm:$0xff]
        %v5376 = vld [vmem:[%s3 + $0x698] sm:$0xff]
        %v5377 = vld [vmem:[%s3 + $0x6a0] sm:$0xff]
        %v5378 = vld [vmem:[%s3 + $0x6a8] sm:$0xff]
        %v5379 = vld [vmem:[%s3 + $0x6b0] sm:$0xff]
        %v5380 = vld [vmem:[%s3 + $0x6b8] sm:$0xff]
        %v5381 = vld [vmem:[%s3 + $0x6c0] sm:$0xff]
        %v5382 = vld [vmem:[%s3 + $0x6c8] sm:$0xff]
        %v5383 = vld [vmem:[%s3 + $0x6d0] sm:$0xff]
        %v5384 = vld [vmem:[%s3 + $0x6d8] sm:$0xff]
        %v5385 = vld [vmem:[%s3 + $0x6e0] sm:$0xff]
        %v5386 = vld [vmem:[%s3 + $0x6e8] sm:$0xff]
        %v5387 = vld [vmem:[%s3 + $0x6f0] sm:$0xff]
        %v5388 = vld [vmem:[%s3 + $0x6f8] sm:$0xff]
        %v5389 = vld [vmem:[%s3 + $0x700] sm:$0xff]
        %v5390 = vld [vmem:[%s3 + $0x708] sm:$0xff]
        %v5391 = vld [vmem:[%s3 + $0x710] sm:$0xff]
        %v5392 = vld [vmem:[%s3 + $0x718] sm:$0xff]
        %v5393 = vld [vmem:[%s3 + $0x720] sm:$0xff]
        %v5394 = vld [vmem:[%s3 + $0x728] sm:$0xff]
        %v5395 = vld [vmem:[%s3 + $0x730] sm:$0xff]
        %v5396 = vld [vmem:[%s3 + $0x738] sm:$0xff]
        %v5397 = vld [vmem:[%s3 + $0x740] sm:$0xff]
        %v5398 = vld [vmem:[%s3 + $0x748] sm:$0xff]
        %v5399 = vld [vmem:[%s3 + $0x750] sm:$0xff]
        %v5400 = vld [vmem:[%s3 + $0x758] sm:$0xff]
        %v5401 = vld [vmem:[%s3 + $0x760] sm:$0xff]
        %v5402 = vld [vmem:[%s3 + $0x768] sm:$0xff]
        %v5403 = vld [vmem:[%s3 + $0x770] sm:$0xff]
        %v5404 = vld [vmem:[%s3 + $0x778] sm:$0xff]
        %v5405 = vld [vmem:[%s3 + $0x780] sm:$0xff]
        %v5406 = vld [vmem:[%s3 + $0x788] sm:$0xff]
        %v5407 = vld [vmem:[%s3 + $0x790] sm:$0xff]
        %v5408 = vld [vmem:[%s3 + $0x798] sm:$0xff]
        %v5409 = vld [vmem:[%s3 + $0x7a0] sm:$0xff]
        %v5410 = vld [vmem:[%s3 + $0x7a8] sm:$0xff]
        %v5411 = vld [vmem:[%s3 + $0x7b0] sm:$0xff]
        %v5412 = vld [vmem:[%s3 + $0x7b8] sm:$0xff]
        %v5413 = vld [vmem:[%s3 + $0x7c0] sm:$0xff]
        %v5414 = vld [vmem:[%s3 + $0x7c8] sm:$0xff]
        %v5415 = vld [vmem:[%s3 + $0x7d0] sm:$0xff]
        %v5416 = vld [vmem:[%s3 + $0x7d8] sm:$0xff]
        %v5417 = vld [vmem:[%s3 + $0x7e0] sm:$0xff]
        %v5418 = vld [vmem:[%s3 + $0x7e8] sm:$0xff]
        %v5419 = vld [vmem:[%s3 + $0x7f0] sm:$0xff]
        %v5420 = vld [vmem:[%s3 + $0x7f8] sm:$0xff]
        %5421 = vmatpush.msra.mxu0 %v5195
        %5422 = vmatpush.msra.mxu0 %v5193
        %5423 = vmatpush.msra.mxu0 %v5191
        %5424 = vmatpush.msra.mxu0 %v5189
        %5425 = vmatpush.msra.mxu0 %v5187
        %5426 = vmatpush.msra.mxu0 %v5185
        %5427 = vmatpush.msra.mxu0 %v5183
        %5428 = vmatpush.msra.mxu0 %v5181
        %5429 = vmatpush.msra.mxu0 %v5179
        %5430 = vmatpush.msra.mxu0 %v5177
        %5431 = vmatpush.msra.mxu0 %v5175
        %5432 = vmatpush.msra.mxu0 %v5173
        %5433 = vmatpush.msra.mxu0 %v5171
        %5434 = vmatpush.msra.mxu0 %v5169
        %5435 = vmatpush.msra.mxu0 %v5167
        %5436 = vmatpush.msra.mxu0 %v5165
        %5437 = vmatmul.f32.gmra.mxu0 %v1384
        %v5438 = vpop.f32.mrf.mxu0
        %v5439 = vadd.f32 0.0, %v5438
        %5440 = vmatmul.f32.gmra.mxu0 %v1504
        %v5441 = vpop.f32.mrf.mxu0
        %v5442 = vadd.f32 0.0, %v5441
        %5443 = vmatmul.f32.gmra.mxu0 %v2569
        %v5444 = vpop.f32.mrf.mxu0
        %v5445 = vadd.f32 0.0, %v5444
        %5446 = vmatmul.f32.gmra.mxu0 %v2689
        %v5447 = vpop.f32.mrf.mxu0
        %v5448 = vadd.f32 0.0, %v5447
        %5449 = vmatmul.f32.gmra.mxu0 %v3754
        %v5450 = vpop.f32.mrf.mxu0
        %v5451 = vadd.f32 0.0, %v5450
        %5452 = vmatmul.f32.gmra.mxu0 %v3874
        %v5453 = vpop.f32.mrf.mxu0
        %v5454 = vadd.f32 0.0, %v5453
        %5455 = vmatmul.f32.gmra.mxu0 %v4939
        %v5456 = vpop.f32.mrf.mxu0
        %v5457 = vadd.f32 0.0, %v5456
        %5458 = vmatmul.f32.gmra.mxu0 %v5059
        %v5459 = vpop.f32.mrf.mxu0
        %v5460 = vadd.f32 0.0, %v5459
        %5461 = vdwg.mxu0
        %5462 = vmatpush.msra.mxu0 %v5227
        %5463 = vmatpush.msra.mxu0 %v5225
        %5464 = vmatpush.msra.mxu0 %v5223
        %5465 = vmatpush.msra.mxu0 %v5221
        %5466 = vmatpush.msra.mxu0 %v5219
        %5467 = vmatpush.msra.mxu0 %v5217
        %5468 = vmatpush.msra.mxu0 %v5215
        %5469 = vmatpush.msra.mxu0 %v5213
        %5470 = vmatpush.msra.mxu0 %v5211
        %5471 = vmatpush.msra.mxu0 %v5209
        %5472 = vmatpush.msra.mxu0 %v5207
        %5473 = vmatpush.msra.mxu0 %v5205
        %5474 = vmatpush.msra.mxu0 %v5203
        %5475 = vmatpush.msra.mxu0 %v5201
        %5476 = vmatpush.msra.mxu0 %v5199
        %5477 = vmatpush.msra.mxu0 %v5197
        %5478 = vmatmul.f32.gmra.mxu0 %v1399
        %v5479 = vpop.f32.mrf.mxu0
        %v5480 = vadd.f32 %v5439, %v5479
        %5481 = vmatmul.f32.gmra.mxu0 %v1519
        %v5482 = vpop.f32.mrf.mxu0
        %v5483 = vadd.f32 %v5442, %v5482
        %5484 = vmatmul.f32.gmra.mxu0 %v2584
        %v5485 = vpop.f32.mrf.mxu0
        %v5486 = vadd.f32 %v5445, %v5485
        %5487 = vmatmul.f32.gmra.mxu0 %v2704
        %v5488 = vpop.f32.mrf.mxu0
        %v5489 = vadd.f32 %v5448, %v5488
        %5490 = vmatmul.f32.gmra.mxu0 %v3769
        %v5491 = vpop.f32.mrf.mxu0
        %v5492 = vadd.f32 %v5451, %v5491
        %5493 = vmatmul.f32.gmra.mxu0 %v3889
        %v5494 = vpop.f32.mrf.mxu0
        %v5495 = vadd.f32 %v5454, %v5494
        %5496 = vmatmul.f32.gmra.mxu0 %v4954
        %v5497 = vpop.f32.mrf.mxu0
        %v5498 = vadd.f32 %v5457, %v5497
        %5499 = vmatmul.f32.gmra.mxu0 %v5074
        %v5500 = vpop.f32.mrf.mxu0
        %v5501 = vadd.f32 %v5460, %v5500
        %5502 = vdwg.mxu0
        %5503 = vmatpush.msra.mxu0 %v5259
        %5504 = vmatpush.msra.mxu0 %v5257
        %5505 = vmatpush.msra.mxu0 %v5255
        %5506 = vmatpush.msra.mxu0 %v5253
        %5507 = vmatpush.msra.mxu0 %v5251
        %5508 = vmatpush.msra.mxu0 %v5249
        %5509 = vmatpush.msra.mxu0 %v5247
        %5510 = vmatpush.msra.mxu0 %v5245
        %5511 = vmatpush.msra.mxu0 %v5243
        %5512 = vmatpush.msra.mxu0 %v5241
        %5513 = vmatpush.msra.mxu0 %v5239
        %5514 = vmatpush.msra.mxu0 %v5237
        %5515 = vmatpush.msra.mxu0 %v5235
        %5516 = vmatpush.msra.mxu0 %v5233
        %5517 = vmatpush.msra.mxu0 %v5231
        %5518 = vmatpush.msra.mxu0 %v5229
        %5519 = vmatmul.f32.gmra.mxu0 %v1414
        %v5520 = vpop.f32.mrf.mxu0
        %v5521 = vadd.f32 %v5480, %v5520
        %5522 = vmatmul.f32.gmra.mxu0 %v1534
        %v5523 = vpop.f32.mrf.mxu0
        %v5524 = vadd.f32 %v5483, %v5523
        %5525 = vmatmul.f32.gmra.mxu0 %v2599
        %v5526 = vpop.f32.mrf.mxu0
        %v5527 = vadd.f32 %v5486, %v5526
        %5528 = vmatmul.f32.gmra.mxu0 %v2719
        %v5529 = vpop.f32.mrf.mxu0
        %v5530 = vadd.f32 %v5489, %v5529
        %5531 = vmatmul.f32.gmra.mxu0 %v3784
        %v5532 = vpop.f32.mrf.mxu0
        %v5533 = vadd.f32 %v5492, %v5532
        %5534 = vmatmul.f32.gmra.mxu0 %v3904
        %v5535 = vpop.f32.mrf.mxu0
        %v5536 = vadd.f32 %v5495, %v5535
        %5537 = vmatmul.f32.gmra.mxu0 %v4969
        %v5538 = vpop.f32.mrf.mxu0
        %v5539 = vadd.f32 %v5498, %v5538
        %5540 = vmatmul.f32.gmra.mxu0 %v5089
        %v5541 = vpop.f32.mrf.mxu0
        %v5542 = vadd.f32 %v5501, %v5541
        %5543 = vdwg.mxu0
        %5544 = vmatpush.msra.mxu0 %v5291
        %5545 = vmatpush.msra.mxu0 %v5289
        %5546 = vmatpush.msra.mxu0 %v5287
        %5547 = vmatpush.msra.mxu0 %v5285
        %5548 = vmatpush.msra.mxu0 %v5283
        %5549 = vmatpush.msra.mxu0 %v5281
        %5550 = vmatpush.msra.mxu0 %v5279
        %5551 = vmatpush.msra.mxu0 %v5277
        %5552 = vmatpush.msra.mxu0 %v5275
        %5553 = vmatpush.msra.mxu0 %v5273
        %5554 = vmatpush.msra.mxu0 %v5271
        %5555 = vmatpush.msra.mxu0 %v5269
        %5556 = vmatpush.msra.mxu0 %v5267
        %5557 = vmatpush.msra.mxu0 %v5265
        %5558 = vmatpush.msra.mxu0 %v5263
        %5559 = vmatpush.msra.mxu0 %v5261
        %5560 = vmatmul.f32.gmra.mxu0 %v1429
        %v5561 = vpop.f32.mrf.mxu0
        %v5562 = vadd.f32 %v5521, %v5561
        %5563 = vmatmul.f32.gmra.mxu0 %v1549
        %v5564 = vpop.f32.mrf.mxu0
        %v5565 = vadd.f32 %v5524, %v5564
        %5566 = vmatmul.f32.gmra.mxu0 %v2614
        %v5567 = vpop.f32.mrf.mxu0
        %v5568 = vadd.f32 %v5527, %v5567
        %5569 = vmatmul.f32.gmra.mxu0 %v2734
        %v5570 = vpop.f32.mrf.mxu0
        %v5571 = vadd.f32 %v5530, %v5570
        %5572 = vmatmul.f32.gmra.mxu0 %v3799
        %v5573 = vpop.f32.mrf.mxu0
        %v5574 = vadd.f32 %v5533, %v5573
        %5575 = vmatmul.f32.gmra.mxu0 %v3919
        %v5576 = vpop.f32.mrf.mxu0
        %v5577 = vadd.f32 %v5536, %v5576
        %5578 = vmatmul.f32.gmra.mxu0 %v4984
        %v5579 = vpop.f32.mrf.mxu0
        %v5580 = vadd.f32 %v5539, %v5579
        %5581 = vmatmul.f32.gmra.mxu0 %v5104
        %v5582 = vpop.f32.mrf.mxu0
        %v5583 = vadd.f32 %v5542, %v5582
        %5584 = vdwg.mxu0
        %5585 = vmatpush.msra.mxu0 %v5323
        %5586 = vmatpush.msra.mxu0 %v5321
        %5587 = vmatpush.msra.mxu0 %v5319
        %5588 = vmatpush.msra.mxu0 %v5317
        %5589 = vmatpush.msra.mxu0 %v5315
        %5590 = vmatpush.msra.mxu0 %v5313
        %5591 = vmatpush.msra.mxu0 %v5311
        %5592 = vmatpush.msra.mxu0 %v5309
        %5593 = vmatpush.msra.mxu0 %v5307
        %5594 = vmatpush.msra.mxu0 %v5305
        %5595 = vmatpush.msra.mxu0 %v5303
        %5596 = vmatpush.msra.mxu0 %v5301
        %5597 = vmatpush.msra.mxu0 %v5299
        %5598 = vmatpush.msra.mxu0 %v5297
        %5599 = vmatpush.msra.mxu0 %v5295
        %5600 = vmatpush.msra.mxu0 %v5293
        %5601 = vmatmul.f32.gmra.mxu0 %v1444
        %v5602 = vpop.f32.mrf.mxu0
        %v5603 = vadd.f32 %v5562, %v5602
        %5604 = vmatmul.f32.gmra.mxu0 %v1564
        %v5605 = vpop.f32.mrf.mxu0
        %v5606 = vadd.f32 %v5565, %v5605
        %5607 = vmatmul.f32.gmra.mxu0 %v2629
        %v5608 = vpop.f32.mrf.mxu0
        %v5609 = vadd.f32 %v5568, %v5608
        %5610 = vmatmul.f32.gmra.mxu0 %v2749
        %v5611 = vpop.f32.mrf.mxu0
        %v5612 = vadd.f32 %v5571, %v5611
        %5613 = vmatmul.f32.gmra.mxu0 %v3814
        %v5614 = vpop.f32.mrf.mxu0
        %v5615 = vadd.f32 %v5574, %v5614
        %5616 = vmatmul.f32.gmra.mxu0 %v3934
        %v5617 = vpop.f32.mrf.mxu0
        %v5618 = vadd.f32 %v5577, %v5617
        %5619 = vmatmul.f32.gmra.mxu0 %v4999
        %v5620 = vpop.f32.mrf.mxu0
        %v5621 = vadd.f32 %v5580, %v5620
        %5622 = vmatmul.f32.gmra.mxu0 %v5119
        %v5623 = vpop.f32.mrf.mxu0
        %v5624 = vadd.f32 %v5583, %v5623
        %5625 = vdwg.mxu0
        %5626 = vmatpush.msra.mxu0 %v5355
        %5627 = vmatpush.msra.mxu0 %v5353
        %5628 = vmatpush.msra.mxu0 %v5351
        %5629 = vmatpush.msra.mxu0 %v5349
        %5630 = vmatpush.msra.mxu0 %v5347
        %5631 = vmatpush.msra.mxu0 %v5345
        %5632 = vmatpush.msra.mxu0 %v5343
        %5633 = vmatpush.msra.mxu0 %v5341
        %5634 = vmatpush.msra.mxu0 %v5339
        %5635 = vmatpush.msra.mxu0 %v5337
        %5636 = vmatpush.msra.mxu0 %v5335
        %5637 = vmatpush.msra.mxu0 %v5333
        %5638 = vmatpush.msra.mxu0 %v5331
        %5639 = vmatpush.msra.mxu0 %v5329
        %5640 = vmatpush.msra.mxu0 %v5327
        %5641 = vmatpush.msra.mxu0 %v5325
        %5642 = vmatmul.f32.gmra.mxu0 %v1459
        %v5643 = vpop.f32.mrf.mxu0
        %v5644 = vadd.f32 %v5603, %v5643
        %5645 = vmatmul.f32.gmra.mxu0 %v1579
        %v5646 = vpop.f32.mrf.mxu0
        %v5647 = vadd.f32 %v5606, %v5646
        %5648 = vmatmul.f32.gmra.mxu0 %v2644
        %v5649 = vpop.f32.mrf.mxu0
        %v5650 = vadd.f32 %v5609, %v5649
        %5651 = vmatmul.f32.gmra.mxu0 %v2764
        %v5652 = vpop.f32.mrf.mxu0
        %v5653 = vadd.f32 %v5612, %v5652
        %5654 = vmatmul.f32.gmra.mxu0 %v3829
        %v5655 = vpop.f32.mrf.mxu0
        %v5656 = vadd.f32 %v5615, %v5655
        %5657 = vmatmul.f32.gmra.mxu0 %v3949
        %v5658 = vpop.f32.mrf.mxu0
        %v5659 = vadd.f32 %v5618, %v5658
        %5660 = vmatmul.f32.gmra.mxu0 %v5014
        %v5661 = vpop.f32.mrf.mxu0
        %v5662 = vadd.f32 %v5621, %v5661
        %5663 = vmatmul.f32.gmra.mxu0 %v5134
        %v5664 = vpop.f32.mrf.mxu0
        %v5665 = vadd.f32 %v5624, %v5664
        %5666 = vdwg.mxu0
        %5667 = vmatpush.msra.mxu0 %v5387
        %5668 = vmatpush.msra.mxu0 %v5385
        %5669 = vmatpush.msra.mxu0 %v5383
        %5670 = vmatpush.msra.mxu0 %v5381
        %5671 = vmatpush.msra.mxu0 %v5379
        %5672 = vmatpush.msra.mxu0 %v5377
        %5673 = vmatpush.msra.mxu0 %v5375
        %5674 = vmatpush.msra.mxu0 %v5373
        %5675 = vmatpush.msra.mxu0 %v5371
        %5676 = vmatpush.msra.mxu0 %v5369
        %5677 = vmatpush.msra.mxu0 %v5367
        %5678 = vmatpush.msra.mxu0 %v5365
        %5679 = vmatpush.msra.mxu0 %v5363
        %5680 = vmatpush.msra.mxu0 %v5361
        %5681 = vmatpush.msra.mxu0 %v5359
        %5682 = vmatpush.msra.mxu0 %v5357
        %5683 = vmatmul.f32.gmra.mxu0 %v1474
        %v5684 = vpop.f32.mrf.mxu0
        %v5685 = vadd.f32 %v5644, %v5684
        %5686 = vmatmul.f32.gmra.mxu0 %v1594
        %v5687 = vpop.f32.mrf.mxu0
        %v5688 = vadd.f32 %v5647, %v5687
        %5689 = vmatmul.f32.gmra.mxu0 %v2659
        %v5690 = vpop.f32.mrf.mxu0
        %v5691 = vadd.f32 %v5650, %v5690
        %5692 = vmatmul.f32.gmra.mxu0 %v2779
        %v5693 = vpop.f32.mrf.mxu0
        %v5694 = vadd.f32 %v5653, %v5693
        %5695 = vmatmul.f32.gmra.mxu0 %v3844
        %v5696 = vpop.f32.mrf.mxu0
        %v5697 = vadd.f32 %v5656, %v5696
        %5698 = vmatmul.f32.gmra.mxu0 %v3964
        %v5699 = vpop.f32.mrf.mxu0
        %v5700 = vadd.f32 %v5659, %v5699
        %5701 = vmatmul.f32.gmra.mxu0 %v5029
        %v5702 = vpop.f32.mrf.mxu0
        %v5703 = vadd.f32 %v5662, %v5702
        %5704 = vmatmul.f32.gmra.mxu0 %v5149
        %v5705 = vpop.f32.mrf.mxu0
        %v5706 = vadd.f32 %v5665, %v5705
        %5707 = vdwg.mxu0
        %5708 = vmatpush.msra.mxu0 %v5419
        %5709 = vmatpush.msra.mxu0 %v5417
        %5710 = vmatpush.msra.mxu0 %v5415
        %5711 = vmatpush.msra.mxu0 %v5413
        %5712 = vmatpush.msra.mxu0 %v5411
        %5713 = vmatpush.msra.mxu0 %v5409
        %5714 = vmatpush.msra.mxu0 %v5407
        %5715 = vmatpush.msra.mxu0 %v5405
        %5716 = vmatpush.msra.mxu0 %v5403
        %5717 = vmatpush.msra.mxu0 %v5401
        %5718 = vmatpush.msra.mxu0 %v5399
        %5719 = vmatpush.msra.mxu0 %v5397
        %5720 = vmatpush.msra.mxu0 %v5395
        %5721 = vmatpush.msra.mxu0 %v5393
        %5722 = vmatpush.msra.mxu0 %v5391
        %5723 = vmatpush.msra.mxu0 %v5389
        %5724 = vmatmul.f32.gmra.mxu0 %v1489
        %v5725 = vpop.f32.mrf.mxu0
        %v5726 = vadd.f32 %v5685, %v5725
        %5727 = vmatmul.f32.gmra.mxu0 %v1609
        %v5728 = vpop.f32.mrf.mxu0
        %v5729 = vadd.f32 %v5688, %v5728
        %5730 = vmatmul.f32.gmra.mxu0 %v2674
        %v5731 = vpop.f32.mrf.mxu0
        %v5732 = vadd.f32 %v5691, %v5731
        %5733 = vmatmul.f32.gmra.mxu0 %v2794
        %v5734 = vpop.f32.mrf.mxu0
        %v5735 = vadd.f32 %v5694, %v5734
        %5736 = vmatmul.f32.gmra.mxu0 %v3859
        %v5737 = vpop.f32.mrf.mxu0
        %v5738 = vadd.f32 %v5697, %v5737
        %5739 = vmatmul.f32.gmra.mxu0 %v3979
        %v5740 = vpop.f32.mrf.mxu0
        %v5741 = vadd.f32 %v5700, %v5740
        %5742 = vmatmul.f32.gmra.mxu0 %v5044
        %v5743 = vpop.f32.mrf.mxu0
        %v5744 = vadd.f32 %v5703, %v5743
        %5745 = vmatmul.f32.gmra.mxu0 %v5164
        %v5746 = vpop.f32.mrf.mxu0
        %v5747 = vadd.f32 %v5706, %v5746
        %5748 = vdwg.mxu0
        %5749 = vmatpush.msra.mxu0 %v5196
        %5750 = vmatpush.msra.mxu0 %v5194
        %5751 = vmatpush.msra.mxu0 %v5192
        %5752 = vmatpush.msra.mxu0 %v5190
        %5753 = vmatpush.msra.mxu0 %v5188
        %5754 = vmatpush.msra.mxu0 %v5186
        %5755 = vmatpush.msra.mxu0 %v5184
        %5756 = vmatpush.msra.mxu0 %v5182
        %5757 = vmatpush.msra.mxu0 %v5180
        %5758 = vmatpush.msra.mxu0 %v5178
        %5759 = vmatpush.msra.mxu0 %v5176
        %5760 = vmatpush.msra.mxu0 %v5174
        %5761 = vmatpush.msra.mxu0 %v5172
        %5762 = vmatpush.msra.mxu0 %v5170
        %5763 = vmatpush.msra.mxu0 %v5168
        %5764 = vmatpush.msra.mxu0 %v5166
        %5765 = vmatmul.f32.gmra.mxu0 %v1384
        %v5766 = vpop.f32.mrf.mxu0
        %v5767 = vadd.f32 0.0, %v5766
        %5768 = vmatmul.f32.gmra.mxu0 %v1504
        %v5769 = vpop.f32.mrf.mxu0
        %v5770 = vadd.f32 0.0, %v5769
        %5771 = vmatmul.f32.gmra.mxu0 %v2569
        %v5772 = vpop.f32.mrf.mxu0
        %v5773 = vadd.f32 0.0, %v5772
        %5774 = vmatmul.f32.gmra.mxu0 %v2689
        %v5775 = vpop.f32.mrf.mxu0
        %v5776 = vadd.f32 0.0, %v5775
        %5777 = vmatmul.f32.gmra.mxu0 %v3754
        %v5778 = vpop.f32.mrf.mxu0
        %v5779 = vadd.f32 0.0, %v5778
        %5780 = vmatmul.f32.gmra.mxu0 %v3874
        %v5781 = vpop.f32.mrf.mxu0
        %v5782 = vadd.f32 0.0, %v5781
        %5783 = vmatmul.f32.gmra.mxu0 %v4939
        %v5784 = vpop.f32.mrf.mxu0
        %v5785 = vadd.f32 0.0, %v5784
        %5786 = vmatmul.f32.gmra.mxu0 %v5059
        %v5787 = vpop.f32.mrf.mxu0
        %v5788 = vadd.f32 0.0, %v5787
        %5789 = vdwg.mxu0
        %5790 = vmatpush.msra.mxu0 %v5228
        %5791 = vmatpush.msra.mxu0 %v5226
        %5792 = vmatpush.msra.mxu0 %v5224
        %5793 = vmatpush.msra.mxu0 %v5222
        %5794 = vmatpush.msra.mxu0 %v5220
        %5795 = vmatpush.msra.mxu0 %v5218
        %5796 = vmatpush.msra.mxu0 %v5216
        %5797 = vmatpush.msra.mxu0 %v5214
        %5798 = vmatpush.msra.mxu0 %v5212
        %5799 = vmatpush.msra.mxu0 %v5210
        %5800 = vmatpush.msra.mxu0 %v5208
        %5801 = vmatpush.msra.mxu0 %v5206
        %5802 = vmatpush.msra.mxu0 %v5204
        %5803 = vmatpush.msra.mxu0 %v5202
        %5804 = vmatpush.msra.mxu0 %v5200
        %5805 = vmatpush.msra.mxu0 %v5198
        %5806 = vmatmul.f32.gmra.mxu0 %v1399
        %v5807 = vpop.f32.mrf.mxu0
        %v5808 = vadd.f32 %v5767, %v5807
        %5809 = vmatmul.f32.gmra.mxu0 %v1519
        %v5810 = vpop.f32.mrf.mxu0
        %v5811 = vadd.f32 %v5770, %v5810
        %5812 = vmatmul.f32.gmra.mxu0 %v2584
        %v5813 = vpop.f32.mrf.mxu0
        %v5814 = vadd.f32 %v5773, %v5813
        %5815 = vmatmul.f32.gmra.mxu0 %v2704
        %v5816 = vpop.f32.mrf.mxu0
        %v5817 = vadd.f32 %v5776, %v5816
        %5818 = vmatmul.f32.gmra.mxu0 %v3769
        %v5819 = vpop.f32.mrf.mxu0
        %v5820 = vadd.f32 %v5779, %v5819
        %5821 = vmatmul.f32.gmra.mxu0 %v3889
        %v5822 = vpop.f32.mrf.mxu0
        %v5823 = vadd.f32 %v5782, %v5822
        %5824 = vmatmul.f32.gmra.mxu0 %v4954
        %v5825 = vpop.f32.mrf.mxu0
        %v5826 = vadd.f32 %v5785, %v5825
        %5827 = vmatmul.f32.gmra.mxu0 %v5074
        %v5828 = vpop.f32.mrf.mxu0
        %v5829 = vadd.f32 %v5788, %v5828
        %5830 = vdwg.mxu0
        %5831 = vmatpush.msra.mxu0 %v5260
        %5832 = vmatpush.msra.mxu0 %v5258
        %5833 = vmatpush.msra.mxu0 %v5256
        %5834 = vmatpush.msra.mxu0 %v5254
        %5835 = vmatpush.msra.mxu0 %v5252
        %5836 = vmatpush.msra.mxu0 %v5250
        %5837 = vmatpush.msra.mxu0 %v5248
        %5838 = vmatpush.msra.mxu0 %v5246
        %5839 = vmatpush.msra.mxu0 %v5244
        %5840 = vmatpush.msra.mxu0 %v5242
        %5841 = vmatpush.msra.mxu0 %v5240
        %5842 = vmatpush.msra.mxu0 %v5238
        %5843 = vmatpush.msra.mxu0 %v5236
        %5844 = vmatpush.msra.mxu0 %v5234
        %5845 = vmatpush.msra.mxu0 %v5232
        %5846 = vmatpush.msra.mxu0 %v5230
        %5847 = vmatmul.f32.gmra.mxu0 %v1414
        %v5848 = vpop.f32.mrf.mxu0
        %v5849 = vadd.f32 %v5808, %v5848
        %5850 = vmatmul.f32.gmra.mxu0 %v1534
        %v5851 = vpop.f32.mrf.mxu0
        %v5852 = vadd.f32 %v5811, %v5851
        %5853 = vmatmul.f32.gmra.mxu0 %v2599
        %v5854 = vpop.f32.mrf.mxu0
        %v5855 = vadd.f32 %v5814, %v5854
        %5856 = vmatmul.f32.gmra.mxu0 %v2719
        %v5857 = vpop.f32.mrf.mxu0
        %v5858 = vadd.f32 %v5817, %v5857
        %5859 = vmatmul.f32.gmra.mxu0 %v3784
        %v5860 = vpop.f32.mrf.mxu0
        %v5861 = vadd.f32 %v5820, %v5860
        %5862 = vmatmul.f32.gmra.mxu0 %v3904
        %v5863 = vpop.f32.mrf.mxu0
        %v5864 = vadd.f32 %v5823, %v5863
        %5865 = vmatmul.f32.gmra.mxu0 %v4969
        %v5866 = vpop.f32.mrf.mxu0
        %v5867 = vadd.f32 %v5826, %v5866
        %5868 = vmatmul.f32.gmra.mxu0 %v5089
        %v5869 = vpop.f32.mrf.mxu0
        %v5870 = vadd.f32 %v5829, %v5869
        %5871 = vdwg.mxu0
        %5872 = vmatpush.msra.mxu0 %v5292
        %5873 = vmatpush.msra.mxu0 %v5290
        %5874 = vmatpush.msra.mxu0 %v5288
        %5875 = vmatpush.msra.mxu0 %v5286
        %5876 = vmatpush.msra.mxu0 %v5284
        %5877 = vmatpush.msra.mxu0 %v5282
        %5878 = vmatpush.msra.mxu0 %v5280
        %5879 = vmatpush.msra.mxu0 %v5278
        %5880 = vmatpush.msra.mxu0 %v5276
        %5881 = vmatpush.msra.mxu0 %v5274
        %5882 = vmatpush.msra.mxu0 %v5272
        %5883 = vmatpush.msra.mxu0 %v5270
        %5884 = vmatpush.msra.mxu0 %v5268
        %5885 = vmatpush.msra.mxu0 %v5266
        %5886 = vmatpush.msra.mxu0 %v5264
        %5887 = vmatpush.msra.mxu0 %v5262
        %5888 = vmatmul.f32.gmra.mxu0 %v1429
        %v5889 = vpop.f32.mrf.mxu0
        %v5890 = vadd.f32 %v5849, %v5889
        %5891 = vmatmul.f32.gmra.mxu0 %v1549
        %v5892 = vpop.f32.mrf.mxu0
        %v5893 = vadd.f32 %v5852, %v5892
        %5894 = vmatmul.f32.gmra.mxu0 %v2614
        %v5895 = vpop.f32.mrf.mxu0
        %v5896 = vadd.f32 %v5855, %v5895
        %5897 = vmatmul.f32.gmra.mxu0 %v2734
        %v5898 = vpop.f32.mrf.mxu0
        %v5899 = vadd.f32 %v5858, %v5898
        %5900 = vmatmul.f32.gmra.mxu0 %v3799
        %v5901 = vpop.f32.mrf.mxu0
        %v5902 = vadd.f32 %v5861, %v5901
        %5903 = vmatmul.f32.gmra.mxu0 %v3919
        %v5904 = vpop.f32.mrf.mxu0
        %v5905 = vadd.f32 %v5864, %v5904
        %5906 = vmatmul.f32.gmra.mxu0 %v4984
        %v5907 = vpop.f32.mrf.mxu0
        %v5908 = vadd.f32 %v5867, %v5907
        %5909 = vmatmul.f32.gmra.mxu0 %v5104
        %v5910 = vpop.f32.mrf.mxu0
        %v5911 = vadd.f32 %v5870, %v5910
        %5912 = vdwg.mxu0
        %5913 = vmatpush.msra.mxu0 %v5324
        %5914 = vmatpush.msra.mxu0 %v5322
        %5915 = vmatpush.msra.mxu0 %v5320
        %5916 = vmatpush.msra.mxu0 %v5318
        %5917 = vmatpush.msra.mxu0 %v5316
        %5918 = vmatpush.msra.mxu0 %v5314
        %5919 = vmatpush.msra.mxu0 %v5312
        %5920 = vmatpush.msra.mxu0 %v5310
        %5921 = vmatpush.msra.mxu0 %v5308
        %5922 = vmatpush.msra.mxu0 %v5306
        %5923 = vmatpush.msra.mxu0 %v5304
        %5924 = vmatpush.msra.mxu0 %v5302
        %5925 = vmatpush.msra.mxu0 %v5300
        %5926 = vmatpush.msra.mxu0 %v5298
        %5927 = vmatpush.msra.mxu0 %v5296
        %5928 = vmatpush.msra.mxu0 %v5294
        %5929 = vmatmul.f32.gmra.mxu0 %v1444
        %v5930 = vpop.f32.mrf.mxu0
        %v5931 = vadd.f32 %v5890, %v5930
        %5932 = vmatmul.f32.gmra.mxu0 %v1564
        %v5933 = vpop.f32.mrf.mxu0
        %v5934 = vadd.f32 %v5893, %v5933
        %5935 = vmatmul.f32.gmra.mxu0 %v2629
        %v5936 = vpop.f32.mrf.mxu0
        %v5937 = vadd.f32 %v5896, %v5936
        %5938 = vmatmul.f32.gmra.mxu0 %v2749
        %v5939 = vpop.f32.mrf.mxu0
        %v5940 = vadd.f32 %v5899, %v5939
        %5941 = vmatmul.f32.gmra.mxu0 %v3814
        %v5942 = vpop.f32.mrf.mxu0
        %v5943 = vadd.f32 %v5902, %v5942
        %5944 = vmatmul.f32.gmra.mxu0 %v3934
        %v5945 = vpop.f32.mrf.mxu0
        %v5946 = vadd.f32 %v5905, %v5945
        %5947 = vmatmul.f32.gmra.mxu0 %v4999
        %v5948 = vpop.f32.mrf.mxu0
        %v5949 = vadd.f32 %v5908, %v5948
        %5950 = vmatmul.f32.gmra.mxu0 %v5119
        %v5951 = vpop.f32.mrf.mxu0
        %v5952 = vadd.f32 %v5911, %v5951
        %5953 = vdwg.mxu0
        %5954 = vmatpush.msra.mxu0 %v5356
        %5955 = vmatpush.msra.mxu0 %v5354
        %5956 = vmatpush.msra.mxu0 %v5352
        %5957 = vmatpush.msra.mxu0 %v5350
        %5958 = vmatpush.msra.mxu0 %v5348
        %5959 = vmatpush.msra.mxu0 %v5346
        %5960 = vmatpush.msra.mxu0 %v5344
        %5961 = vmatpush.msra.mxu0 %v5342
        %5962 = vmatpush.msra.mxu0 %v5340
        %5963 = vmatpush.msra.mxu0 %v5338
        %5964 = vmatpush.msra.mxu0 %v5336
        %5965 = vmatpush.msra.mxu0 %v5334
        %5966 = vmatpush.msra.mxu0 %v5332
        %5967 = vmatpush.msra.mxu0 %v5330
        %5968 = vmatpush.msra.mxu0 %v5328
        %5969 = vmatpush.msra.mxu0 %v5326
        %5970 = vmatmul.f32.gmra.mxu0 %v1459
        %v5971 = vpop.f32.mrf.mxu0
        %v5972 = vadd.f32 %v5931, %v5971
        %5973 = vmatmul.f32.gmra.mxu0 %v1579
        %v5974 = vpop.f32.mrf.mxu0
        %v5975 = vadd.f32 %v5934, %v5974
        %5976 = vmatmul.f32.gmra.mxu0 %v2644
        %v5977 = vpop.f32.mrf.mxu0
        %v5978 = vadd.f32 %v5937, %v5977
        %5979 = vmatmul.f32.gmra.mxu0 %v2764
        %v5980 = vpop.f32.mrf.mxu0
        %v5981 = vadd.f32 %v5940, %v5980
        %5982 = vmatmul.f32.gmra.mxu0 %v3829
        %v5983 = vpop.f32.mrf.mxu0
        %v5984 = vadd.f32 %v5943, %v5983
        %5985 = vmatmul.f32.gmra.mxu0 %v3949
        %v5986 = vpop.f32.mrf.mxu0
        %v5987 = vadd.f32 %v5946, %v5986
        %5988 = vmatmul.f32.gmra.mxu0 %v5014
        %v5989 = vpop.f32.mrf.mxu0
        %v5990 = vadd.f32 %v5949, %v5989
        %5991 = vmatmul.f32.gmra.mxu0 %v5134
        %v5992 = vpop.f32.mrf.mxu0
        %v5993 = vadd.f32 %v5952, %v5992
        %5994 = vdwg.mxu0
        %5995 = vmatpush.msra.mxu0 %v5388
        %5996 = vmatpush.msra.mxu0 %v5386
        %5997 = vmatpush.msra.mxu0 %v5384
        %5998 = vmatpush.msra.mxu0 %v5382
        %5999 = vmatpush.msra.mxu0 %v5380
        %6000 = vmatpush.msra.mxu0 %v5378
        %6001 = vmatpush.msra.mxu0 %v5376
        %6002 = vmatpush.msra.mxu0 %v5374
        %6003 = vmatpush.msra.mxu0 %v5372
        %6004 = vmatpush.msra.mxu0 %v5370
        %6005 = vmatpush.msra.mxu0 %v5368
        %6006 = vmatpush.msra.mxu0 %v5366
        %6007 = vmatpush.msra.mxu0 %v5364
        %6008 = vmatpush.msra.mxu0 %v5362
        %6009 = vmatpush.msra.mxu0 %v5360
        %6010 = vmatpush.msra.mxu0 %v5358
        %6011 = vmatmul.f32.gmra.mxu0 %v1474
        %v6012 = vpop.f32.mrf.mxu0
        %v6013 = vadd.f32 %v5972, %v6012
        %6014 = vmatmul.f32.gmra.mxu0 %v1594
        %v6015 = vpop.f32.mrf.mxu0
        %v6016 = vadd.f32 %v5975, %v6015
        %6017 = vmatmul.f32.gmra.mxu0 %v2659
        %v6018 = vpop.f32.mrf.mxu0
        %v6019 = vadd.f32 %v5978, %v6018
        %6020 = vmatmul.f32.gmra.mxu0 %v2779
        %v6021 = vpop.f32.mrf.mxu0
        %v6022 = vadd.f32 %v5981, %v6021
        %6023 = vmatmul.f32.gmra.mxu0 %v3844
        %v6024 = vpop.f32.mrf.mxu0
        %v6025 = vadd.f32 %v5984, %v6024
        %6026 = vmatmul.f32.gmra.mxu0 %v3964
        %v6027 = vpop.f32.mrf.mxu0
        %v6028 = vadd.f32 %v5987, %v6027
        %6029 = vmatmul.f32.gmra.mxu0 %v5029
        %v6030 = vpop.f32.mrf.mxu0
        %v6031 = vadd.f32 %v5990, %v6030
        %6032 = vmatmul.f32.gmra.mxu0 %v5149
        %v6033 = vpop.f32.mrf.mxu0
        %v6034 = vadd.f32 %v5993, %v6033
        %6035 = vdwg.mxu0
        %6036 = vmatpush.msra.mxu0 %v5420
        %6037 = vmatpush.msra.mxu0 %v5418
        %6038 = vmatpush.msra.mxu0 %v5416
        %6039 = vmatpush.msra.mxu0 %v5414
        %6040 = vmatpush.msra.mxu0 %v5412
        %6041 = vmatpush.msra.mxu0 %v5410
        %6042 = vmatpush.msra.mxu0 %v5408
        %6043 = vmatpush.msra.mxu0 %v5406
        %6044 = vmatpush.msra.mxu0 %v5404
        %6045 = vmatpush.msra.mxu0 %v5402
        %6046 = vmatpush.msra.mxu0 %v5400
        %6047 = vmatpush.msra.mxu0 %v5398
        %6048 = vmatpush.msra.mxu0 %v5396
        %6049 = vmatpush.msra.mxu0 %v5394
        %6050 = vmatpush.msra.mxu0 %v5392
        %6051 = vmatpush.msra.mxu0 %v5390
        %6052 = vmatmul.f32.gmra.mxu0 %v1489
        %v6053 = vpop.f32.mrf.mxu0
        %v6054 = vadd.f32 %v6013, %v6053
        %6055 = vmatmul.f32.gmra.mxu0 %v1609
        %v6056 = vpop.f32.mrf.mxu0
        %v6057 = vadd.f32 %v6016, %v6056
        %6058 = vmatmul.f32.gmra.mxu0 %v2674
        %v6059 = vpop.f32.mrf.mxu0
        %v6060 = vadd.f32 %v6019, %v6059
        %6061 = vmatmul.f32.gmra.mxu0 %v2794
        %v6062 = vpop.f32.mrf.mxu0
        %v6063 = vadd.f32 %v6022, %v6062
        %6064 = vmatmul.f32.gmra.mxu0 %v3859
        %v6065 = vpop.f32.mrf.mxu0
        %v6066 = vadd.f32 %v6025, %v6065
        %6067 = vmatmul.f32.gmra.mxu0 %v3979
        %v6068 = vpop.f32.mrf.mxu0
        %v6069 = vadd.f32 %v6028, %v6068
        %6070 = vmatmul.f32.gmra.mxu0 %v5044
        %v6071 = vpop.f32.mrf.mxu0
        %v6072 = vadd.f32 %v6031, %v6071
        %6073 = vmatmul.f32.gmra.mxu0 %v5164
        %v6074 = vpop.f32.mrf.mxu0
        %v6075 = vadd.f32 %v6034, %v6074
        %6076 = vdwg.mxu0
        %v6077 = vld [vmem:[%s5] sm:$0xff]
        %v6078 = vld [vmem:[%s5 + $0x8] sm:$0xff]
        %v6079 = vld [vmem:[%s5 + $0x10] sm:$0xff]
        %v6080 = vld [vmem:[%s5 + $0x18] sm:$0xff]
        %v6081 = vld [vmem:[%s5 + $0x20] sm:$0xff]
        %v6082 = vld [vmem:[%s5 + $0x28] sm:$0xff]
        %v6083 = vld [vmem:[%s5 + $0x30] sm:$0xff]
        %v6084 = vld [vmem:[%s5 + $0x38] sm:$0xff]
        %v6085 = vld [vmem:[%s5 + $0x40] sm:$0xff]
        %v6086 = vld [vmem:[%s5 + $0x48] sm:$0xff]
        %v6087 = vld [vmem:[%s5 + $0x50] sm:$0xff]
        %v6088 = vld [vmem:[%s5 + $0x58] sm:$0xff]
        %v6089 = vld [vmem:[%s5 + $0x60] sm:$0xff]
        %v6090 = vld [vmem:[%s5 + $0x68] sm:$0xff]
        %v6091 = vld [vmem:[%s5 + $0x70] sm:$0xff]
        %v6092 = vld [vmem:[%s5 + $0x78] sm:$0xff]
        %v6093 = vmul.f32 %v5726, %v6077
        %v6094 = vmul.f32 %v6054, %v6078
        %v6095 = vmul.f32 %v5729, %v6079
        %v6096 = vmul.f32 %v6057, %v6080
        %v6097 = vmul.f32 %v5732, %v6081
        %v6098 = vmul.f32 %v6060, %v6082
        %v6099 = vmul.f32 %v5735, %v6083
        %v6100 = vmul.f32 %v6063, %v6084
        %v6101 = vmul.f32 %v5738, %v6085
        %v6102 = vmul.f32 %v6066, %v6086
        %v6103 = vmul.f32 %v5741, %v6087
        %v6104 = vmul.f32 %v6069, %v6088
        %v6105 = vmul.f32 %v5744, %v6089
        %v6106 = vmul.f32 %v6072, %v6090
        %v6107 = vmul.f32 %v5747, %v6091
        %v6108 = vmul.f32 %v6075, %v6092
        %v6109 = vld [vmem:[%s6] sm:$0xf]
        %vm6110 = vcmask 523264
        %v6112 = vsel %vm6110, %v6109, 0
        %6114 = vmatpush.msra.mxu0 0.0
        %6115 = vmatpush.msra.mxu0 0.0
        %6116 = vmatpush.msra.mxu0 0.0
        %6117 = vmatpush.msra.mxu0 0.0
        %6118 = vmatpush.msra.mxu0 0.0
        %6119 = vmatpush.msra.mxu0 0.0
        %6120 = vmatpush.msra.mxu0 0.0
        %6121 = vmatpush.msra.mxu0 0.0
        %6122 = vmatpush.msra.mxu0 %v6107
        %6123 = vmatpush.msra.mxu0 %v6105
        %6124 = vmatpush.msra.mxu0 %v6103
        %6125 = vmatpush.msra.mxu0 %v6101
        %6126 = vmatpush.msra.mxu0 %v6099
        %6127 = vmatpush.msra.mxu0 %v6097
        %6128 = vmatpush.msra.mxu0 %v6095
        %6129 = vmatpush.msra.mxu0 %v6093
        %6130 = vmatmul.f32.gmra.mxu0 %v6112
        %v6131 = vpop.f32.mrf.mxu0
        %v6132 = vadd.f32 0.0, %v6131
        %6133 = vdwg.mxu0
        %6134 = vmatpush.msra.mxu0 0.0
        %6135 = vmatpush.msra.mxu0 0.0
        %6136 = vmatpush.msra.mxu0 0.0
        %6137 = vmatpush.msra.mxu0 0.0
        %6138 = vmatpush.msra.mxu0 0.0
        %6139 = vmatpush.msra.mxu0 0.0
        %6140 = vmatpush.msra.mxu0 0.0
        %6141 = vmatpush.msra.mxu0 0.0
        %6142 = vmatpush.msra.mxu0 %v6108
        %6143 = vmatpush.msra.mxu0 %v6106
        %6144 = vmatpush.msra.mxu0 %v6104
        %6145 = vmatpush.msra.mxu0 %v6102
        %6146 = vmatpush.msra.mxu0 %v6100
        %6147 = vmatpush.msra.mxu0 %v6098
        %6148 = vmatpush.msra.mxu0 %v6096
        %6149 = vmatpush.msra.mxu0 %v6094
        %6150 = vmatmul.f32.gmra.mxu0 %v6112
        %v6151 = vpop.f32.mrf.mxu0
        %v6152 = vadd.f32 0.0, %v6151
        %6153 = vdwg.mxu0
        %v6154 = vld [vmem:[%s7] sm:$0xff]
        %v6155 = vld [vmem:[%s7 + $0x8] sm:$0xff]
        %v6156 = vld [vmem:[%s7 + $0x10] sm:$0xff]
        %v6157 = vld [vmem:[%s7 + $0x18] sm:$0xff]
        %v6158 = vld [vmem:[%s7 + $0x20] sm:$0xff]
        %v6159 = vld [vmem:[%s7 + $0x28] sm:$0xff]
        %v6160 = vld [vmem:[%s7 + $0x30] sm:$0xff]
        %v6161 = vld [vmem:[%s7 + $0x38] sm:$0xff]
        %v6162 = vld [vmem:[%s7 + $0x40] sm:$0xff]
        %v6163 = vld [vmem:[%s7 + $0x48] sm:$0xff]
        %v6164 = vld [vmem:[%s7 + $0x50] sm:$0xff]
        %v6165 = vld [vmem:[%s7 + $0x58] sm:$0xff]
        %v6166 = vld [vmem:[%s7 + $0x60] sm:$0xff]
        %v6167 = vld [vmem:[%s7 + $0x68] sm:$0xff]
        %v6168 = vld [vmem:[%s7 + $0x70] sm:$0xff]
        %v6169 = vld [vmem:[%s7 + $0x78] sm:$0xff]
        %v6170 = vld [vmem:[%s7 + $0x80] sm:$0xff]
        %v6171 = vld [vmem:[%s7 + $0x88] sm:$0xff]
        %v6172 = vld [vmem:[%s7 + $0x90] sm:$0xff]
        %v6173 = vld [vmem:[%s7 + $0x98] sm:$0xff]
        %v6174 = vld [vmem:[%s4] sm:$0x1]
        %v6176 = vperm.slane %v6174, 0
        %vm6178 = vcmask 261120
        %v6180 = vsel %vm6178, %v6152, 0
        %6182 = vmatpush.msra.mxu0 %v6169
        %6183 = vmatpush.msra.mxu0 %v6168
        %6184 = vmatpush.msra.mxu0 %v6167
        %6185 = vmatpush.msra.mxu0 %v6166
        %6186 = vmatpush.msra.mxu0 %v6165
        %6187 = vmatpush.msra.mxu0 %v6164
        %6188 = vmatpush.msra.mxu0 %v6163
        %6189 = vmatpush.msra.mxu0 %v6162
        %6190 = vmatpush.msra.mxu0 %v6161
        %6191 = vmatpush.msra.mxu0 %v6160
        %6192 = vmatpush.msra.mxu0 %v6159
        %6193 = vmatpush.msra.mxu0 %v6158
        %6194 = vmatpush.msra.mxu0 %v6157
        %6195 = vmatpush.msra.mxu0 %v6156
        %6196 = vmatpush.msra.mxu0 %v6155
        %6197 = vmatpush.msra.mxu0 %v6154
        %6198 = vmatmul.f32.gmra.mxu0 %v6132
        %v6199 = vpop.f32.mrf.mxu0
        %v6200 = vadd.f32 %v6176, %v6199
        %6201 = vdwg.mxu0
        %6202 = vmatpush.msra.mxu0 0.0
        %6203 = vmatpush.msra.mxu0 0.0
        %6204 = vmatpush.msra.mxu0 0.0
        %6205 = vmatpush.msra.mxu0 0.0
        %6206 = vmatpush.msra.mxu0 0.0
        %6207 = vmatpush.msra.mxu0 0.0
        %6208 = vmatpush.msra.mxu0 0.0
        %6209 = vmatpush.msra.mxu0 0.0
        %6210 = vmatpush.msra.mxu0 0.0
        %6211 = vmatpush.msra.mxu0 0.0
        %6212 = vmatpush.msra.mxu0 0.0
        %6213 = vmatpush.msra.mxu0 0.0
        %6214 = vmatpush.msra.mxu0 %v6173
        %6215 = vmatpush.msra.mxu0 %v6172
        %6216 = vmatpush.msra.mxu0 %v6171
        %6217 = vmatpush.msra.mxu0 %v6170
        %6218 = vmatmul.f32.gmra.mxu0 %v6180
        %v6219 = vpop.f32.mrf.mxu0
        %v6220 = vadd.f32 %v6200, %v6219
        %6221 = vdwg.mxu0
        %vm6222 = vcmask 76800
        %6223 = vst.msk [vmem:[%s301] sm:$0xf] %vm6222, %v6220
        %s6224 = sand.u32 %s203, 1
        %s6225 = scalar_lea.sflag [#allocation3], %s6224
        %s6226 = sand.u32 %s203, 1
        %s6227 = smul.addr %s6226, 4
        %s6228 = scalar_lea.vmem [#allocation2], %s6227
        // Predicated region
        $region53: #{cnn_forward.1} parent=51 // pred_check
          %p6229 = pneg %p213
        $region54: #{cnn_forward.1} parent=51 // pred_check_branch
          %6231 = sbr.rel (%p6229) target = $region56
        $region55: #{cnn_forward.1} parent=51 // pred_region
          %6233 = vsyncadd %s6225, 0
          %s6234 = smul.addr %s22, 4
          %s6235 = scalar_lea.hbm %s8, %s6234
          %s6237 = sshll.u32 %s6228, 4
          %s6238 = int_to_ptr.vmem [resolvable:$true] %s6237
          %s6239 = sshll.u32 %s6235, 4
          %s6240 = int_to_ptr.hbm [resolvable:$true] %s6239
          %6242 = dma.vmem_to_hbm [thread:$0]  %s6238, 64, %s6240, %s6225
        $region56: #{cnn_forward.1} parent=51 // pred_fallthru
          _
      $region52: #{cnn_forward.1} parent=5 // pred_fallthru
        _
      %p6243 = scmp.le.s32.totalorder 2, %s17
      // Predicated region
      $region57: #{cnn_forward.1} parent=5 // pred_check
        %p6244 = pneg %p6243
      $region58: #{cnn_forward.1} parent=5 // pred_check_branch
        %6246 = sbr.rel (%p6244) target = $region60
      $region59: #{cnn_forward.1} parent=5 // pred_region
        %s6247 = ssub.s32 %s17, 2
        // Predicated region
        $region61: #{cnn_forward.1} parent=59 // pred_check
          %p6248 = pneg %p219
        $region62: #{cnn_forward.1} parent=59 // pred_check_branch
          %6250 = sbr.rel (%p6248) target = $region64
        $region63: #{cnn_forward.1} parent=59 // pred_region
          %s6251 = sand.u32 %s204, 1
          %s6252 = scalar_lea.sflag [#allocation3], %s6251
          %s6253 = sand.u32 %s204, 1
          %s6254 = smul.addr %s6253, 4
          %s6255 = scalar_lea.vmem [#allocation2], %s6254
          %6257 = dma.done %s6252, 64
        $region64: #{cnn_forward.1} parent=59 // pred_fallthru
          _
      $region60: #{cnn_forward.1} parent=5 // pred_fallthru
        _
    $region6: #{cnn_forward.1} parent=1 // loop_footer
      %s21 = sadd.s32 1, %s17
    $region7: #{cnn_forward.1} parent=1 // loop_footer_branch
      %16 = sbr.rel target = $region3
    $region8: #{cnn_forward.1} parent=1 // loop_exit
      _
    %6258 = vsyncpa [#allocation3], 1
    %s6259 = scalar_lea.sflag [#allocation3], 1
    %6260 = vsyncpa %s6259, 1

</llo_original>
